<compile_context>
chip_gen: v5e
topology: v5e:2x2
jax: 0.10.0
libtpu: 0.0.40
codegen_flags: <defaults>
</compile_context>

<pallas_src>
import functools

import jax
import jax.numpy as jnp
from jax.experimental import pallas as pl
from jax.experimental.pallas import tpu as pltpu


# ----------------------------- Pallas kernels ------------------------------


def _matmul_lrelu_kernel(a_ref, w_ref, o_ref):
    """(M, K) @ (K, C) -> LeakyReLU(0.2); f32 accumulation on the MXU, bf16 store."""
    y = jnp.dot(a_ref[...], w_ref[...], preferred_element_type=jnp.float32)
    o_ref[...] = jnp.where(y > 0, y, 0.2 * y).astype(o_ref.dtype)


def _conv_bn_lrelu_kernel(a_ref, w_ref, g_ref, b_ref, o_ref, *, eps):
    """Fused conv-as-matmul + BatchNorm (batch statistics) + LeakyReLU(0.2).

    Single grid step: the whole (M, C) pre-activation lives in VMEM, so the channel
    statistics are computed in-kernel on the f32 accumulator (no extra HBM pass).
    """
    y = jnp.dot(a_ref[...], w_ref[...], preferred_element_type=jnp.float32)  # (M, C) f32
    m = y.shape[0]
    inv_m = 1.0 / m
    mean = jnp.sum(y, axis=0, keepdims=True) * inv_m                         # (1, C)
    var = jnp.sum(y * y, axis=0, keepdims=True) * inv_m - mean * mean
    var = jnp.maximum(var, 0.0)                                              # clamp cancellation
    inv_std = jax.lax.rsqrt(var + eps)                                       # EUP
    scale = g_ref[...] * inv_std
    shift = b_ref[...] - mean * scale
    z = y * scale + shift
    o_ref[...] = jnp.where(z > 0, z, 0.2 * z).astype(o_ref.dtype)


def _conv_bn_lrelu_head_kernel(a_ref, w_ref, g_ref, b_ref, w5_ref, o_ref, *, eps, n_batch):
    """Layer 4 (conv + BN + LeakyReLU) with layer 5 (4x4 valid conv, Cout=1) + sigmoid
    fused as a VPU multiply + reduction epilogue (the N=1 matmul never touches the MXU)."""
    y = jnp.dot(a_ref[...], w_ref[...], preferred_element_type=jnp.float32)  # (M, C) f32
    m = y.shape[0]
    inv_m = 1.0 / m
    mean = jnp.sum(y, axis=0, keepdims=True) * inv_m
    var = jnp.sum(y * y, axis=0, keepdims=True) * inv_m - mean * mean
    var = jnp.maximum(var, 0.0)
    inv_std = jax.lax.rsqrt(var + eps)
    scale = g_ref[...] * inv_std
    shift = b_ref[...] - mean * scale
    z = y * scale + shift
    a4 = jnp.where(z > 0, z, 0.2 * z)                                        # (M, C) f32

    rows = m // n_batch                                                      # spatial rows / sample
    w5 = w5_ref[...]                                                         # (rows, C) f32
    logits = []
    for n in range(n_batch):                                                 # static, tiny loop
        blk = a4[n * rows:(n + 1) * rows, :]                                 # static slice (rows, C)
        s = jnp.sum(blk * w5, axis=1, keepdims=True)                         # lane reduce   (rows, 1)
        logits.append(jnp.sum(s, axis=0, keepdims=True))                     # sublane reduce (1, 1)
    logit = jnp.concatenate(logits, axis=0)                                  # (N, 1)
    o_ref[...] = jax.nn.sigmoid(logit)


# ----------------------------- Pallas wrappers ------------------------------


def pallas_matmul_lrelu(a, w, n_split=2):
    """a: (M, K) bf16, w: (K, C) bf16 -> (M, C) bf16 LeakyReLU. M optionally split
    across a 'parallel' grid axis so v7x can use both TensorCores."""
    M, K = a.shape
    C = w.shape[1]
    if M % n_split != 0:
        n_split = 1
    tm = M // n_split
    return pl.pallas_call(
        _matmul_lrelu_kernel,
        out_shape=jax.ShapeDtypeStruct((M, C), jnp.bfloat16),
        grid=(n_split,),
        in_specs=[
            pl.BlockSpec((tm, K), lambda i: (i, 0)),
            pl.BlockSpec((K, C), lambda i: (0, 0)),
        ],
        out_specs=pl.BlockSpec((tm, C), lambda i: (i, 0)),
        compiler_params=pltpu.CompilerParams(dimension_semantics=("parallel",)),
    )(a, w)


def pallas_conv_bn_lrelu(patches, wmat, gamma, beta, eps=1e-5):
    """Whole-array, single-step fused conv + BatchNorm(batch stats) + LeakyReLU; bf16 out."""
    M, _ = patches.shape
    C = wmat.shape[1]
    kern = functools.partial(_conv_bn_lrelu_kernel, eps=eps)
    return pl.pallas_call(
        kern,
        out_shape=jax.ShapeDtypeStruct((M, C), jnp.bfloat16),
    )(patches, wmat, gamma.reshape(1, -1), beta.reshape(1, -1))


def pallas_conv_bn_lrelu_head(patches, wmat, gamma, beta, w5mat, n_batch, eps=1e-5):
    """Layer-4 fused kernel that also produces the final sigmoid probabilities (N,)."""
    kern = functools.partial(_conv_bn_lrelu_head_kernel, eps=eps, n_batch=n_batch)
    out = pl.pallas_call(
        kern,
        out_shape=jax.ShapeDtypeStruct((n_batch, 1), jnp.float32),
    )(patches, wmat, gamma.reshape(1, -1), beta.reshape(1, -1), w5mat)
    return out.reshape(-1)


# ----------------------------- Glue (plain JAX) ------------------------------


def _im2col(x_nhwc, k, stride, pad):
    """x: (N, H, W, C) -> patches (N*OH*OW, k*k*C) ordered (kh, kw, cin)."""
    N, H, W, C = x_nhwc.shape
    xp = jnp.pad(x_nhwc, ((0, 0), (pad, pad), (pad, pad), (0, 0)))
    OH = (H + 2 * pad - k) // stride + 1
    OW = (W + 2 * pad - k) // stride + 1
    cols = []
    for i in range(k):
        for j in range(k):
            cols.append(xp[:, i: i + stride * OH: stride, j: j + stride * OW: stride, :])
    patches = jnp.stack(cols, axis=3)  # (N, OH, OW, k*k, C)
    return patches.reshape(N * OH * OW, k * k * C), OH, OW


def _wmat(w_oihw):
    """PyTorch (Cout, Cin, KH, KW) -> (KH*KW*Cin, Cout), matching _im2col ordering."""
    cout = w_oihw.shape[0]
    return jnp.transpose(w_oihw, (2, 3, 1, 0)).reshape(-1, cout)


# ----------------------------- Model ------------------------------


def init_params(key, hidden_size=16, in_channels=1):
    ks = jax.random.split(key, 5)
    h = hidden_size
    shapes = [
        (h, in_channels, 4, 4),
        (2 * h, h, 4, 4),
        (4 * h, 2 * h, 4, 4),
        (8 * h, 4 * h, 4, 4),
        (1, 8 * h, 4, 4),
    ]
    params = {}
    for i, (kk, s) in enumerate(zip(ks, shapes), start=1):
        params[f"w{i}"] = 0.02 * jax.random.normal(kk, s, dtype=jnp.float32)
    # BatchNorm affine params (PyTorch default init: weight=1, bias=0)
    for i, c in zip((2, 3, 4), (2 * h, 4 * h, 8 * h)):
        params[f"bn{i}_gamma"] = jnp.ones((c,), jnp.float32)
        params[f"bn{i}_beta"] = jnp.zeros((c,), jnp.float32)
    return params


@jax.jit
def conv_discriminator_forward(x_nchw, params):
    # Input NCHW (PyTorch convention) -> NHWC internally for the im2col/matmul kernels.
    x = jnp.transpose(x_nchw, (0, 2, 3, 1)).astype(jnp.bfloat16)
    N = x.shape[0]
    bf16 = jnp.bfloat16

    # Layer 1: Conv(1->h, 4, s=2, p=1) + LeakyReLU(0.2) (fused), 2-way parallel M split.
    p, OH, OW = _im2col(x, 4, 2, 1)
    y = pallas_matmul_lrelu(p, _wmat(params["w1"]).astype(bf16), n_split=2)
    x = y.reshape(N, OH, OW, -1)

    # Layers 2-3: Conv + BatchNorm (batch stats) + LeakyReLU(0.2) fully fused, one call each.
    for li in (2, 3):
        p, OH, OW = _im2col(x, 4, 2, 1)
        y = pallas_conv_bn_lrelu(
            p, _wmat(params[f"w{li}"]).astype(bf16),
            params[f"bn{li}_gamma"], params[f"bn{li}_beta"])
        x = y.reshape(N, OH, OW, -1)

    # Layer 4 (Conv + BN + LeakyReLU) with Layer 5 (Conv 8h->1, 4x4 valid + Sigmoid) fused
    # as a VPU epilogue inside the same kernel; output is already the flattened probabilities.
    p, OH, OW = _im2col(x, 4, 2, 1)
    assert OH == 4 and OW == 4, "final 4x4 valid conv requires a 4x4 layer-4 output"
    w5 = params["w5"]                                            # (1, 8h, 4, 4)
    w5mat = jnp.transpose(w5[0], (1, 2, 0)).reshape(16, -1)      # (kh*kw, 8h), f32
    out = pallas_conv_bn_lrelu_head(
        p, _wmat(params["w4"]).astype(bf16),
        params["bn4_gamma"], params["bn4_beta"], w5mat, n_batch=N)
    return out                                                   # (N,), matches .view(-1)


if __name__ == "__main__":
    key = jax.random.PRNGKey(0)
    pkey, xkey = jax.random.split(key)

    hidden_size, in_channels, img_size, batch = 16, 1, 64, 2
    # NOTE: img_size=64 is used so the final 4x4 valid conv is well-defined
    # (the module's default img_size=32 would make the last conv spatially invalid).
    params = init_params(pkey, hidden_size=hidden_size, in_channels=in_channels)
    x = jax.random.normal(xkey, (batch, in_channels, img_size, img_size), dtype=jnp.float32)

    out = conv_discriminator_forward(x, params)
    out = jax.block_until_ready(out)
    assert out.shape == (batch,)
    assert bool(jnp.all(jnp.isfinite(out)))
    assert bool(jnp.all((out >= 0) & (out <= 1)))
    print("KERNEL_OK")
</pallas_src>

<mosaic_0001>
module attributes {stable_mosaic.version = 11 : i64} {
  func.func @_matmul_lrelu_kernel(%arg0: i32, %arg1: memref<1024x16xbf16, #tpu.memory_space<vmem>>, %arg2: memref<16x16xbf16, #tpu.memory_space<vmem>>, %arg3: memref<1024x16xbf16, #tpu.memory_space<vmem>>) attributes {dimension_semantics = [#tpu.dimension_semantics<parallel>], iteration_bounds = array<i64: 2>, scalar_prefetch = 0 : i64, scratch_operands = 0 : i64, tpu.core_type = #tpu.core_type<tc>, window_params = [{transform_indices = @transform_0, window_bounds = array<i64: 1024, 16>}, {pipeline_mode = #tpu.pipeline_mode<synchronous>, transform_indices = @transform_1, window_bounds = array<i64: 16, 16>}, {transform_indices = @transform_2, window_bounds = array<i64: 1024, 16>}]} {
    %c0 = arith.constant 0 : index
    %c0_0 = arith.constant 0 : index
    %0 = vector.load %arg1[%c0, %c0_0] : memref<1024x16xbf16, #tpu.memory_space<vmem>>, vector<1024x16xbf16>
    %c0_1 = arith.constant 0 : index
    %c0_2 = arith.constant 0 : index
    %1 = vector.load %arg2[%c0_1, %c0_2] : memref<16x16xbf16, #tpu.memory_space<vmem>>, vector<16x16xbf16>
    %cst = arith.constant dense<0.000000e+00> : vector<1024x16xf32>
    %2 = tpu.matmul %0, %1, %cst {dimension_numbers = #tpu.dot_dimension_numbers<[1], [0], [0], [1], [0, 0, 1, 1], [], []>} : vector<1024x16xbf16>, vector<16x16xbf16>, vector<1024x16xf32> -> vector<1024x16xf32>
    %cst_3 = arith.constant 0.000000e+00 : f32
    %3 = vector.broadcast %cst_3 : f32 to vector<1024x16xf32>
    %4 = arith.cmpf ogt, %2, %3 : vector<1024x16xf32>
    %cst_4 = arith.constant 2.000000e-01 : f32
    %5 = vector.broadcast %cst_4 : f32 to vector<1024x16xf32>
    %6 = arith.mulf %5, %2 : vector<1024x16xf32>
    %7 = arith.select %4, %2, %6 : vector<1024x16xi1>, vector<1024x16xf32>
    %8 = arith.truncf %7 : vector<1024x16xf32> to vector<1024x16xbf16>
    %c0_5 = arith.constant 0 : index
    %c0_6 = arith.constant 0 : index
    %9 = vector.load %arg3[%c0_5, %c0_6] : memref<1024x16xbf16, #tpu.memory_space<vmem>>, vector<1024x16xbf16>
    tpu.vector_store %arg3[%c0_5, %c0_6], %8 {strides = array<i32>} : memref<1024x16xbf16, #tpu.memory_space<vmem>>, vector<1024x16xbf16>,
    return
  }
  func.func @transform_0(%arg0: i32) -> (i32, i32) {
    %c0_i32 = arith.constant 0 : i32
    %c0_i32_0 = arith.constant 0 : i32
    return %arg0, %c0_i32 : i32, i32
  }
  func.func @transform_1(%arg0: i32) -> (i32, i32) {
    %c0_i32 = arith.constant 0 : i32
    %c0_i32_0 = arith.constant 0 : i32
    %c0_i32_1 = arith.constant 0 : i32
    return %c0_i32, %c0_i32_0 : i32, i32
  }
  func.func @transform_2(%arg0: i32) -> (i32, i32) {
    %c0_i32 = arith.constant 0 : i32
    %c0_i32_0 = arith.constant 0 : i32
    return %arg0, %c0_i32 : i32, i32
  }
}

module attributes {stable_mosaic.version = 11 : i64} {
  func.func @_conv_bn_lrelu_kernel(%arg0: memref<512x256xbf16, #tpu.memory_space<vmem>>, %arg1: memref<256x32xbf16, #tpu.memory_space<vmem>>, %arg2: memref<1x32xf32, #tpu.memory_space<vmem>>, %arg3: memref<1x32xf32, #tpu.memory_space<vmem>>, %arg4: memref<512x32xbf16, #tpu.memory_space<vmem>>) attributes {dimension_semantics = [], scalar_prefetch = 0 : i64, scratch_operands = 0 : i64, tpu.core_type = #tpu.core_type<tc>} {
    %c0 = arith.constant 0 : index
    %c0_0 = arith.constant 0 : index
    %0 = vector.load %arg0[%c0, %c0_0] : memref<512x256xbf16, #tpu.memory_space<vmem>>, vector<512x256xbf16>
    %c0_1 = arith.constant 0 : index
    %c0_2 = arith.constant 0 : index
    %1 = vector.load %arg1[%c0_1, %c0_2] : memref<256x32xbf16, #tpu.memory_space<vmem>>, vector<256x32xbf16>
    %cst = arith.constant dense<0.000000e+00> : vector<512x32xf32>
    %2 = tpu.matmul %0, %1, %cst {dimension_numbers = #tpu.dot_dimension_numbers<[1], [0], [0], [1], [0, 0, 1, 1], [], []>} : vector<512x256xbf16>, vector<256x32xbf16>, vector<512x32xf32> -> vector<512x32xf32>
    %cst_3 = arith.constant dense<0.000000e+00> : vector<32xf32>
    %3 = vector.multi_reduction <add>, %2, %cst_3 [0] : vector<512x32xf32> to vector<32xf32>
    %4 = vector.shape_cast %3 : vector<32xf32> to vector<1x32xf32>
    %cst_4 = arith.constant 0.001953125 : f32
    %5 = vector.broadcast %cst_4 : f32 to vector<1x32xf32>
    %6 = arith.mulf %4, %5 : vector<1x32xf32>
    %7 = arith.mulf %2, %2 : vector<512x32xf32>
    %cst_5 = arith.constant dense<0.000000e+00> : vector<32xf32>
    %8 = vector.multi_reduction <add>, %7, %cst_5 [0] : vector<512x32xf32> to vector<32xf32>
    %9 = vector.shape_cast %8 : vector<32xf32> to vector<1x32xf32>
    %cst_6 = arith.constant 0.001953125 : f32
    %10 = vector.broadcast %cst_6 : f32 to vector<1x32xf32>
    %11 = arith.mulf %9, %10 : vector<1x32xf32>
    %12 = arith.mulf %6, %6 : vector<1x32xf32>
    %13 = arith.subf %11, %12 : vector<1x32xf32>
    %cst_7 = arith.constant 0.000000e+00 : f32
    %14 = vector.broadcast %cst_7 : f32 to vector<1x32xf32>
    %15 = arith.maximumf %13, %14 : vector<1x32xf32>
    %cst_8 = arith.constant 9.99999974E-6 : f32
    %16 = vector.broadcast %cst_8 : f32 to vector<1x32xf32>
    %17 = arith.addf %15, %16 : vector<1x32xf32>
    %18 = math.rsqrt %17 : vector<1x32xf32>
    %c0_9 = arith.constant 0 : index
    %c0_10 = arith.constant 0 : index
    %19 = vector.load %arg2[%c0_9, %c0_10] : memref<1x32xf32, #tpu.memory_space<vmem>>, vector<1x32xf32>
    %20 = arith.mulf %19, %18 : vector<1x32xf32>
    %c0_11 = arith.constant 0 : index
    %c0_12 = arith.constant 0 : index
    %21 = vector.load %arg3[%c0_11, %c0_12] : memref<1x32xf32, #tpu.memory_space<vmem>>, vector<1x32xf32>
    %22 = arith.mulf %6, %20 : vector<1x32xf32>
    %23 = arith.subf %21, %22 : vector<1x32xf32>
    %24 = vector.broadcast %20 : vector<1x32xf32> to vector<512x32xf32>
    %25 = arith.mulf %2, %24 : vector<512x32xf32>
    %26 = vector.broadcast %23 : vector<1x32xf32> to vector<512x32xf32>
    %27 = arith.addf %25, %26 : vector<512x32xf32>
    %cst_13 = arith.constant 0.000000e+00 : f32
    %28 = vector.broadcast %cst_13 : f32 to vector<512x32xf32>
    %29 = arith.cmpf ogt, %27, %28 : vector<512x32xf32>
    %cst_14 = arith.constant 2.000000e-01 : f32
    %30 = vector.broadcast %cst_14 : f32 to vector<512x32xf32>
    %31 = arith.mulf %30, %27 : vector<512x32xf32>
    %32 = arith.select %29, %27, %31 : vector<512x32xi1>, vector<512x32xf32>
    %33 = arith.truncf %32 : vector<512x32xf32> to vector<512x32xbf16>
    %c0_15 = arith.constant 0 : index
    %c0_16 = arith.constant 0 : index
    %34 = vector.load %arg4[%c0_15, %c0_16] : memref<512x32xbf16, #tpu.memory_space<vmem>>, vector<512x32xbf16>
    tpu.vector_store %arg4[%c0_15, %c0_16], %33 {strides = array<i32>} : memref<512x32xbf16, #tpu.memory_space<vmem>>, vector<512x32xbf16>,
    return
  }
}

module attributes {stable_mosaic.version = 11 : i64} {
  func.func @_conv_bn_lrelu_kernel(%arg0: memref<128x512xbf16, #tpu.memory_space<vmem>>, %arg1: memref<512x64xbf16, #tpu.memory_space<vmem>>, %arg2: memref<1x64xf32, #tpu.memory_space<vmem>>, %arg3: memref<1x64xf32, #tpu.memory_space<vmem>>, %arg4: memref<128x64xbf16, #tpu.memory_space<vmem>>) attributes {dimension_semantics = [], scalar_prefetch = 0 : i64, scratch_operands = 0 : i64, tpu.core_type = #tpu.core_type<tc>} {
    %c0 = arith.constant 0 : index
    %c0_0 = arith.constant 0 : index
    %0 = vector.load %arg0[%c0, %c0_0] : memref<128x512xbf16, #tpu.memory_space<vmem>>, vector<128x512xbf16>
    %c0_1 = arith.constant 0 : index
    %c0_2 = arith.constant 0 : index
    %1 = vector.load %arg1[%c0_1, %c0_2] : memref<512x64xbf16, #tpu.memory_space<vmem>>, vector<512x64xbf16>
    %cst = arith.constant dense<0.000000e+00> : vector<128x64xf32>
    %2 = tpu.matmul %0, %1, %cst {dimension_numbers = #tpu.dot_dimension_numbers<[1], [0], [0], [1], [0, 0, 1, 1], [], []>} : vector<128x512xbf16>, vector<512x64xbf16>, vector<128x64xf32> -> vector<128x64xf32>
    %cst_3 = arith.constant dense<0.000000e+00> : vector<64xf32>
    %3 = vector.multi_reduction <add>, %2, %cst_3 [0] : vector<128x64xf32> to vector<64xf32>
    %4 = vector.shape_cast %3 : vector<64xf32> to vector<1x64xf32>
    %cst_4 = arith.constant 7.812500e-03 : f32
    %5 = vector.broadcast %cst_4 : f32 to vector<1x64xf32>
    %6 = arith.mulf %4, %5 : vector<1x64xf32>
    %7 = arith.mulf %2, %2 : vector<128x64xf32>
    %cst_5 = arith.constant dense<0.000000e+00> : vector<64xf32>
    %8 = vector.multi_reduction <add>, %7, %cst_5 [0] : vector<128x64xf32> to vector<64xf32>
    %9 = vector.shape_cast %8 : vector<64xf32> to vector<1x64xf32>
    %cst_6 = arith.constant 7.812500e-03 : f32
    %10 = vector.broadcast %cst_6 : f32 to vector<1x64xf32>
    %11 = arith.mulf %9, %10 : vector<1x64xf32>
    %12 = arith.mulf %6, %6 : vector<1x64xf32>
    %13 = arith.subf %11, %12 : vector<1x64xf32>
    %cst_7 = arith.constant 0.000000e+00 : f32
    %14 = vector.broadcast %cst_7 : f32 to vector<1x64xf32>
    %15 = arith.maximumf %13, %14 : vector<1x64xf32>
    %cst_8 = arith.constant 9.99999974E-6 : f32
    %16 = vector.broadcast %cst_8 : f32 to vector<1x64xf32>
    %17 = arith.addf %15, %16 : vector<1x64xf32>
    %18 = math.rsqrt %17 : vector<1x64xf32>
    %c0_9 = arith.constant 0 : index
    %c0_10 = arith.constant 0 : index
    %19 = vector.load %arg2[%c0_9, %c0_10] : memref<1x64xf32, #tpu.memory_space<vmem>>, vector<1x64xf32>
    %20 = arith.mulf %19, %18 : vector<1x64xf32>
    %c0_11 = arith.constant 0 : index
    %c0_12 = arith.constant 0 : index
    %21 = vector.load %arg3[%c0_11, %c0_12] : memref<1x64xf32, #tpu.memory_space<vmem>>, vector<1x64xf32>
    %22 = arith.mulf %6, %20 : vector<1x64xf32>
    %23 = arith.subf %21, %22 : vector<1x64xf32>
    %24 = vector.broadcast %20 : vector<1x64xf32> to vector<128x64xf32>
    %25 = arith.mulf %2, %24 : vector<128x64xf32>
    %26 = vector.broadcast %23 : vector<1x64xf32> to vector<128x64xf32>
    %27 = arith.addf %25, %26 : vector<128x64xf32>
    %cst_13 = arith.constant 0.000000e+00 : f32
    %28 = vector.broadcast %cst_13 : f32 to vector<128x64xf32>
    %29 = arith.cmpf ogt, %27, %28 : vector<128x64xf32>
    %cst_14 = arith.constant 2.000000e-01 : f32
    %30 = vector.broadcast %cst_14 : f32 to vector<128x64xf32>
    %31 = arith.mulf %30, %27 : vector<128x64xf32>
    %32 = arith.select %29, %27, %31 : vector<128x64xi1>, vector<128x64xf32>
    %33 = arith.truncf %32 : vector<128x64xf32> to vector<128x64xbf16>
    %c0_15 = arith.constant 0 : index
    %c0_16 = arith.constant 0 : index
    %34 = vector.load %arg4[%c0_15, %c0_16] : memref<128x64xbf16, #tpu.memory_space<vmem>>, vector<128x64xbf16>
    tpu.vector_store %arg4[%c0_15, %c0_16], %33 {strides = array<i32>} : memref<128x64xbf16, #tpu.memory_space<vmem>>, vector<128x64xbf16>,
    return
  }
}

module attributes {stable_mosaic.version = 11 : i64} {
  func.func @_conv_bn_lrelu_head_kernel(%arg0: memref<32x1024xbf16, #tpu.memory_space<vmem>>, %arg1: memref<1024x128xbf16, #tpu.memory_space<vmem>>, %arg2: memref<1x128xf32, #tpu.memory_space<vmem>>, %arg3: memref<1x128xf32, #tpu.memory_space<vmem>>, %arg4: memref<16x128xf32, #tpu.memory_space<vmem>>, %arg5: memref<2x1xf32, #tpu.memory_space<vmem>>) attributes {dimension_semantics = [], scalar_prefetch = 0 : i64, scratch_operands = 0 : i64, tpu.core_type = #tpu.core_type<tc>} {
    %c0 = arith.constant 0 : index
    %c0_0 = arith.constant 0 : index
    %0 = vector.load %arg0[%c0, %c0_0] : memref<32x1024xbf16, #tpu.memory_space<vmem>>, vector<32x1024xbf16>
    %c0_1 = arith.constant 0 : index
    %c0_2 = arith.constant 0 : index
    %1 = vector.load %arg1[%c0_1, %c0_2] : memref<1024x128xbf16, #tpu.memory_space<vmem>>, vector<1024x128xbf16>
    %cst = arith.constant dense<0.000000e+00> : vector<32x128xf32>
    %2 = tpu.matmul %0, %1, %cst {dimension_numbers = #tpu.dot_dimension_numbers<[1], [0], [0], [1], [0, 0, 1, 1], [], []>} : vector<32x1024xbf16>, vector<1024x128xbf16>, vector<32x128xf32> -> vector<32x128xf32>
    %cst_3 = arith.constant dense<0.000000e+00> : vector<128xf32>
    %3 = vector.multi_reduction <add>, %2, %cst_3 [0] : vector<32x128xf32> to vector<128xf32>
    %4 = vector.shape_cast %3 : vector<128xf32> to vector<1x128xf32>
    %cst_4 = arith.constant 3.125000e-02 : f32
    %5 = vector.broadcast %cst_4 : f32 to vector<1x128xf32>
    %6 = arith.mulf %4, %5 : vector<1x128xf32>
    %7 = arith.mulf %2, %2 : vector<32x128xf32>
    %cst_5 = arith.constant dense<0.000000e+00> : vector<128xf32>
    %8 = vector.multi_reduction <add>, %7, %cst_5 [0] : vector<32x128xf32> to vector<128xf32>
    %9 = vector.shape_cast %8 : vector<128xf32> to vector<1x128xf32>
    %cst_6 = arith.constant 3.125000e-02 : f32
    %10 = vector.broadcast %cst_6 : f32 to vector<1x128xf32>
    %11 = arith.mulf %9, %10 : vector<1x128xf32>
    %12 = arith.mulf %6, %6 : vector<1x128xf32>
    %13 = arith.subf %11, %12 : vector<1x128xf32>
    %cst_7 = arith.constant 0.000000e+00 : f32
    %14 = vector.broadcast %cst_7 : f32 to vector<1x128xf32>
    %15 = arith.maximumf %13, %14 : vector<1x128xf32>
    %cst_8 = arith.constant 9.99999974E-6 : f32
    %16 = vector.broadcast %cst_8 : f32 to vector<1x128xf32>
    %17 = arith.addf %15, %16 : vector<1x128xf32>
    %18 = math.rsqrt %17 : vector<1x128xf32>
    %c0_9 = arith.constant 0 : index
    %c0_10 = arith.constant 0 : index
    %19 = vector.load %arg2[%c0_9, %c0_10] : memref<1x128xf32, #tpu.memory_space<vmem>>, vector<1x128xf32>
    %20 = arith.mulf %19, %18 : vector<1x128xf32>
    %c0_11 = arith.constant 0 : index
    %c0_12 = arith.constant 0 : index
    %21 = vector.load %arg3[%c0_11, %c0_12] : memref<1x128xf32, #tpu.memory_space<vmem>>, vector<1x128xf32>
    %22 = arith.mulf %6, %20 : vector<1x128xf32>
    %23 = arith.subf %21, %22 : vector<1x128xf32>
    %24 = vector.broadcast %20 : vector<1x128xf32> to vector<32x128xf32>
    %25 = arith.mulf %2, %24 : vector<32x128xf32>
    %26 = vector.broadcast %23 : vector<1x128xf32> to vector<32x128xf32>
    %27 = arith.addf %25, %26 : vector<32x128xf32>
    %cst_13 = arith.constant 0.000000e+00 : f32
    %28 = vector.broadcast %cst_13 : f32 to vector<32x128xf32>
    %29 = arith.cmpf ogt, %27, %28 : vector<32x128xf32>
    %cst_14 = arith.constant 2.000000e-01 : f32
    %30 = vector.broadcast %cst_14 : f32 to vector<32x128xf32>
    %31 = arith.mulf %30, %27 : vector<32x128xf32>
    %32 = arith.select %29, %27, %31 : vector<32x128xi1>, vector<32x128xf32>
    %c0_15 = arith.constant 0 : index
    %c0_16 = arith.constant 0 : index
    %33 = vector.load %arg4[%c0_15, %c0_16] : memref<16x128xf32, #tpu.memory_space<vmem>>, vector<16x128xf32>
    %34 = vector.extract_strided_slice %32 {offsets = [0, 0], sizes = [16, 128], strides = [1, 1]} : vector<32x128xf32> to vector<16x128xf32>
    %35 = arith.mulf %34, %33 : vector<16x128xf32>
    %cst_17 = arith.constant dense<0.000000e+00> : vector<16xf32>
    %36 = vector.multi_reduction <add>, %35, %cst_17 [1] : vector<16x128xf32> to vector<16xf32>
    %37 = vector.shape_cast %36 : vector<16xf32> to vector<16x1xf32>
    %cst_18 = arith.constant dense<0.000000e+00> : vector<1xf32>
    %38 = vector.multi_reduction <add>, %37, %cst_18 [0] : vector<16x1xf32> to vector<1xf32>
    %39 = vector.shape_cast %38 : vector<1xf32> to vector<1x1xf32>
    %40 = vector.extract_strided_slice %32 {offsets = [16, 0], sizes = [16, 128], strides = [1, 1]} : vector<32x128xf32> to vector<16x128xf32>
    %41 = arith.mulf %40, %33 : vector<16x128xf32>
    %cst_19 = arith.constant dense<0.000000e+00> : vector<16xf32>
    %42 = vector.multi_reduction <add>, %41, %cst_19 [1] : vector<16x128xf32> to vector<16xf32>
    %43 = vector.shape_cast %42 : vector<16xf32> to vector<16x1xf32>
    %cst_20 = arith.constant dense<0.000000e+00> : vector<1xf32>
    %44 = vector.multi_reduction <add>, %43, %cst_20 [0] : vector<16x1xf32> to vector<1xf32>
    %45 = vector.shape_cast %44 : vector<1xf32> to vector<1x1xf32>
    %46 = tpu.concatenate %39, %45 in 0 : vector<1x1xf32>, vector<1x1xf32> -> vector<2x1xf32>
    %47 = arith.negf %46 : vector<2x1xf32>
    %48 = math.exp %47 : vector<2x1xf32>
    %cst_21 = arith.constant 1.000000e+00 : f32
    %49 = vector.broadcast %cst_21 : f32 to vector<2x1xf32>
    %50 = arith.addf %49, %48 : vector<2x1xf32>
    %51 = arith.divf %49, %50 : vector<2x1xf32>
    %c0_22 = arith.constant 0 : index
    %c0_23 = arith.constant 0 : index
    %52 = vector.load %arg5[%c0_22, %c0_23] : memref<2x1xf32, #tpu.memory_space<vmem>>, vector<2x1xf32>
    tpu.vector_store %arg5[%c0_22, %c0_23], %51 {strides = array<i32>} : memref<2x1xf32, #tpu.memory_space<vmem>>, vector<2x1xf32>,
    return
  }
}

</mosaic_0001>

<llo_original>
// kernel: conv_discriminator_forward.4
$region0: #{conv_discriminator_forward.4}
  #allocation0 [shape = 'u32[]', space=smem, size = 0x4, offset = 0x4, fixed_abs, tag = 'smem constant byte address 0x4 - core index']
  #allocation1 [shape = 'u32[72,128]{1,0:T(1,128)}', space=vmem, size = 0x9000, scoped, tag = 'internal scratch']
  %s0 = inlined_call_operand.vmem [shape: bf16[2048,16], index: 0, kind: input, shape index: {}]
  %s1 = inlined_call_operand.vmem [shape: bf16[16,16], index: 1, kind: input, shape index: {}]
  %s2 = inlined_call_operand.vmem [shape: bf16[2048,16], index: 2, kind: output, shape index: {}]
  %s3 = sld [smem:[#allocation0]]
  $region41: #{conv_discriminator_forward.4} parent=0
    _
  %s5 = ssub.s32 1, %s3
  %s6 = scalar_select 0, %s5, %s3
  loop: start=0, step=1, limit=4
  $region2: #{conv_discriminator_forward.4} parent=0 // loop_pre_header
    _
  $region3: #{conv_discriminator_forward.4} parent=0 // loop_header
    %s8 = sphi 0, %s12
    %p9 = scmp.ge.s32.totalorder %s8, 4
    %s18 = sphi 0, %s20
    %s21 = sphi 0, %s18
    %s22 = sphi 0, %s21
    %s38 = sphi 0, %s22
    %s42 = sphi 0, %s42
    %s44 = sphi 0, %s42
    %s45 = sphi 0, %s44
    %s59 = sphi 0, %s45
    %s65 = sphi 0, %s67
    %s68 = sphi 0, %s65
    %s69 = sphi 0, %s68
    %s85 = sphi 0, %s69
  $region4: #{conv_discriminator_forward.4} parent=0 // loop_header_branch
    %11 = sbr.rel (%p9) target = $region8
  $region5: #{conv_discriminator_forward.4} parent=0 // loop_body
    %s13 = ssub.s32 %s8, 1
    %s14 = ssub.s32 %s8, 2
    %s15 = sadd.s32 %s8, 1
    %s16 = ssub.s32 %s8, %s15
    %p17 = scmp.eq.s32.totalorder %s16, 0
    %s19 = sadd.s32 %s18, 1
    %s20 = scalar_select %p17, %s18, %s19
    %p23 = pneg %p17
    %p24 = scmp.eq.s32.totalorder %s8, 1
    %p25 = por %p23, %p24
    %p26 = scmp.ne.s32.totalorder %s18, %s21
    %p27 = scmp.eq.s32.totalorder %s8, 0
    %p28 = por %p26, %p27
    %p29 = scmp.ne.s32.totalorder %s18, %s21
    %p30 = scmp.eq.s32.totalorder %s13, 1
    %p31 = por %p29, %p30
    %p32 = scmp.ne.s32.totalorder %s21, %s22
    %p33 = scmp.eq.s32.totalorder %s13, 0
    %p34 = por %p32, %p33
    %p35 = scmp.ne.s32.totalorder %s21, %s22
    %p36 = scmp.eq.s32.totalorder %s14, 1
    %p37 = por %p35, %p36
    %p39 = scmp.ne.s32.totalorder %s22, %s38
    %p40 = scmp.eq.s32.totalorder %s14, 0
    %p41 = por %p39, %p40
    %s43 = sadd.s32 %s42, 1
    %p46 = scmp.eq.s32.totalorder %s8, 1
    %p47 = scmp.ne.s32.totalorder %s42, %s44
    %p48 = scmp.eq.s32.totalorder %s8, 0
    %p49 = por %p47, %p48
    %p50 = scmp.ne.s32.totalorder %s42, %s44
    %p51 = scmp.eq.s32.totalorder %s13, 1
    %p52 = por %p50, %p51
    %p53 = scmp.ne.s32.totalorder %s44, %s45
    %p54 = scmp.eq.s32.totalorder %s13, 0
    %p55 = por %p53, %p54
    %p56 = scmp.ne.s32.totalorder %s44, %s45
    %p57 = scmp.eq.s32.totalorder %s14, 1
    %p58 = por %p56, %p57
    %p60 = scmp.ne.s32.totalorder %s45, %s59
    %p61 = scmp.eq.s32.totalorder %s14, 0
    %p62 = por %p60, %p61
    %s63 = ssub.s32 %s8, %s15
    %p64 = scmp.eq.s32.totalorder %s63, 0
    %s66 = sadd.s32 %s65, 1
    %s67 = scalar_select %p64, %s65, %s66
    %p70 = pneg %p64
    %p71 = scmp.eq.s32.totalorder %s8, 1
    %p72 = por %p70, %p71
    %p73 = scmp.ne.s32.totalorder %s65, %s68
    %p74 = scmp.eq.s32.totalorder %s8, 0
    %p75 = por %p73, %p74
    %p76 = scmp.ne.s32.totalorder %s65, %s68
    %p77 = scmp.eq.s32.totalorder %s13, 1
    %p78 = por %p76, %p77
    %p79 = scmp.ne.s32.totalorder %s68, %s69
    %p80 = scmp.eq.s32.totalorder %s13, 0
    %p81 = por %p79, %p80
    %p82 = scmp.ne.s32.totalorder %s68, %s69
    %p83 = scmp.eq.s32.totalorder %s14, 1
    %p84 = por %p82, %p83
    %p86 = scmp.ne.s32.totalorder %s69, %s85
    %p87 = scmp.eq.s32.totalorder %s14, 0
    %p88 = por %p86, %p87
    %p89 = scmp.le.s32.totalorder 1, %s8
    %p90 = scmp.lt.s32.totalorder %s8, 3
    %p91 = pnand %p89, %p90
    %p92 = pneg %p91
    // Predicated region
    $region9: #{conv_discriminator_forward.4} parent=5 // pred_check
      _
    $region10: #{conv_discriminator_forward.4} parent=5 // pred_check_branch
      %94 = sbr.rel (%p91) target = $region12
    $region11: #{conv_discriminator_forward.4} parent=5 // pred_region
      %s95 = ssub.s32 %s8, 1
      // Predicated region
      $region13: #{conv_discriminator_forward.4} parent=11 // pred_check
        %p96 = pneg %p55
      $region14: #{conv_discriminator_forward.4} parent=11 // pred_check_branch
        %98 = sbr.rel (%p96) target = $region16
      $region15: #{conv_discriminator_forward.4} parent=11 // pred_region
        _
      $region16: #{conv_discriminator_forward.4} parent=11 // pred_fallthru
        _
    $region12: #{conv_discriminator_forward.4} parent=5 // pred_fallthru
      _
    %p99 = scmp.lt.s32.totalorder %s8, 2
    // Predicated region
    $region17: #{conv_discriminator_forward.4} parent=5 // pred_check
      %p100 = pneg %p99
    $region18: #{conv_discriminator_forward.4} parent=5 // pred_check_branch
      %102 = sbr.rel (%p100) target = $region20
    $region19: #{conv_discriminator_forward.4} parent=5 // pred_region
      // Predicated region
      $region21: #{conv_discriminator_forward.4} parent=19 // pred_check
        %p103 = pneg %p28
      $region22: #{conv_discriminator_forward.4} parent=19 // pred_check_branch
        %105 = sbr.rel (%p103) target = $region24
      $region23: #{conv_discriminator_forward.4} parent=19 // pred_region
        %s106 = smul.u32 128, %s8
        %p107 = scmp.lt.s32.totalorder %s106, 255
        %s108 = scalar_select %p107, %s106, 255
        %s109 = smul.addr %s108, 4
        %s110 = scalar_lea.vmem %s0, %s109
        %s111 = smul.u32 128, %s8
      $region24: #{conv_discriminator_forward.4} parent=19 // pred_fallthru
        _
    $region20: #{conv_discriminator_forward.4} parent=5 // pred_fallthru
      _
    %p112 = scmp.le.s32.totalorder 1, %s8
    %p113 = scmp.lt.s32.totalorder %s8, 3
    %p114 = pnand %p112, %p113
    %p115 = pneg %p114
    // Predicated region
    $region25: #{conv_discriminator_forward.4} parent=5 // pred_check
      _
    $region26: #{conv_discriminator_forward.4} parent=5 // pred_check_branch
      %117 = sbr.rel (%p114) target = $region28
    $region27: #{conv_discriminator_forward.4} parent=5 // pred_region
      %s118 = ssub.s32 %s8, 1
      %s119 = smul.u32 128, %s13
      %p120 = scmp.lt.s32.totalorder %s119, 255
      %s121 = scalar_select %p120, %s119, 255
      %s122 = smul.addr %s121, 4
      %s123 = scalar_lea.vmem %s0, %s122
      %p124 = pneg %p34
      %p125 = pneg %p31
      %p126 = pneg %p55
      %p127 = pneg %p52
      %p128 = pneg %p81
      %p129 = pneg %p78
      %s130 = smul.u32 128, %s13
      %p131 = scmp.lt.s32.totalorder %s130, 255
      %s132 = scalar_select %p131, %s130, 255
      %s133 = smul.addr %s132, 4
      %s134 = scalar_lea.vmem %s2, %s133
      %s135 = smul.u32 128, %s13
      %p136 = scmp.lt.s32.totalorder %s135, 255
      %s137 = scalar_select %p136, %s135, 255
      %s138 = smul.addr %s137, 4
      %s139 = scalar_lea.vmem %s0, %s138
      %s140 = smul.u32 128, %s13
      %s141 = smul.u32 128, %s13
      %p142 = scmp.lt.s32.totalorder %s141, 255
      %s143 = scalar_select %p142, %s141, 255
      %s144 = smul.addr %s143, 4
      %s145 = scalar_lea.vmem %s2, %s144
      %s146 = smul.u32 128, %s13
      %v148 = vld [vmem:[%s139] sm:$0xf]
      %v149 = vld [vmem:[%s139 + $0x4] sm:$0xf]
      %v150 = vld [vmem:[%s139 + $0x8] sm:$0xf]
      %v151 = vld [vmem:[%s139 + $0xc] sm:$0xf]
      %v152 = vld [vmem:[%s139 + $0x10] sm:$0xf]
      %v153 = vld [vmem:[%s139 + $0x14] sm:$0xf]
      %v154 = vld [vmem:[%s139 + $0x18] sm:$0xf]
      %v155 = vld [vmem:[%s139 + $0x1c] sm:$0xf]
      %v156 = vld [vmem:[%s139 + $0x20] sm:$0xf]
      %v157 = vld [vmem:[%s139 + $0x24] sm:$0xf]
      %v158 = vld [vmem:[%s139 + $0x28] sm:$0xf]
      %v159 = vld [vmem:[%s139 + $0x2c] sm:$0xf]
      %v160 = vld [vmem:[%s139 + $0x30] sm:$0xf]
      %v161 = vld [vmem:[%s139 + $0x34] sm:$0xf]
      %v162 = vld [vmem:[%s139 + $0x38] sm:$0xf]
      %v163 = vld [vmem:[%s139 + $0x3c] sm:$0xf]
      %v164 = vld [vmem:[%s139 + $0x40] sm:$0xf]
      %v165 = vld [vmem:[%s139 + $0x44] sm:$0xf]
      %v166 = vld [vmem:[%s139 + $0x48] sm:$0xf]
      %v167 = vld [vmem:[%s139 + $0x4c] sm:$0xf]
      %v168 = vld [vmem:[%s139 + $0x50] sm:$0xf]
      %v169 = vld [vmem:[%s139 + $0x54] sm:$0xf]
      %v170 = vld [vmem:[%s139 + $0x58] sm:$0xf]
      %v171 = vld [vmem:[%s139 + $0x5c] sm:$0xf]
      %v172 = vld [vmem:[%s139 + $0x60] sm:$0xf]
      %v173 = vld [vmem:[%s139 + $0x64] sm:$0xf]
      %v174 = vld [vmem:[%s139 + $0x68] sm:$0xf]
      %v175 = vld [vmem:[%s139 + $0x6c] sm:$0xf]
      %v176 = vld [vmem:[%s139 + $0x70] sm:$0xf]
      %v177 = vld [vmem:[%s139 + $0x74] sm:$0xf]
      %v178 = vld [vmem:[%s139 + $0x78] sm:$0xf]
      %v179 = vld [vmem:[%s139 + $0x7c] sm:$0xf]
      %v180 = vld [vmem:[%s139 + $0x80] sm:$0xf]
      %v181 = vld [vmem:[%s139 + $0x84] sm:$0xf]
      %v182 = vld [vmem:[%s139 + $0x88] sm:$0xf]
      %v183 = vld [vmem:[%s139 + $0x8c] sm:$0xf]
      %v184 = vld [vmem:[%s139 + $0x90] sm:$0xf]
      %v185 = vld [vmem:[%s139 + $0x94] sm:$0xf]
      %v186 = vld [vmem:[%s139 + $0x98] sm:$0xf]
      %v187 = vld [vmem:[%s139 + $0x9c] sm:$0xf]
      %v188 = vld [vmem:[%s139 + $0xa0] sm:$0xf]
      %v189 = vld [vmem:[%s139 + $0xa4] sm:$0xf]
      %v190 = vld [vmem:[%s139 + $0xa8] sm:$0xf]
      %v191 = vld [vmem:[%s139 + $0xac] sm:$0xf]
      %v192 = vld [vmem:[%s139 + $0xb0] sm:$0xf]
      %v193 = vld [vmem:[%s139 + $0xb4] sm:$0xf]
      %v194 = vld [vmem:[%s139 + $0xb8] sm:$0xf]
      %v195 = vld [vmem:[%s139 + $0xbc] sm:$0xf]
      %v196 = vld [vmem:[%s139 + $0xc0] sm:$0xf]
      %v197 = vld [vmem:[%s139 + $0xc4] sm:$0xf]
      %v198 = vld [vmem:[%s139 + $0xc8] sm:$0xf]
      %v199 = vld [vmem:[%s139 + $0xcc] sm:$0xf]
      %v200 = vld [vmem:[%s139 + $0xd0] sm:$0xf]
      %v201 = vld [vmem:[%s139 + $0xd4] sm:$0xf]
      %v202 = vld [vmem:[%s139 + $0xd8] sm:$0xf]
      %v203 = vld [vmem:[%s139 + $0xdc] sm:$0xf]
      %v204 = vld [vmem:[%s139 + $0xe0] sm:$0xf]
      %v205 = vld [vmem:[%s139 + $0xe4] sm:$0xf]
      %v206 = vld [vmem:[%s139 + $0xe8] sm:$0xf]
      %v207 = vld [vmem:[%s139 + $0xec] sm:$0xf]
      %v208 = vld [vmem:[%s139 + $0xf0] sm:$0xf]
      %v209 = vld [vmem:[%s139 + $0xf4] sm:$0xf]
      %v210 = vld [vmem:[%s139 + $0xf8] sm:$0xf]
      %v211 = vld [vmem:[%s139 + $0xfc] sm:$0xf]
      %v212 = vld [vmem:[%s139 + $0x100] sm:$0xf]
      %v213 = vld [vmem:[%s139 + $0x104] sm:$0xf]
      %v214 = vld [vmem:[%s139 + $0x108] sm:$0xf]
      %v215 = vld [vmem:[%s139 + $0x10c] sm:$0xf]
      %v216 = vld [vmem:[%s139 + $0x110] sm:$0xf]
      %v217 = vld [vmem:[%s139 + $0x114] sm:$0xf]
      %v218 = vld [vmem:[%s139 + $0x118] sm:$0xf]
      %v219 = vld [vmem:[%s139 + $0x11c] sm:$0xf]
      %v220 = vld [vmem:[%s139 + $0x120] sm:$0xf]
      %v221 = vld [vmem:[%s139 + $0x124] sm:$0xf]
      %v222 = vld [vmem:[%s139 + $0x128] sm:$0xf]
      %v223 = vld [vmem:[%s139 + $0x12c] sm:$0xf]
      %v224 = vld [vmem:[%s139 + $0x130] sm:$0xf]
      %v225 = vld [vmem:[%s139 + $0x134] sm:$0xf]
      %v226 = vld [vmem:[%s139 + $0x138] sm:$0xf]
      %v227 = vld [vmem:[%s139 + $0x13c] sm:$0xf]
      %v228 = vld [vmem:[%s139 + $0x140] sm:$0xf]
      %v229 = vld [vmem:[%s139 + $0x144] sm:$0xf]
      %v230 = vld [vmem:[%s139 + $0x148] sm:$0xf]
      %v231 = vld [vmem:[%s139 + $0x14c] sm:$0xf]
      %v232 = vld [vmem:[%s139 + $0x150] sm:$0xf]
      %v233 = vld [vmem:[%s139 + $0x154] sm:$0xf]
      %v234 = vld [vmem:[%s139 + $0x158] sm:$0xf]
      %v235 = vld [vmem:[%s139 + $0x15c] sm:$0xf]
      %v236 = vld [vmem:[%s139 + $0x160] sm:$0xf]
      %v237 = vld [vmem:[%s139 + $0x164] sm:$0xf]
      %v238 = vld [vmem:[%s139 + $0x168] sm:$0xf]
      %v239 = vld [vmem:[%s139 + $0x16c] sm:$0xf]
      %v240 = vld [vmem:[%s139 + $0x170] sm:$0xf]
      %v241 = vld [vmem:[%s139 + $0x174] sm:$0xf]
      %v242 = vld [vmem:[%s139 + $0x178] sm:$0xf]
      %v243 = vld [vmem:[%s139 + $0x17c] sm:$0xf]
      %v244 = vld [vmem:[%s139 + $0x180] sm:$0xf]
      %v245 = vld [vmem:[%s139 + $0x184] sm:$0xf]
      %v246 = vld [vmem:[%s139 + $0x188] sm:$0xf]
      %v247 = vld [vmem:[%s139 + $0x18c] sm:$0xf]
      %v248 = vld [vmem:[%s139 + $0x190] sm:$0xf]
      %v249 = vld [vmem:[%s139 + $0x194] sm:$0xf]
      %v250 = vld [vmem:[%s139 + $0x198] sm:$0xf]
      %v251 = vld [vmem:[%s139 + $0x19c] sm:$0xf]
      %v252 = vld [vmem:[%s139 + $0x1a0] sm:$0xf]
      %v253 = vld [vmem:[%s139 + $0x1a4] sm:$0xf]
      %v254 = vld [vmem:[%s139 + $0x1a8] sm:$0xf]
      %v255 = vld [vmem:[%s139 + $0x1ac] sm:$0xf]
      %v256 = vld [vmem:[%s139 + $0x1b0] sm:$0xf]
      %v257 = vld [vmem:[%s139 + $0x1b4] sm:$0xf]
      %v258 = vld [vmem:[%s139 + $0x1b8] sm:$0xf]
      %v259 = vld [vmem:[%s139 + $0x1bc] sm:$0xf]
      %v260 = vld [vmem:[%s139 + $0x1c0] sm:$0xf]
      %v261 = vld [vmem:[%s139 + $0x1c4] sm:$0xf]
      %v262 = vld [vmem:[%s139 + $0x1c8] sm:$0xf]
      %v263 = vld [vmem:[%s139 + $0x1cc] sm:$0xf]
      %v264 = vld [vmem:[%s139 + $0x1d0] sm:$0xf]
      %v265 = vld [vmem:[%s139 + $0x1d4] sm:$0xf]
      %v266 = vld [vmem:[%s139 + $0x1d8] sm:$0xf]
      %v267 = vld [vmem:[%s139 + $0x1dc] sm:$0xf]
      %v268 = vld [vmem:[%s139 + $0x1e0] sm:$0xf]
      %v269 = vld [vmem:[%s139 + $0x1e4] sm:$0xf]
      %v270 = vld [vmem:[%s139 + $0x1e8] sm:$0xf]
      %v271 = vld [vmem:[%s139 + $0x1ec] sm:$0xf]
      %v272 = vld [vmem:[%s139 + $0x1f0] sm:$0xf]
      %v273 = vld [vmem:[%s139 + $0x1f4] sm:$0xf]
      %v274 = vld [vmem:[%s139 + $0x1f8] sm:$0xf]
      %v275 = vld [vmem:[%s139 + $0x1fc] sm:$0xf]
      %v276 = vld [vmem:[%s1] sm:$0xf]
      %v277 = vld [vmem:[%s1 + $0x4] sm:$0xf]
      %v406 = vunpack.c.l.b16 %v148
      %v407 = vunpack.c.l.b16 %v149
      %v408 = vunpack.c.l.b16 %v150
      %v409 = vunpack.c.l.b16 %v151
      %v410 = vunpack.c.l.b16 %v152
      %v411 = vunpack.c.l.b16 %v153
      %v412 = vunpack.c.l.b16 %v154
      %v413 = vunpack.c.l.b16 %v155
      %v414 = vunpack.c.l.b16 %v156
      %v415 = vunpack.c.l.b16 %v157
      %v416 = vunpack.c.l.b16 %v158
      %v417 = vunpack.c.l.b16 %v159
      %v418 = vunpack.c.l.b16 %v160
      %v419 = vunpack.c.l.b16 %v161
      %v420 = vunpack.c.l.b16 %v162
      %v421 = vunpack.c.l.b16 %v163
      %v422 = vunpack.c.l.b16 %v164
      %v423 = vunpack.c.l.b16 %v165
      %v424 = vunpack.c.l.b16 %v166
      %v425 = vunpack.c.l.b16 %v167
      %v426 = vunpack.c.l.b16 %v168
      %v427 = vunpack.c.l.b16 %v169
      %v428 = vunpack.c.l.b16 %v170
      %v429 = vunpack.c.l.b16 %v171
      %v430 = vunpack.c.l.b16 %v172
      %v431 = vunpack.c.l.b16 %v173
      %v432 = vunpack.c.l.b16 %v174
      %v433 = vunpack.c.l.b16 %v175
      %v434 = vunpack.c.l.b16 %v176
      %v435 = vunpack.c.l.b16 %v177
      %v436 = vunpack.c.l.b16 %v178
      %v437 = vunpack.c.l.b16 %v179
      %v438 = vunpack.c.l.b16 %v180
      %v439 = vunpack.c.l.b16 %v181
      %v440 = vunpack.c.l.b16 %v182
      %v441 = vunpack.c.l.b16 %v183
      %v442 = vunpack.c.l.b16 %v184
      %v443 = vunpack.c.l.b16 %v185
      %v444 = vunpack.c.l.b16 %v186
      %v445 = vunpack.c.l.b16 %v187
      %v446 = vunpack.c.l.b16 %v188
      %v447 = vunpack.c.l.b16 %v189
      %v448 = vunpack.c.l.b16 %v190
      %v449 = vunpack.c.l.b16 %v191
      %v450 = vunpack.c.l.b16 %v192
      %v451 = vunpack.c.l.b16 %v193
      %v452 = vunpack.c.l.b16 %v194
      %v453 = vunpack.c.l.b16 %v195
      %v454 = vunpack.c.l.b16 %v196
      %v455 = vunpack.c.l.b16 %v197
      %v456 = vunpack.c.l.b16 %v198
      %v457 = vunpack.c.l.b16 %v199
      %v458 = vunpack.c.l.b16 %v200
      %v459 = vunpack.c.l.b16 %v201
      %v460 = vunpack.c.l.b16 %v202
      %v461 = vunpack.c.l.b16 %v203
      %v462 = vunpack.c.l.b16 %v204
      %v463 = vunpack.c.l.b16 %v205
      %v464 = vunpack.c.l.b16 %v206
      %v465 = vunpack.c.l.b16 %v207
      %v466 = vunpack.c.l.b16 %v208
      %v467 = vunpack.c.l.b16 %v209
      %v468 = vunpack.c.l.b16 %v210
      %v469 = vunpack.c.l.b16 %v211
      %v470 = vunpack.c.l.b16 %v212
      %v471 = vunpack.c.l.b16 %v213
      %v472 = vunpack.c.l.b16 %v214
      %v473 = vunpack.c.l.b16 %v215
      %v474 = vunpack.c.l.b16 %v216
      %v475 = vunpack.c.l.b16 %v217
      %v476 = vunpack.c.l.b16 %v218
      %v477 = vunpack.c.l.b16 %v219
      %v478 = vunpack.c.l.b16 %v220
      %v479 = vunpack.c.l.b16 %v221
      %v480 = vunpack.c.l.b16 %v222
      %v481 = vunpack.c.l.b16 %v223
      %v482 = vunpack.c.l.b16 %v224
      %v483 = vunpack.c.l.b16 %v225
      %v484 = vunpack.c.l.b16 %v226
      %v485 = vunpack.c.l.b16 %v227
      %v486 = vunpack.c.l.b16 %v228
      %v487 = vunpack.c.l.b16 %v229
      %v488 = vunpack.c.l.b16 %v230
      %v489 = vunpack.c.l.b16 %v231
      %v490 = vunpack.c.l.b16 %v232
      %v491 = vunpack.c.l.b16 %v233
      %v492 = vunpack.c.l.b16 %v234
      %v493 = vunpack.c.l.b16 %v235
      %v494 = vunpack.c.l.b16 %v236
      %v495 = vunpack.c.l.b16 %v237
      %v496 = vunpack.c.l.b16 %v238
      %v497 = vunpack.c.l.b16 %v239
      %v498 = vunpack.c.l.b16 %v240
      %v499 = vunpack.c.l.b16 %v241
      %v500 = vunpack.c.l.b16 %v242
      %v501 = vunpack.c.l.b16 %v243
      %v502 = vunpack.c.l.b16 %v244
      %v503 = vunpack.c.l.b16 %v245
      %v504 = vunpack.c.l.b16 %v246
      %v505 = vunpack.c.l.b16 %v247
      %v506 = vunpack.c.l.b16 %v248
      %v507 = vunpack.c.l.b16 %v249
      %v508 = vunpack.c.l.b16 %v250
      %v509 = vunpack.c.l.b16 %v251
      %v510 = vunpack.c.l.b16 %v252
      %v511 = vunpack.c.l.b16 %v253
      %v512 = vunpack.c.l.b16 %v254
      %v513 = vunpack.c.l.b16 %v255
      %v514 = vunpack.c.l.b16 %v256
      %v515 = vunpack.c.l.b16 %v257
      %v516 = vunpack.c.l.b16 %v258
      %v517 = vunpack.c.l.b16 %v259
      %v518 = vunpack.c.l.b16 %v260
      %v519 = vunpack.c.l.b16 %v261
      %v520 = vunpack.c.l.b16 %v262
      %v521 = vunpack.c.l.b16 %v263
      %v522 = vunpack.c.l.b16 %v264
      %v523 = vunpack.c.l.b16 %v265
      %v524 = vunpack.c.l.b16 %v266
      %v525 = vunpack.c.l.b16 %v267
      %v526 = vunpack.c.l.b16 %v268
      %v527 = vunpack.c.l.b16 %v269
      %v528 = vunpack.c.l.b16 %v270
      %v529 = vunpack.c.l.b16 %v271
      %v530 = vunpack.c.l.b16 %v272
      %v531 = vunpack.c.l.b16 %v273
      %v532 = vunpack.c.l.b16 %v274
      %v533 = vunpack.c.l.b16 %v275
      %v534 = vpack.c.b16 %v407, %v406
      %v535 = vpack.c.b16 %v409, %v408
      %v536 = vpack.c.b16 %v411, %v410
      %v537 = vpack.c.b16 %v413, %v412
      %v538 = vpack.c.b16 %v415, %v414
      %v539 = vpack.c.b16 %v417, %v416
      %v540 = vpack.c.b16 %v419, %v418
      %v541 = vpack.c.b16 %v421, %v420
      %v542 = vpack.c.b16 %v423, %v422
      %v543 = vpack.c.b16 %v425, %v424
      %v544 = vpack.c.b16 %v427, %v426
      %v545 = vpack.c.b16 %v429, %v428
      %v546 = vpack.c.b16 %v431, %v430
      %v547 = vpack.c.b16 %v433, %v432
      %v548 = vpack.c.b16 %v435, %v434
      %v549 = vpack.c.b16 %v437, %v436
      %v550 = vpack.c.b16 %v439, %v438
      %v551 = vpack.c.b16 %v441, %v440
      %v552 = vpack.c.b16 %v443, %v442
      %v553 = vpack.c.b16 %v445, %v444
      %v554 = vpack.c.b16 %v447, %v446
      %v555 = vpack.c.b16 %v449, %v448
      %v556 = vpack.c.b16 %v451, %v450
      %v557 = vpack.c.b16 %v453, %v452
      %v558 = vpack.c.b16 %v455, %v454
      %v559 = vpack.c.b16 %v457, %v456
      %v560 = vpack.c.b16 %v459, %v458
      %v561 = vpack.c.b16 %v461, %v460
      %v562 = vpack.c.b16 %v463, %v462
      %v563 = vpack.c.b16 %v465, %v464
      %v564 = vpack.c.b16 %v467, %v466
      %v565 = vpack.c.b16 %v469, %v468
      %v566 = vpack.c.b16 %v471, %v470
      %v567 = vpack.c.b16 %v473, %v472
      %v568 = vpack.c.b16 %v475, %v474
      %v569 = vpack.c.b16 %v477, %v476
      %v570 = vpack.c.b16 %v479, %v478
      %v571 = vpack.c.b16 %v481, %v480
      %v572 = vpack.c.b16 %v483, %v482
      %v573 = vpack.c.b16 %v485, %v484
      %v574 = vpack.c.b16 %v487, %v486
      %v575 = vpack.c.b16 %v489, %v488
      %v576 = vpack.c.b16 %v491, %v490
      %v577 = vpack.c.b16 %v493, %v492
      %v578 = vpack.c.b16 %v495, %v494
      %v579 = vpack.c.b16 %v497, %v496
      %v580 = vpack.c.b16 %v499, %v498
      %v581 = vpack.c.b16 %v501, %v500
      %v582 = vpack.c.b16 %v503, %v502
      %v583 = vpack.c.b16 %v505, %v504
      %v584 = vpack.c.b16 %v507, %v506
      %v585 = vpack.c.b16 %v509, %v508
      %v586 = vpack.c.b16 %v511, %v510
      %v587 = vpack.c.b16 %v513, %v512
      %v588 = vpack.c.b16 %v515, %v514
      %v589 = vpack.c.b16 %v517, %v516
      %v590 = vpack.c.b16 %v519, %v518
      %v591 = vpack.c.b16 %v521, %v520
      %v592 = vpack.c.b16 %v523, %v522
      %v593 = vpack.c.b16 %v525, %v524
      %v594 = vpack.c.b16 %v527, %v526
      %v595 = vpack.c.b16 %v529, %v528
      %v596 = vpack.c.b16 %v531, %v530
      %v597 = vpack.c.b16 %v533, %v532
      %v600 = vunpack.c.l.b16 %v276
      %v601 = vunpack.c.l.b16 %v277
      %v602 = vpack.c.b16 %v601, %v600
      %vm604 = vcmask 130048
      %v606 = vsel %vm604, %v534, 0
      %v609 = vsel %vm604, %v535, 0
      %v612 = vsel %vm604, %v536, 0
      %v615 = vsel %vm604, %v537, 0
      %v618 = vsel %vm604, %v538, 0
      %v621 = vsel %vm604, %v539, 0
      %v624 = vsel %vm604, %v540, 0
      %v627 = vsel %vm604, %v541, 0
      %v630 = vsel %vm604, %v542, 0
      %v633 = vsel %vm604, %v543, 0
      %v636 = vsel %vm604, %v544, 0
      %v639 = vsel %vm604, %v545, 0
      %v642 = vsel %vm604, %v546, 0
      %v645 = vsel %vm604, %v547, 0
      %v648 = vsel %vm604, %v548, 0
      %v651 = vsel %vm604, %v549, 0
      %v654 = vsel %vm604, %v550, 0
      %v657 = vsel %vm604, %v551, 0
      %v660 = vsel %vm604, %v552, 0
      %v663 = vsel %vm604, %v553, 0
      %v666 = vsel %vm604, %v554, 0
      %v669 = vsel %vm604, %v555, 0
      %v672 = vsel %vm604, %v556, 0
      %v675 = vsel %vm604, %v557, 0
      %v678 = vsel %vm604, %v558, 0
      %v681 = vsel %vm604, %v559, 0
      %v684 = vsel %vm604, %v560, 0
      %v687 = vsel %vm604, %v561, 0
      %v690 = vsel %vm604, %v562, 0
      %v693 = vsel %vm604, %v563, 0
      %v696 = vsel %vm604, %v564, 0
      %v699 = vsel %vm604, %v565, 0
      %v702 = vsel %vm604, %v566, 0
      %v705 = vsel %vm604, %v567, 0
      %v708 = vsel %vm604, %v568, 0
      %v711 = vsel %vm604, %v569, 0
      %v714 = vsel %vm604, %v570, 0
      %v717 = vsel %vm604, %v571, 0
      %v720 = vsel %vm604, %v572, 0
      %v723 = vsel %vm604, %v573, 0
      %v726 = vsel %vm604, %v574, 0
      %v729 = vsel %vm604, %v575, 0
      %v732 = vsel %vm604, %v576, 0
      %v735 = vsel %vm604, %v577, 0
      %v738 = vsel %vm604, %v578, 0
      %v741 = vsel %vm604, %v579, 0
      %v744 = vsel %vm604, %v580, 0
      %v747 = vsel %vm604, %v581, 0
      %v750 = vsel %vm604, %v582, 0
      %v753 = vsel %vm604, %v583, 0
      %v756 = vsel %vm604, %v584, 0
      %v759 = vsel %vm604, %v585, 0
      %v762 = vsel %vm604, %v586, 0
      %v765 = vsel %vm604, %v587, 0
      %v768 = vsel %vm604, %v588, 0
      %v771 = vsel %vm604, %v589, 0
      %v774 = vsel %vm604, %v590, 0
      %v777 = vsel %vm604, %v591, 0
      %v780 = vsel %vm604, %v592, 0
      %v783 = vsel %vm604, %v593, 0
      %v786 = vsel %vm604, %v594, 0
      %v789 = vsel %vm604, %v595, 0
      %v792 = vsel %vm604, %v596, 0
      %v795 = vsel %vm604, %v597, 0
      %797 = vmatpush.bf16.msra.mxu0 0
      %798 = vmatpush.bf16.msra.mxu0 0
      %799 = vmatpush.bf16.msra.mxu0 0
      %800 = vmatpush.bf16.msra.mxu0 0
      %801 = vmatpush.bf16.msra.mxu0 0
      %802 = vmatpush.bf16.msra.mxu0 0
      %803 = vmatpush.bf16.msra.mxu0 0
      %804 = vmatpush.bf16.msra.mxu0 %v602
      %805 = vmatmul.bf16.gmra.mxu0 %v606
      %v806 = vpop.f32.mrf.mxu0
      %v807 = vadd.f32 0.0, %v806
      %v808 = vpop.f32.mrf.mxu0
      %v809 = vadd.f32 0.0, %v808
      %810 = vmatmul.bf16.gmra.mxu0 %v609
      %v811 = vpop.f32.mrf.mxu0
      %v812 = vadd.f32 0.0, %v811
      %v813 = vpop.f32.mrf.mxu0
      %v814 = vadd.f32 0.0, %v813
      %815 = vmatmul.bf16.gmra.mxu0 %v612
      %v816 = vpop.f32.mrf.mxu0
      %v817 = vadd.f32 0.0, %v816
      %v818 = vpop.f32.mrf.mxu0
      %v819 = vadd.f32 0.0, %v818
      %820 = vmatmul.bf16.gmra.mxu0 %v615
      %v821 = vpop.f32.mrf.mxu0
      %v822 = vadd.f32 0.0, %v821
      %v823 = vpop.f32.mrf.mxu0
      %v824 = vadd.f32 0.0, %v823
      %825 = vmatmul.bf16.gmra.mxu0 %v618
      %v826 = vpop.f32.mrf.mxu0
      %v827 = vadd.f32 0.0, %v826
      %v828 = vpop.f32.mrf.mxu0
      %v829 = vadd.f32 0.0, %v828
      %830 = vmatmul.bf16.gmra.mxu0 %v621
      %v831 = vpop.f32.mrf.mxu0
      %v832 = vadd.f32 0.0, %v831
      %v833 = vpop.f32.mrf.mxu0
      %v834 = vadd.f32 0.0, %v833
      %835 = vmatmul.bf16.gmra.mxu0 %v624
      %v836 = vpop.f32.mrf.mxu0
      %v837 = vadd.f32 0.0, %v836
      %v838 = vpop.f32.mrf.mxu0
      %v839 = vadd.f32 0.0, %v838
      %840 = vmatmul.bf16.gmra.mxu0 %v627
      %v841 = vpop.f32.mrf.mxu0
      %v842 = vadd.f32 0.0, %v841
      %v843 = vpop.f32.mrf.mxu0
      %v844 = vadd.f32 0.0, %v843
      %845 = vmatmul.bf16.gmra.mxu0 %v630
      %v846 = vpop.f32.mrf.mxu0
      %v847 = vadd.f32 0.0, %v846
      %v848 = vpop.f32.mrf.mxu0
      %v849 = vadd.f32 0.0, %v848
      %850 = vmatmul.bf16.gmra.mxu0 %v633
      %v851 = vpop.f32.mrf.mxu0
      %v852 = vadd.f32 0.0, %v851
      %v853 = vpop.f32.mrf.mxu0
      %v854 = vadd.f32 0.0, %v853
      %855 = vmatmul.bf16.gmra.mxu0 %v636
      %v856 = vpop.f32.mrf.mxu0
      %v857 = vadd.f32 0.0, %v856
      %v858 = vpop.f32.mrf.mxu0
      %v859 = vadd.f32 0.0, %v858
      %860 = vmatmul.bf16.gmra.mxu0 %v639
      %v861 = vpop.f32.mrf.mxu0
      %v862 = vadd.f32 0.0, %v861
      %v863 = vpop.f32.mrf.mxu0
      %v864 = vadd.f32 0.0, %v863
      %865 = vmatmul.bf16.gmra.mxu0 %v642
      %v866 = vpop.f32.mrf.mxu0
      %v867 = vadd.f32 0.0, %v866
      %v868 = vpop.f32.mrf.mxu0
      %v869 = vadd.f32 0.0, %v868
      %870 = vmatmul.bf16.gmra.mxu0 %v645
      %v871 = vpop.f32.mrf.mxu0
      %v872 = vadd.f32 0.0, %v871
      %v873 = vpop.f32.mrf.mxu0
      %v874 = vadd.f32 0.0, %v873
      %875 = vmatmul.bf16.gmra.mxu0 %v648
      %v876 = vpop.f32.mrf.mxu0
      %v877 = vadd.f32 0.0, %v876
      %v878 = vpop.f32.mrf.mxu0
      %v879 = vadd.f32 0.0, %v878
      %880 = vmatmul.bf16.gmra.mxu0 %v651
      %v881 = vpop.f32.mrf.mxu0
      %v882 = vadd.f32 0.0, %v881
      %v883 = vpop.f32.mrf.mxu0
      %v884 = vadd.f32 0.0, %v883
      %885 = vmatmul.bf16.gmra.mxu0 %v654
      %v886 = vpop.f32.mrf.mxu0
      %v887 = vadd.f32 0.0, %v886
      %v888 = vpop.f32.mrf.mxu0
      %v889 = vadd.f32 0.0, %v888
      %890 = vmatmul.bf16.gmra.mxu0 %v657
      %v891 = vpop.f32.mrf.mxu0
      %v892 = vadd.f32 0.0, %v891
      %v893 = vpop.f32.mrf.mxu0
      %v894 = vadd.f32 0.0, %v893
      %895 = vmatmul.bf16.gmra.mxu0 %v660
      %v896 = vpop.f32.mrf.mxu0
      %v897 = vadd.f32 0.0, %v896
      %v898 = vpop.f32.mrf.mxu0
      %v899 = vadd.f32 0.0, %v898
      %900 = vmatmul.bf16.gmra.mxu0 %v663
      %v901 = vpop.f32.mrf.mxu0
      %v902 = vadd.f32 0.0, %v901
      %v903 = vpop.f32.mrf.mxu0
      %v904 = vadd.f32 0.0, %v903
      %905 = vmatmul.bf16.gmra.mxu0 %v666
      %v906 = vpop.f32.mrf.mxu0
      %v907 = vadd.f32 0.0, %v906
      %v908 = vpop.f32.mrf.mxu0
      %v909 = vadd.f32 0.0, %v908
      %910 = vmatmul.bf16.gmra.mxu0 %v669
      %v911 = vpop.f32.mrf.mxu0
      %v912 = vadd.f32 0.0, %v911
      %v913 = vpop.f32.mrf.mxu0
      %v914 = vadd.f32 0.0, %v913
      %915 = vmatmul.bf16.gmra.mxu0 %v672
      %v916 = vpop.f32.mrf.mxu0
      %v917 = vadd.f32 0.0, %v916
      %v918 = vpop.f32.mrf.mxu0
      %v919 = vadd.f32 0.0, %v918
      %920 = vmatmul.bf16.gmra.mxu0 %v675
      %v921 = vpop.f32.mrf.mxu0
      %v922 = vadd.f32 0.0, %v921
      %v923 = vpop.f32.mrf.mxu0
      %v924 = vadd.f32 0.0, %v923
      %925 = vmatmul.bf16.gmra.mxu0 %v678
      %v926 = vpop.f32.mrf.mxu0
      %v927 = vadd.f32 0.0, %v926
      %v928 = vpop.f32.mrf.mxu0
      %v929 = vadd.f32 0.0, %v928
      %930 = vmatmul.bf16.gmra.mxu0 %v681
      %v931 = vpop.f32.mrf.mxu0
      %v932 = vadd.f32 0.0, %v931
      %v933 = vpop.f32.mrf.mxu0
      %v934 = vadd.f32 0.0, %v933
      %935 = vmatmul.bf16.gmra.mxu0 %v684
      %v936 = vpop.f32.mrf.mxu0
      %v937 = vadd.f32 0.0, %v936
      %v938 = vpop.f32.mrf.mxu0
      %v939 = vadd.f32 0.0, %v938
      %940 = vmatmul.bf16.gmra.mxu0 %v687
      %v941 = vpop.f32.mrf.mxu0
      %v942 = vadd.f32 0.0, %v941
      %v943 = vpop.f32.mrf.mxu0
      %v944 = vadd.f32 0.0, %v943
      %945 = vmatmul.bf16.gmra.mxu0 %v690
      %v946 = vpop.f32.mrf.mxu0
      %v947 = vadd.f32 0.0, %v946
      %v948 = vpop.f32.mrf.mxu0
      %v949 = vadd.f32 0.0, %v948
      %950 = vmatmul.bf16.gmra.mxu0 %v693
      %v951 = vpop.f32.mrf.mxu0
      %v952 = vadd.f32 0.0, %v951
      %v953 = vpop.f32.mrf.mxu0
      %v954 = vadd.f32 0.0, %v953
      %955 = vmatmul.bf16.gmra.mxu0 %v696
      %v956 = vpop.f32.mrf.mxu0
      %v957 = vadd.f32 0.0, %v956
      %v958 = vpop.f32.mrf.mxu0
      %v959 = vadd.f32 0.0, %v958
      %960 = vmatmul.bf16.gmra.mxu0 %v699
      %v961 = vpop.f32.mrf.mxu0
      %v962 = vadd.f32 0.0, %v961
      %v963 = vpop.f32.mrf.mxu0
      %v964 = vadd.f32 0.0, %v963
      %965 = vmatmul.bf16.gmra.mxu0 %v702
      %v966 = vpop.f32.mrf.mxu0
      %v967 = vadd.f32 0.0, %v966
      %v968 = vpop.f32.mrf.mxu0
      %v969 = vadd.f32 0.0, %v968
      %970 = vmatmul.bf16.gmra.mxu0 %v705
      %v971 = vpop.f32.mrf.mxu0
      %v972 = vadd.f32 0.0, %v971
      %v973 = vpop.f32.mrf.mxu0
      %v974 = vadd.f32 0.0, %v973
      %975 = vmatmul.bf16.gmra.mxu0 %v708
      %v976 = vpop.f32.mrf.mxu0
      %v977 = vadd.f32 0.0, %v976
      %v978 = vpop.f32.mrf.mxu0
      %v979 = vadd.f32 0.0, %v978
      %980 = vmatmul.bf16.gmra.mxu0 %v711
      %v981 = vpop.f32.mrf.mxu0
      %v982 = vadd.f32 0.0, %v981
      %v983 = vpop.f32.mrf.mxu0
      %v984 = vadd.f32 0.0, %v983
      %985 = vmatmul.bf16.gmra.mxu0 %v714
      %v986 = vpop.f32.mrf.mxu0
      %v987 = vadd.f32 0.0, %v986
      %v988 = vpop.f32.mrf.mxu0
      %v989 = vadd.f32 0.0, %v988
      %990 = vmatmul.bf16.gmra.mxu0 %v717
      %v991 = vpop.f32.mrf.mxu0
      %v992 = vadd.f32 0.0, %v991
      %v993 = vpop.f32.mrf.mxu0
      %v994 = vadd.f32 0.0, %v993
      %995 = vmatmul.bf16.gmra.mxu0 %v720
      %v996 = vpop.f32.mrf.mxu0
      %v997 = vadd.f32 0.0, %v996
      %v998 = vpop.f32.mrf.mxu0
      %v999 = vadd.f32 0.0, %v998
      %1000 = vmatmul.bf16.gmra.mxu0 %v723
      %v1001 = vpop.f32.mrf.mxu0
      %v1002 = vadd.f32 0.0, %v1001
      %v1003 = vpop.f32.mrf.mxu0
      %v1004 = vadd.f32 0.0, %v1003
      %1005 = vmatmul.bf16.gmra.mxu0 %v726
      %v1006 = vpop.f32.mrf.mxu0
      %v1007 = vadd.f32 0.0, %v1006
      %v1008 = vpop.f32.mrf.mxu0
      %v1009 = vadd.f32 0.0, %v1008
      %1010 = vmatmul.bf16.gmra.mxu0 %v729
      %v1011 = vpop.f32.mrf.mxu0
      %v1012 = vadd.f32 0.0, %v1011
      %v1013 = vpop.f32.mrf.mxu0
      %v1014 = vadd.f32 0.0, %v1013
      %1015 = vmatmul.bf16.gmra.mxu0 %v732
      %v1016 = vpop.f32.mrf.mxu0
      %v1017 = vadd.f32 0.0, %v1016
      %v1018 = vpop.f32.mrf.mxu0
      %v1019 = vadd.f32 0.0, %v1018
      %1020 = vmatmul.bf16.gmra.mxu0 %v735
      %v1021 = vpop.f32.mrf.mxu0
      %v1022 = vadd.f32 0.0, %v1021
      %v1023 = vpop.f32.mrf.mxu0
      %v1024 = vadd.f32 0.0, %v1023
      %1025 = vmatmul.bf16.gmra.mxu0 %v738
      %v1026 = vpop.f32.mrf.mxu0
      %v1027 = vadd.f32 0.0, %v1026
      %v1028 = vpop.f32.mrf.mxu0
      %v1029 = vadd.f32 0.0, %v1028
      %1030 = vmatmul.bf16.gmra.mxu0 %v741
      %v1031 = vpop.f32.mrf.mxu0
      %v1032 = vadd.f32 0.0, %v1031
      %v1033 = vpop.f32.mrf.mxu0
      %v1034 = vadd.f32 0.0, %v1033
      %1035 = vmatmul.bf16.gmra.mxu0 %v744
      %v1036 = vpop.f32.mrf.mxu0
      %v1037 = vadd.f32 0.0, %v1036
      %v1038 = vpop.f32.mrf.mxu0
      %v1039 = vadd.f32 0.0, %v1038
      %1040 = vmatmul.bf16.gmra.mxu0 %v747
      %v1041 = vpop.f32.mrf.mxu0
      %v1042 = vadd.f32 0.0, %v1041
      %v1043 = vpop.f32.mrf.mxu0
      %v1044 = vadd.f32 0.0, %v1043
      %1045 = vmatmul.bf16.gmra.mxu0 %v750
      %v1046 = vpop.f32.mrf.mxu0
      %v1047 = vadd.f32 0.0, %v1046
      %v1048 = vpop.f32.mrf.mxu0
      %v1049 = vadd.f32 0.0, %v1048
      %1050 = vmatmul.bf16.gmra.mxu0 %v753
      %v1051 = vpop.f32.mrf.mxu0
      %v1052 = vadd.f32 0.0, %v1051
      %v1053 = vpop.f32.mrf.mxu0
      %v1054 = vadd.f32 0.0, %v1053
      %1055 = vmatmul.bf16.gmra.mxu0 %v756
      %v1056 = vpop.f32.mrf.mxu0
      %v1057 = vadd.f32 0.0, %v1056
      %v1058 = vpop.f32.mrf.mxu0
      %v1059 = vadd.f32 0.0, %v1058
      %1060 = vmatmul.bf16.gmra.mxu0 %v759
      %v1061 = vpop.f32.mrf.mxu0
      %v1062 = vadd.f32 0.0, %v1061
      %v1063 = vpop.f32.mrf.mxu0
      %v1064 = vadd.f32 0.0, %v1063
      %1065 = vmatmul.bf16.gmra.mxu0 %v762
      %v1066 = vpop.f32.mrf.mxu0
      %v1067 = vadd.f32 0.0, %v1066
      %v1068 = vpop.f32.mrf.mxu0
      %v1069 = vadd.f32 0.0, %v1068
      %1070 = vmatmul.bf16.gmra.mxu0 %v765
      %v1071 = vpop.f32.mrf.mxu0
      %v1072 = vadd.f32 0.0, %v1071
      %v1073 = vpop.f32.mrf.mxu0
      %v1074 = vadd.f32 0.0, %v1073
      %1075 = vmatmul.bf16.gmra.mxu0 %v768
      %v1076 = vpop.f32.mrf.mxu0
      %v1077 = vadd.f32 0.0, %v1076
      %v1078 = vpop.f32.mrf.mxu0
      %v1079 = vadd.f32 0.0, %v1078
      %1080 = vmatmul.bf16.gmra.mxu0 %v771
      %v1081 = vpop.f32.mrf.mxu0
      %v1082 = vadd.f32 0.0, %v1081
      %v1083 = vpop.f32.mrf.mxu0
      %v1084 = vadd.f32 0.0, %v1083
      %1085 = vmatmul.bf16.gmra.mxu0 %v774
      %v1086 = vpop.f32.mrf.mxu0
      %v1087 = vadd.f32 0.0, %v1086
      %v1088 = vpop.f32.mrf.mxu0
      %v1089 = vadd.f32 0.0, %v1088
      %1090 = vmatmul.bf16.gmra.mxu0 %v777
      %v1091 = vpop.f32.mrf.mxu0
      %v1092 = vadd.f32 0.0, %v1091
      %v1093 = vpop.f32.mrf.mxu0
      %v1094 = vadd.f32 0.0, %v1093
      %1095 = vmatmul.bf16.gmra.mxu0 %v780
      %v1096 = vpop.f32.mrf.mxu0
      %v1097 = vadd.f32 0.0, %v1096
      %v1098 = vpop.f32.mrf.mxu0
      %v1099 = vadd.f32 0.0, %v1098
      %1100 = vmatmul.bf16.gmra.mxu0 %v783
      %v1101 = vpop.f32.mrf.mxu0
      %v1102 = vadd.f32 0.0, %v1101
      %v1103 = vpop.f32.mrf.mxu0
      %v1104 = vadd.f32 0.0, %v1103
      %1105 = vmatmul.bf16.gmra.mxu0 %v786
      %v1106 = vpop.f32.mrf.mxu0
      %v1107 = vadd.f32 0.0, %v1106
      %v1108 = vpop.f32.mrf.mxu0
      %v1109 = vadd.f32 0.0, %v1108
      %1110 = vmatmul.bf16.gmra.mxu0 %v789
      %v1111 = vpop.f32.mrf.mxu0
      %v1112 = vadd.f32 0.0, %v1111
      %v1113 = vpop.f32.mrf.mxu0
      %v1114 = vadd.f32 0.0, %v1113
      %1115 = vmatmul.bf16.gmra.mxu0 %v792
      %v1116 = vpop.f32.mrf.mxu0
      %v1117 = vadd.f32 0.0, %v1116
      %v1118 = vpop.f32.mrf.mxu0
      %v1119 = vadd.f32 0.0, %v1118
      %1120 = vmatmul.bf16.gmra.mxu0 %v795
      %v1121 = vpop.f32.mrf.mxu0
      %v1122 = vadd.f32 0.0, %v1121
      %v1123 = vpop.f32.mrf.mxu0
      %v1124 = vadd.f32 0.0, %v1123
      %1125 = vdwg.mxu0
      %vm1126 = vcmp.gt.f32.partialorder %v807, 0.0
      %vm1127 = vcmp.gt.f32.partialorder %v809, 0.0
      %vm1128 = vcmp.gt.f32.partialorder %v812, 0.0
      %vm1129 = vcmp.gt.f32.partialorder %v814, 0.0
      %vm1130 = vcmp.gt.f32.partialorder %v817, 0.0
      %vm1131 = vcmp.gt.f32.partialorder %v819, 0.0
      %vm1132 = vcmp.gt.f32.partialorder %v822, 0.0
      %vm1133 = vcmp.gt.f32.partialorder %v824, 0.0
      %vm1134 = vcmp.gt.f32.partialorder %v827, 0.0
      %vm1135 = vcmp.gt.f32.partialorder %v829, 0.0
      %vm1136 = vcmp.gt.f32.partialorder %v832, 0.0
      %vm1137 = vcmp.gt.f32.partialorder %v834, 0.0
      %vm1138 = vcmp.gt.f32.partialorder %v837, 0.0
      %vm1139 = vcmp.gt.f32.partialorder %v839, 0.0
      %vm1140 = vcmp.gt.f32.partialorder %v842, 0.0
      %vm1141 = vcmp.gt.f32.partialorder %v844, 0.0
      %vm1142 = vcmp.gt.f32.partialorder %v847, 0.0
      %vm1143 = vcmp.gt.f32.partialorder %v849, 0.0
      %vm1144 = vcmp.gt.f32.partialorder %v852, 0.0
      %vm1145 = vcmp.gt.f32.partialorder %v854, 0.0
      %vm1146 = vcmp.gt.f32.partialorder %v857, 0.0
      %vm1147 = vcmp.gt.f32.partialorder %v859, 0.0
      %vm1148 = vcmp.gt.f32.partialorder %v862, 0.0
      %vm1149 = vcmp.gt.f32.partialorder %v864, 0.0
      %vm1150 = vcmp.gt.f32.partialorder %v867, 0.0
      %vm1151 = vcmp.gt.f32.partialorder %v869, 0.0
      %vm1152 = vcmp.gt.f32.partialorder %v872, 0.0
      %vm1153 = vcmp.gt.f32.partialorder %v874, 0.0
      %vm1154 = vcmp.gt.f32.partialorder %v877, 0.0
      %vm1155 = vcmp.gt.f32.partialorder %v879, 0.0
      %vm1156 = vcmp.gt.f32.partialorder %v882, 0.0
      %vm1157 = vcmp.gt.f32.partialorder %v884, 0.0
      %vm1158 = vcmp.gt.f32.partialorder %v887, 0.0
      %vm1159 = vcmp.gt.f32.partialorder %v889, 0.0
      %vm1160 = vcmp.gt.f32.partialorder %v892, 0.0
      %vm1161 = vcmp.gt.f32.partialorder %v894, 0.0
      %vm1162 = vcmp.gt.f32.partialorder %v897, 0.0
      %vm1163 = vcmp.gt.f32.partialorder %v899, 0.0
      %vm1164 = vcmp.gt.f32.partialorder %v902, 0.0
      %vm1165 = vcmp.gt.f32.partialorder %v904, 0.0
      %vm1166 = vcmp.gt.f32.partialorder %v907, 0.0
      %vm1167 = vcmp.gt.f32.partialorder %v909, 0.0
      %vm1168 = vcmp.gt.f32.partialorder %v912, 0.0
      %vm1169 = vcmp.gt.f32.partialorder %v914, 0.0
      %vm1170 = vcmp.gt.f32.partialorder %v917, 0.0
      %vm1171 = vcmp.gt.f32.partialorder %v919, 0.0
      %vm1172 = vcmp.gt.f32.partialorder %v922, 0.0
      %vm1173 = vcmp.gt.f32.partialorder %v924, 0.0
      %vm1174 = vcmp.gt.f32.partialorder %v927, 0.0
      %vm1175 = vcmp.gt.f32.partialorder %v929, 0.0
      %vm1176 = vcmp.gt.f32.partialorder %v932, 0.0
      %vm1177 = vcmp.gt.f32.partialorder %v934, 0.0
      %vm1178 = vcmp.gt.f32.partialorder %v937, 0.0
      %vm1179 = vcmp.gt.f32.partialorder %v939, 0.0
      %vm1180 = vcmp.gt.f32.partialorder %v942, 0.0
      %vm1181 = vcmp.gt.f32.partialorder %v944, 0.0
      %vm1182 = vcmp.gt.f32.partialorder %v947, 0.0
      %vm1183 = vcmp.gt.f32.partialorder %v949, 0.0
      %vm1184 = vcmp.gt.f32.partialorder %v952, 0.0
      %vm1185 = vcmp.gt.f32.partialorder %v954, 0.0
      %vm1186 = vcmp.gt.f32.partialorder %v957, 0.0
      %vm1187 = vcmp.gt.f32.partialorder %v959, 0.0
      %vm1188 = vcmp.gt.f32.partialorder %v962, 0.0
      %vm1189 = vcmp.gt.f32.partialorder %v964, 0.0
      %vm1190 = vcmp.gt.f32.partialorder %v967, 0.0
      %vm1191 = vcmp.gt.f32.partialorder %v969, 0.0
      %vm1192 = vcmp.gt.f32.partialorder %v972, 0.0
      %vm1193 = vcmp.gt.f32.partialorder %v974, 0.0
      %vm1194 = vcmp.gt.f32.partialorder %v977, 0.0
      %vm1195 = vcmp.gt.f32.partialorder %v979, 0.0
      %vm1196 = vcmp.gt.f32.partialorder %v982, 0.0
      %vm1197 = vcmp.gt.f32.partialorder %v984, 0.0
      %vm1198 = vcmp.gt.f32.partialorder %v987, 0.0
      %vm1199 = vcmp.gt.f32.partialorder %v989, 0.0
      %vm1200 = vcmp.gt.f32.partialorder %v992, 0.0
      %vm1201 = vcmp.gt.f32.partialorder %v994, 0.0
      %vm1202 = vcmp.gt.f32.partialorder %v997, 0.0
      %vm1203 = vcmp.gt.f32.partialorder %v999, 0.0
      %vm1204 = vcmp.gt.f32.partialorder %v1002, 0.0
      %vm1205 = vcmp.gt.f32.partialorder %v1004, 0.0
      %vm1206 = vcmp.gt.f32.partialorder %v1007, 0.0
      %vm1207 = vcmp.gt.f32.partialorder %v1009, 0.0
      %vm1208 = vcmp.gt.f32.partialorder %v1012, 0.0
      %vm1209 = vcmp.gt.f32.partialorder %v1014, 0.0
      %vm1210 = vcmp.gt.f32.partialorder %v1017, 0.0
      %vm1211 = vcmp.gt.f32.partialorder %v1019, 0.0
      %vm1212 = vcmp.gt.f32.partialorder %v1022, 0.0
      %vm1213 = vcmp.gt.f32.partialorder %v1024, 0.0
      %vm1214 = vcmp.gt.f32.partialorder %v1027, 0.0
      %vm1215 = vcmp.gt.f32.partialorder %v1029, 0.0
      %vm1216 = vcmp.gt.f32.partialorder %v1032, 0.0
      %vm1217 = vcmp.gt.f32.partialorder %v1034, 0.0
      %vm1218 = vcmp.gt.f32.partialorder %v1037, 0.0
      %vm1219 = vcmp.gt.f32.partialorder %v1039, 0.0
      %vm1220 = vcmp.gt.f32.partialorder %v1042, 0.0
      %vm1221 = vcmp.gt.f32.partialorder %v1044, 0.0
      %vm1222 = vcmp.gt.f32.partialorder %v1047, 0.0
      %vm1223 = vcmp.gt.f32.partialorder %v1049, 0.0
      %vm1224 = vcmp.gt.f32.partialorder %v1052, 0.0
      %vm1225 = vcmp.gt.f32.partialorder %v1054, 0.0
      %vm1226 = vcmp.gt.f32.partialorder %v1057, 0.0
      %vm1227 = vcmp.gt.f32.partialorder %v1059, 0.0
      %vm1228 = vcmp.gt.f32.partialorder %v1062, 0.0
      %vm1229 = vcmp.gt.f32.partialorder %v1064, 0.0
      %vm1230 = vcmp.gt.f32.partialorder %v1067, 0.0
      %vm1231 = vcmp.gt.f32.partialorder %v1069, 0.0
      %vm1232 = vcmp.gt.f32.partialorder %v1072, 0.0
      %vm1233 = vcmp.gt.f32.partialorder %v1074, 0.0
      %vm1234 = vcmp.gt.f32.partialorder %v1077, 0.0
      %vm1235 = vcmp.gt.f32.partialorder %v1079, 0.0
      %vm1236 = vcmp.gt.f32.partialorder %v1082, 0.0
      %vm1237 = vcmp.gt.f32.partialorder %v1084, 0.0
      %vm1238 = vcmp.gt.f32.partialorder %v1087, 0.0
      %vm1239 = vcmp.gt.f32.partialorder %v1089, 0.0
      %vm1240 = vcmp.gt.f32.partialorder %v1092, 0.0
      %vm1241 = vcmp.gt.f32.partialorder %v1094, 0.0
      %vm1242 = vcmp.gt.f32.partialorder %v1097, 0.0
      %vm1243 = vcmp.gt.f32.partialorder %v1099, 0.0
      %vm1244 = vcmp.gt.f32.partialorder %v1102, 0.0
      %vm1245 = vcmp.gt.f32.partialorder %v1104, 0.0
      %vm1246 = vcmp.gt.f32.partialorder %v1107, 0.0
      %vm1247 = vcmp.gt.f32.partialorder %v1109, 0.0
      %vm1248 = vcmp.gt.f32.partialorder %v1112, 0.0
      %vm1249 = vcmp.gt.f32.partialorder %v1114, 0.0
      %vm1250 = vcmp.gt.f32.partialorder %v1117, 0.0
      %vm1251 = vcmp.gt.f32.partialorder %v1119, 0.0
      %vm1252 = vcmp.gt.f32.partialorder %v1122, 0.0
      %vm1253 = vcmp.gt.f32.partialorder %v1124, 0.0
      %v1254 = vmul.f32 %v807, 0.2
      %v1255 = vmul.f32 %v809, 0.2
      %v1256 = vmul.f32 %v812, 0.2
      %v1257 = vmul.f32 %v814, 0.2
      %v1258 = vmul.f32 %v817, 0.2
      %v1259 = vmul.f32 %v819, 0.2
      %v1260 = vmul.f32 %v822, 0.2
      %v1261 = vmul.f32 %v824, 0.2
      %v1262 = vmul.f32 %v827, 0.2
      %v1263 = vmul.f32 %v829, 0.2
      %v1264 = vmul.f32 %v832, 0.2
      %v1265 = vmul.f32 %v834, 0.2
      %v1266 = vmul.f32 %v837, 0.2
      %v1267 = vmul.f32 %v839, 0.2
      %v1268 = vmul.f32 %v842, 0.2
      %v1269 = vmul.f32 %v844, 0.2
      %v1270 = vmul.f32 %v847, 0.2
      %v1271 = vmul.f32 %v849, 0.2
      %v1272 = vmul.f32 %v852, 0.2
      %v1273 = vmul.f32 %v854, 0.2
      %v1274 = vmul.f32 %v857, 0.2
      %v1275 = vmul.f32 %v859, 0.2
      %v1276 = vmul.f32 %v862, 0.2
      %v1277 = vmul.f32 %v864, 0.2
      %v1278 = vmul.f32 %v867, 0.2
      %v1279 = vmul.f32 %v869, 0.2
      %v1280 = vmul.f32 %v872, 0.2
      %v1281 = vmul.f32 %v874, 0.2
      %v1282 = vmul.f32 %v877, 0.2
      %v1283 = vmul.f32 %v879, 0.2
      %v1284 = vmul.f32 %v882, 0.2
      %v1285 = vmul.f32 %v884, 0.2
      %v1286 = vmul.f32 %v887, 0.2
      %v1287 = vmul.f32 %v889, 0.2
      %v1288 = vmul.f32 %v892, 0.2
      %v1289 = vmul.f32 %v894, 0.2
      %v1290 = vmul.f32 %v897, 0.2
      %v1291 = vmul.f32 %v899, 0.2
      %v1292 = vmul.f32 %v902, 0.2
      %v1293 = vmul.f32 %v904, 0.2
      %v1294 = vmul.f32 %v907, 0.2
      %v1295 = vmul.f32 %v909, 0.2
      %v1296 = vmul.f32 %v912, 0.2
      %v1297 = vmul.f32 %v914, 0.2
      %v1298 = vmul.f32 %v917, 0.2
      %v1299 = vmul.f32 %v919, 0.2
      %v1300 = vmul.f32 %v922, 0.2
      %v1301 = vmul.f32 %v924, 0.2
      %v1302 = vmul.f32 %v927, 0.2
      %v1303 = vmul.f32 %v929, 0.2
      %v1304 = vmul.f32 %v932, 0.2
      %v1305 = vmul.f32 %v934, 0.2
      %v1306 = vmul.f32 %v937, 0.2
      %v1307 = vmul.f32 %v939, 0.2
      %v1308 = vmul.f32 %v942, 0.2
      %v1309 = vmul.f32 %v944, 0.2
      %v1310 = vmul.f32 %v947, 0.2
      %v1311 = vmul.f32 %v949, 0.2
      %v1312 = vmul.f32 %v952, 0.2
      %v1313 = vmul.f32 %v954, 0.2
      %v1314 = vmul.f32 %v957, 0.2
      %v1315 = vmul.f32 %v959, 0.2
      %v1316 = vmul.f32 %v962, 0.2
      %v1317 = vmul.f32 %v964, 0.2
      %v1318 = vmul.f32 %v967, 0.2
      %v1319 = vmul.f32 %v969, 0.2
      %v1320 = vmul.f32 %v972, 0.2
      %v1321 = vmul.f32 %v974, 0.2
      %v1322 = vmul.f32 %v977, 0.2
      %v1323 = vmul.f32 %v979, 0.2
      %v1324 = vmul.f32 %v982, 0.2
      %v1325 = vmul.f32 %v984, 0.2
      %v1326 = vmul.f32 %v987, 0.2
      %v1327 = vmul.f32 %v989, 0.2
      %v1328 = vmul.f32 %v992, 0.2
      %v1329 = vmul.f32 %v994, 0.2
      %v1330 = vmul.f32 %v997, 0.2
      %v1331 = vmul.f32 %v999, 0.2
      %v1332 = vmul.f32 %v1002, 0.2
      %v1333 = vmul.f32 %v1004, 0.2
      %v1334 = vmul.f32 %v1007, 0.2
      %v1335 = vmul.f32 %v1009, 0.2
      %v1336 = vmul.f32 %v1012, 0.2
      %v1337 = vmul.f32 %v1014, 0.2
      %v1338 = vmul.f32 %v1017, 0.2
      %v1339 = vmul.f32 %v1019, 0.2
      %v1340 = vmul.f32 %v1022, 0.2
      %v1341 = vmul.f32 %v1024, 0.2
      %v1342 = vmul.f32 %v1027, 0.2
      %v1343 = vmul.f32 %v1029, 0.2
      %v1344 = vmul.f32 %v1032, 0.2
      %v1345 = vmul.f32 %v1034, 0.2
      %v1346 = vmul.f32 %v1037, 0.2
      %v1347 = vmul.f32 %v1039, 0.2
      %v1348 = vmul.f32 %v1042, 0.2
      %v1349 = vmul.f32 %v1044, 0.2
      %v1350 = vmul.f32 %v1047, 0.2
      %v1351 = vmul.f32 %v1049, 0.2
      %v1352 = vmul.f32 %v1052, 0.2
      %v1353 = vmul.f32 %v1054, 0.2
      %v1354 = vmul.f32 %v1057, 0.2
      %v1355 = vmul.f32 %v1059, 0.2
      %v1356 = vmul.f32 %v1062, 0.2
      %v1357 = vmul.f32 %v1064, 0.2
      %v1358 = vmul.f32 %v1067, 0.2
      %v1359 = vmul.f32 %v1069, 0.2
      %v1360 = vmul.f32 %v1072, 0.2
      %v1361 = vmul.f32 %v1074, 0.2
      %v1362 = vmul.f32 %v1077, 0.2
      %v1363 = vmul.f32 %v1079, 0.2
      %v1364 = vmul.f32 %v1082, 0.2
      %v1365 = vmul.f32 %v1084, 0.2
      %v1366 = vmul.f32 %v1087, 0.2
      %v1367 = vmul.f32 %v1089, 0.2
      %v1368 = vmul.f32 %v1092, 0.2
      %v1369 = vmul.f32 %v1094, 0.2
      %v1370 = vmul.f32 %v1097, 0.2
      %v1371 = vmul.f32 %v1099, 0.2
      %v1372 = vmul.f32 %v1102, 0.2
      %v1373 = vmul.f32 %v1104, 0.2
      %v1374 = vmul.f32 %v1107, 0.2
      %v1375 = vmul.f32 %v1109, 0.2
      %v1376 = vmul.f32 %v1112, 0.2
      %v1377 = vmul.f32 %v1114, 0.2
      %v1378 = vmul.f32 %v1117, 0.2
      %v1379 = vmul.f32 %v1119, 0.2
      %v1380 = vmul.f32 %v1122, 0.2
      %v1381 = vmul.f32 %v1124, 0.2
      %v1382 = vsel %vm1126, %v807, %v1254
      %v1383 = vsel %vm1127, %v809, %v1255
      %v1384 = vsel %vm1128, %v812, %v1256
      %v1385 = vsel %vm1129, %v814, %v1257
      %v1386 = vsel %vm1130, %v817, %v1258
      %v1387 = vsel %vm1131, %v819, %v1259
      %v1388 = vsel %vm1132, %v822, %v1260
      %v1389 = vsel %vm1133, %v824, %v1261
      %v1390 = vsel %vm1134, %v827, %v1262
      %v1391 = vsel %vm1135, %v829, %v1263
      %v1392 = vsel %vm1136, %v832, %v1264
      %v1393 = vsel %vm1137, %v834, %v1265
      %v1394 = vsel %vm1138, %v837, %v1266
      %v1395 = vsel %vm1139, %v839, %v1267
      %v1396 = vsel %vm1140, %v842, %v1268
      %v1397 = vsel %vm1141, %v844, %v1269
      %v1398 = vsel %vm1142, %v847, %v1270
      %v1399 = vsel %vm1143, %v849, %v1271
      %v1400 = vsel %vm1144, %v852, %v1272
      %v1401 = vsel %vm1145, %v854, %v1273
      %v1402 = vsel %vm1146, %v857, %v1274
      %v1403 = vsel %vm1147, %v859, %v1275
      %v1404 = vsel %vm1148, %v862, %v1276
      %v1405 = vsel %vm1149, %v864, %v1277
      %v1406 = vsel %vm1150, %v867, %v1278
      %v1407 = vsel %vm1151, %v869, %v1279
      %v1408 = vsel %vm1152, %v872, %v1280
      %v1409 = vsel %vm1153, %v874, %v1281
      %v1410 = vsel %vm1154, %v877, %v1282
      %v1411 = vsel %vm1155, %v879, %v1283
      %v1412 = vsel %vm1156, %v882, %v1284
      %v1413 = vsel %vm1157, %v884, %v1285
      %v1414 = vsel %vm1158, %v887, %v1286
      %v1415 = vsel %vm1159, %v889, %v1287
      %v1416 = vsel %vm1160, %v892, %v1288
      %v1417 = vsel %vm1161, %v894, %v1289
      %v1418 = vsel %vm1162, %v897, %v1290
      %v1419 = vsel %vm1163, %v899, %v1291
      %v1420 = vsel %vm1164, %v902, %v1292
      %v1421 = vsel %vm1165, %v904, %v1293
      %v1422 = vsel %vm1166, %v907, %v1294
      %v1423 = vsel %vm1167, %v909, %v1295
      %v1424 = vsel %vm1168, %v912, %v1296
      %v1425 = vsel %vm1169, %v914, %v1297
      %v1426 = vsel %vm1170, %v917, %v1298
      %v1427 = vsel %vm1171, %v919, %v1299
      %v1428 = vsel %vm1172, %v922, %v1300
      %v1429 = vsel %vm1173, %v924, %v1301
      %v1430 = vsel %vm1174, %v927, %v1302
      %v1431 = vsel %vm1175, %v929, %v1303
      %v1432 = vsel %vm1176, %v932, %v1304
      %v1433 = vsel %vm1177, %v934, %v1305
      %v1434 = vsel %vm1178, %v937, %v1306
      %v1435 = vsel %vm1179, %v939, %v1307
      %v1436 = vsel %vm1180, %v942, %v1308
      %v1437 = vsel %vm1181, %v944, %v1309
      %v1438 = vsel %vm1182, %v947, %v1310
      %v1439 = vsel %vm1183, %v949, %v1311
      %v1440 = vsel %vm1184, %v952, %v1312
      %v1441 = vsel %vm1185, %v954, %v1313
      %v1442 = vsel %vm1186, %v957, %v1314
      %v1443 = vsel %vm1187, %v959, %v1315
      %v1444 = vsel %vm1188, %v962, %v1316
      %v1445 = vsel %vm1189, %v964, %v1317
      %v1446 = vsel %vm1190, %v967, %v1318
      %v1447 = vsel %vm1191, %v969, %v1319
      %v1448 = vsel %vm1192, %v972, %v1320
      %v1449 = vsel %vm1193, %v974, %v1321
      %v1450 = vsel %vm1194, %v977, %v1322
      %v1451 = vsel %vm1195, %v979, %v1323
      %v1452 = vsel %vm1196, %v982, %v1324
      %v1453 = vsel %vm1197, %v984, %v1325
      %v1454 = vsel %vm1198, %v987, %v1326
      %v1455 = vsel %vm1199, %v989, %v1327
      %v1456 = vsel %vm1200, %v992, %v1328
      %v1457 = vsel %vm1201, %v994, %v1329
      %v1458 = vsel %vm1202, %v997, %v1330
      %v1459 = vsel %vm1203, %v999, %v1331
      %v1460 = vsel %vm1204, %v1002, %v1332
      %v1461 = vsel %vm1205, %v1004, %v1333
      %v1462 = vsel %vm1206, %v1007, %v1334
      %v1463 = vsel %vm1207, %v1009, %v1335
      %v1464 = vsel %vm1208, %v1012, %v1336
      %v1465 = vsel %vm1209, %v1014, %v1337
      %v1466 = vsel %vm1210, %v1017, %v1338
      %v1467 = vsel %vm1211, %v1019, %v1339
      %v1468 = vsel %vm1212, %v1022, %v1340
      %v1469 = vsel %vm1213, %v1024, %v1341
      %v1470 = vsel %vm1214, %v1027, %v1342
      %v1471 = vsel %vm1215, %v1029, %v1343
      %v1472 = vsel %vm1216, %v1032, %v1344
      %v1473 = vsel %vm1217, %v1034, %v1345
      %v1474 = vsel %vm1218, %v1037, %v1346
      %v1475 = vsel %vm1219, %v1039, %v1347
      %v1476 = vsel %vm1220, %v1042, %v1348
      %v1477 = vsel %vm1221, %v1044, %v1349
      %v1478 = vsel %vm1222, %v1047, %v1350
      %v1479 = vsel %vm1223, %v1049, %v1351
      %v1480 = vsel %vm1224, %v1052, %v1352
      %v1481 = vsel %vm1225, %v1054, %v1353
      %v1482 = vsel %vm1226, %v1057, %v1354
      %v1483 = vsel %vm1227, %v1059, %v1355
      %v1484 = vsel %vm1228, %v1062, %v1356
      %v1485 = vsel %vm1229, %v1064, %v1357
      %v1486 = vsel %vm1230, %v1067, %v1358
      %v1487 = vsel %vm1231, %v1069, %v1359
      %v1488 = vsel %vm1232, %v1072, %v1360
      %v1489 = vsel %vm1233, %v1074, %v1361
      %v1490 = vsel %vm1234, %v1077, %v1362
      %v1491 = vsel %vm1235, %v1079, %v1363
      %v1492 = vsel %vm1236, %v1082, %v1364
      %v1493 = vsel %vm1237, %v1084, %v1365
      %v1494 = vsel %vm1238, %v1087, %v1366
      %v1495 = vsel %vm1239, %v1089, %v1367
      %v1496 = vsel %vm1240, %v1092, %v1368
      %v1497 = vsel %vm1241, %v1094, %v1369
      %v1498 = vsel %vm1242, %v1097, %v1370
      %v1499 = vsel %vm1243, %v1099, %v1371
      %v1500 = vsel %vm1244, %v1102, %v1372
      %v1501 = vsel %vm1245, %v1104, %v1373
      %v1502 = vsel %vm1246, %v1107, %v1374
      %v1503 = vsel %vm1247, %v1109, %v1375
      %v1504 = vsel %vm1248, %v1112, %v1376
      %v1505 = vsel %vm1249, %v1114, %v1377
      %v1506 = vsel %vm1250, %v1117, %v1378
      %v1507 = vsel %vm1251, %v1119, %v1379
      %v1508 = vsel %vm1252, %v1122, %v1380
      %v1509 = vsel %vm1253, %v1124, %v1381
      %v1510 = vpack.c.bf16 %v1382, %v1382
      %v1511 = vpack.c.bf16 %v1383, %v1383
      %v1512 = vpack.c.bf16 %v1384, %v1384
      %v1513 = vpack.c.bf16 %v1385, %v1385
      %v1514 = vpack.c.bf16 %v1386, %v1386
      %v1515 = vpack.c.bf16 %v1387, %v1387
      %v1516 = vpack.c.bf16 %v1388, %v1388
      %v1517 = vpack.c.bf16 %v1389, %v1389
      %v1518 = vpack.c.bf16 %v1390, %v1390
      %v1519 = vpack.c.bf16 %v1391, %v1391
      %v1520 = vpack.c.bf16 %v1392, %v1392
      %v1521 = vpack.c.bf16 %v1393, %v1393
      %v1522 = vpack.c.bf16 %v1394, %v1394
      %v1523 = vpack.c.bf16 %v1395, %v1395
      %v1524 = vpack.c.bf16 %v1396, %v1396
      %v1525 = vpack.c.bf16 %v1397, %v1397
      %v1526 = vpack.c.bf16 %v1398, %v1398
      %v1527 = vpack.c.bf16 %v1399, %v1399
      %v1528 = vpack.c.bf16 %v1400, %v1400
      %v1529 = vpack.c.bf16 %v1401, %v1401
      %v1530 = vpack.c.bf16 %v1402, %v1402
      %v1531 = vpack.c.bf16 %v1403, %v1403
      %v1532 = vpack.c.bf16 %v1404, %v1404
      %v1533 = vpack.c.bf16 %v1405, %v1405
      %v1534 = vpack.c.bf16 %v1406, %v1406
      %v1535 = vpack.c.bf16 %v1407, %v1407
      %v1536 = vpack.c.bf16 %v1408, %v1408
      %v1537 = vpack.c.bf16 %v1409, %v1409
      %v1538 = vpack.c.bf16 %v1410, %v1410
      %v1539 = vpack.c.bf16 %v1411, %v1411
      %v1540 = vpack.c.bf16 %v1412, %v1412
      %v1541 = vpack.c.bf16 %v1413, %v1413
      %v1542 = vpack.c.bf16 %v1414, %v1414
      %v1543 = vpack.c.bf16 %v1415, %v1415
      %v1544 = vpack.c.bf16 %v1416, %v1416
      %v1545 = vpack.c.bf16 %v1417, %v1417
      %v1546 = vpack.c.bf16 %v1418, %v1418
      %v1547 = vpack.c.bf16 %v1419, %v1419
      %v1548 = vpack.c.bf16 %v1420, %v1420
      %v1549 = vpack.c.bf16 %v1421, %v1421
      %v1550 = vpack.c.bf16 %v1422, %v1422
      %v1551 = vpack.c.bf16 %v1423, %v1423
      %v1552 = vpack.c.bf16 %v1424, %v1424
      %v1553 = vpack.c.bf16 %v1425, %v1425
      %v1554 = vpack.c.bf16 %v1426, %v1426
      %v1555 = vpack.c.bf16 %v1427, %v1427
      %v1556 = vpack.c.bf16 %v1428, %v1428
      %v1557 = vpack.c.bf16 %v1429, %v1429
      %v1558 = vpack.c.bf16 %v1430, %v1430
      %v1559 = vpack.c.bf16 %v1431, %v1431
      %v1560 = vpack.c.bf16 %v1432, %v1432
      %v1561 = vpack.c.bf16 %v1433, %v1433
      %v1562 = vpack.c.bf16 %v1434, %v1434
      %v1563 = vpack.c.bf16 %v1435, %v1435
      %v1564 = vpack.c.bf16 %v1436, %v1436
      %v1565 = vpack.c.bf16 %v1437, %v1437
      %v1566 = vpack.c.bf16 %v1438, %v1438
      %v1567 = vpack.c.bf16 %v1439, %v1439
      %v1568 = vpack.c.bf16 %v1440, %v1440
      %v1569 = vpack.c.bf16 %v1441, %v1441
      %v1570 = vpack.c.bf16 %v1442, %v1442
      %v1571 = vpack.c.bf16 %v1443, %v1443
      %v1572 = vpack.c.bf16 %v1444, %v1444
      %v1573 = vpack.c.bf16 %v1445, %v1445
      %v1574 = vpack.c.bf16 %v1446, %v1446
      %v1575 = vpack.c.bf16 %v1447, %v1447
      %v1576 = vpack.c.bf16 %v1448, %v1448
      %v1577 = vpack.c.bf16 %v1449, %v1449
      %v1578 = vpack.c.bf16 %v1450, %v1450
      %v1579 = vpack.c.bf16 %v1451, %v1451
      %v1580 = vpack.c.bf16 %v1452, %v1452
      %v1581 = vpack.c.bf16 %v1453, %v1453
      %v1582 = vpack.c.bf16 %v1454, %v1454
      %v1583 = vpack.c.bf16 %v1455, %v1455
      %v1584 = vpack.c.bf16 %v1456, %v1456
      %v1585 = vpack.c.bf16 %v1457, %v1457
      %v1586 = vpack.c.bf16 %v1458, %v1458
      %v1587 = vpack.c.bf16 %v1459, %v1459
      %v1588 = vpack.c.bf16 %v1460, %v1460
      %v1589 = vpack.c.bf16 %v1461, %v1461
      %v1590 = vpack.c.bf16 %v1462, %v1462
      %v1591 = vpack.c.bf16 %v1463, %v1463
      %v1592 = vpack.c.bf16 %v1464, %v1464
      %v1593 = vpack.c.bf16 %v1465, %v1465
      %v1594 = vpack.c.bf16 %v1466, %v1466
      %v1595 = vpack.c.bf16 %v1467, %v1467
      %v1596 = vpack.c.bf16 %v1468, %v1468
      %v1597 = vpack.c.bf16 %v1469, %v1469
      %v1598 = vpack.c.bf16 %v1470, %v1470
      %v1599 = vpack.c.bf16 %v1471, %v1471
      %v1600 = vpack.c.bf16 %v1472, %v1472
      %v1601 = vpack.c.bf16 %v1473, %v1473
      %v1602 = vpack.c.bf16 %v1474, %v1474
      %v1603 = vpack.c.bf16 %v1475, %v1475
      %v1604 = vpack.c.bf16 %v1476, %v1476
      %v1605 = vpack.c.bf16 %v1477, %v1477
      %v1606 = vpack.c.bf16 %v1478, %v1478
      %v1607 = vpack.c.bf16 %v1479, %v1479
      %v1608 = vpack.c.bf16 %v1480, %v1480
      %v1609 = vpack.c.bf16 %v1481, %v1481
      %v1610 = vpack.c.bf16 %v1482, %v1482
      %v1611 = vpack.c.bf16 %v1483, %v1483
      %v1612 = vpack.c.bf16 %v1484, %v1484
      %v1613 = vpack.c.bf16 %v1485, %v1485
      %v1614 = vpack.c.bf16 %v1486, %v1486
      %v1615 = vpack.c.bf16 %v1487, %v1487
      %v1616 = vpack.c.bf16 %v1488, %v1488
      %v1617 = vpack.c.bf16 %v1489, %v1489
      %v1618 = vpack.c.bf16 %v1490, %v1490
      %v1619 = vpack.c.bf16 %v1491, %v1491
      %v1620 = vpack.c.bf16 %v1492, %v1492
      %v1621 = vpack.c.bf16 %v1493, %v1493
      %v1622 = vpack.c.bf16 %v1494, %v1494
      %v1623 = vpack.c.bf16 %v1495, %v1495
      %v1624 = vpack.c.bf16 %v1496, %v1496
      %v1625 = vpack.c.bf16 %v1497, %v1497
      %v1626 = vpack.c.bf16 %v1498, %v1498
      %v1627 = vpack.c.bf16 %v1499, %v1499
      %v1628 = vpack.c.bf16 %v1500, %v1500
      %v1629 = vpack.c.bf16 %v1501, %v1501
      %v1630 = vpack.c.bf16 %v1502, %v1502
      %v1631 = vpack.c.bf16 %v1503, %v1503
      %v1632 = vpack.c.bf16 %v1504, %v1504
      %v1633 = vpack.c.bf16 %v1505, %v1505
      %v1634 = vpack.c.bf16 %v1506, %v1506
      %v1635 = vpack.c.bf16 %v1507, %v1507
      %v1636 = vpack.c.bf16 %v1508, %v1508
      %v1637 = vpack.c.bf16 %v1509, %v1509
      %vm1638 = vcmask 125952
      %1639 = vst.msk [vmem:[%s145] sm:$0xf] %vm1638, %v1510
      %1640 = vst.msk [vmem:[%s145 + $0x4] sm:$0xf] %vm1638, %v1511
      %1641 = vst.msk [vmem:[%s145 + $0x8] sm:$0xf] %vm1638, %v1512
      %1642 = vst.msk [vmem:[%s145 + $0xc] sm:$0xf] %vm1638, %v1513
      %1643 = vst.msk [vmem:[%s145 + $0x10] sm:$0xf] %vm1638, %v1514
      %1644 = vst.msk [vmem:[%s145 + $0x14] sm:$0xf] %vm1638, %v1515
      %1645 = vst.msk [vmem:[%s145 + $0x18] sm:$0xf] %vm1638, %v1516
      %1646 = vst.msk [vmem:[%s145 + $0x1c] sm:$0xf] %vm1638, %v1517
      %1647 = vst.msk [vmem:[%s145 + $0x20] sm:$0xf] %vm1638, %v1518
      %1648 = vst.msk [vmem:[%s145 + $0x24] sm:$0xf] %vm1638, %v1519
      %1649 = vst.msk [vmem:[%s145 + $0x28] sm:$0xf] %vm1638, %v1520
      %1650 = vst.msk [vmem:[%s145 + $0x2c] sm:$0xf] %vm1638, %v1521
      %1651 = vst.msk [vmem:[%s145 + $0x30] sm:$0xf] %vm1638, %v1522
      %1652 = vst.msk [vmem:[%s145 + $0x34] sm:$0xf] %vm1638, %v1523
      %1653 = vst.msk [vmem:[%s145 + $0x38] sm:$0xf] %vm1638, %v1524
      %1654 = vst.msk [vmem:[%s145 + $0x3c] sm:$0xf] %vm1638, %v1525
      %1655 = vst.msk [vmem:[%s145 + $0x40] sm:$0xf] %vm1638, %v1526
      %1656 = vst.msk [vmem:[%s145 + $0x44] sm:$0xf] %vm1638, %v1527
      %1657 = vst.msk [vmem:[%s145 + $0x48] sm:$0xf] %vm1638, %v1528
      %1658 = vst.msk [vmem:[%s145 + $0x4c] sm:$0xf] %vm1638, %v1529
      %1659 = vst.msk [vmem:[%s145 + $0x50] sm:$0xf] %vm1638, %v1530
      %1660 = vst.msk [vmem:[%s145 + $0x54] sm:$0xf] %vm1638, %v1531
      %1661 = vst.msk [vmem:[%s145 + $0x58] sm:$0xf] %vm1638, %v1532
      %1662 = vst.msk [vmem:[%s145 + $0x5c] sm:$0xf] %vm1638, %v1533
      %1663 = vst.msk [vmem:[%s145 + $0x60] sm:$0xf] %vm1638, %v1534
      %1664 = vst.msk [vmem:[%s145 + $0x64] sm:$0xf] %vm1638, %v1535
      %1665 = vst.msk [vmem:[%s145 + $0x68] sm:$0xf] %vm1638, %v1536
      %1666 = vst.msk [vmem:[%s145 + $0x6c] sm:$0xf] %vm1638, %v1537
      %1667 = vst.msk [vmem:[%s145 + $0x70] sm:$0xf] %vm1638, %v1538
      %1668 = vst.msk [vmem:[%s145 + $0x74] sm:$0xf] %vm1638, %v1539
      %1669 = vst.msk [vmem:[%s145 + $0x78] sm:$0xf] %vm1638, %v1540
      %1670 = vst.msk [vmem:[%s145 + $0x7c] sm:$0xf] %vm1638, %v1541
      %1671 = vst.msk [vmem:[%s145 + $0x80] sm:$0xf] %vm1638, %v1542
      %1672 = vst.msk [vmem:[%s145 + $0x84] sm:$0xf] %vm1638, %v1543
      %1673 = vst.msk [vmem:[%s145 + $0x88] sm:$0xf] %vm1638, %v1544
      %1674 = vst.msk [vmem:[%s145 + $0x8c] sm:$0xf] %vm1638, %v1545
      %1675 = vst.msk [vmem:[%s145 + $0x90] sm:$0xf] %vm1638, %v1546
      %1676 = vst.msk [vmem:[%s145 + $0x94] sm:$0xf] %vm1638, %v1547
      %1677 = vst.msk [vmem:[%s145 + $0x98] sm:$0xf] %vm1638, %v1548
      %1678 = vst.msk [vmem:[%s145 + $0x9c] sm:$0xf] %vm1638, %v1549
      %1679 = vst.msk [vmem:[%s145 + $0xa0] sm:$0xf] %vm1638, %v1550
      %1680 = vst.msk [vmem:[%s145 + $0xa4] sm:$0xf] %vm1638, %v1551
      %1681 = vst.msk [vmem:[%s145 + $0xa8] sm:$0xf] %vm1638, %v1552
      %1682 = vst.msk [vmem:[%s145 + $0xac] sm:$0xf] %vm1638, %v1553
      %1683 = vst.msk [vmem:[%s145 + $0xb0] sm:$0xf] %vm1638, %v1554
      %1684 = vst.msk [vmem:[%s145 + $0xb4] sm:$0xf] %vm1638, %v1555
      %1685 = vst.msk [vmem:[%s145 + $0xb8] sm:$0xf] %vm1638, %v1556
      %1686 = vst.msk [vmem:[%s145 + $0xbc] sm:$0xf] %vm1638, %v1557
      %1687 = vst.msk [vmem:[%s145 + $0xc0] sm:$0xf] %vm1638, %v1558
      %1688 = vst.msk [vmem:[%s145 + $0xc4] sm:$0xf] %vm1638, %v1559
      %1689 = vst.msk [vmem:[%s145 + $0xc8] sm:$0xf] %vm1638, %v1560
      %1690 = vst.msk [vmem:[%s145 + $0xcc] sm:$0xf] %vm1638, %v1561
      %1691 = vst.msk [vmem:[%s145 + $0xd0] sm:$0xf] %vm1638, %v1562
      %1692 = vst.msk [vmem:[%s145 + $0xd4] sm:$0xf] %vm1638, %v1563
      %1693 = vst.msk [vmem:[%s145 + $0xd8] sm:$0xf] %vm1638, %v1564
      %1694 = vst.msk [vmem:[%s145 + $0xdc] sm:$0xf] %vm1638, %v1565
      %1695 = vst.msk [vmem:[%s145 + $0xe0] sm:$0xf] %vm1638, %v1566
      %1696 = vst.msk [vmem:[%s145 + $0xe4] sm:$0xf] %vm1638, %v1567
      %1697 = vst.msk [vmem:[%s145 + $0xe8] sm:$0xf] %vm1638, %v1568
      %1698 = vst.msk [vmem:[%s145 + $0xec] sm:$0xf] %vm1638, %v1569
      %1699 = vst.msk [vmem:[%s145 + $0xf0] sm:$0xf] %vm1638, %v1570
      %1700 = vst.msk [vmem:[%s145 + $0xf4] sm:$0xf] %vm1638, %v1571
      %1701 = vst.msk [vmem:[%s145 + $0xf8] sm:$0xf] %vm1638, %v1572
      %1702 = vst.msk [vmem:[%s145 + $0xfc] sm:$0xf] %vm1638, %v1573
      %1703 = vst.msk [vmem:[%s145 + $0x100] sm:$0xf] %vm1638, %v1574
      %1704 = vst.msk [vmem:[%s145 + $0x104] sm:$0xf] %vm1638, %v1575
      %1705 = vst.msk [vmem:[%s145 + $0x108] sm:$0xf] %vm1638, %v1576
      %1706 = vst.msk [vmem:[%s145 + $0x10c] sm:$0xf] %vm1638, %v1577
      %1707 = vst.msk [vmem:[%s145 + $0x110] sm:$0xf] %vm1638, %v1578
      %1708 = vst.msk [vmem:[%s145 + $0x114] sm:$0xf] %vm1638, %v1579
      %1709 = vst.msk [vmem:[%s145 + $0x118] sm:$0xf] %vm1638, %v1580
      %1710 = vst.msk [vmem:[%s145 + $0x11c] sm:$0xf] %vm1638, %v1581
      %1711 = vst.msk [vmem:[%s145 + $0x120] sm:$0xf] %vm1638, %v1582
      %1712 = vst.msk [vmem:[%s145 + $0x124] sm:$0xf] %vm1638, %v1583
      %1713 = vst.msk [vmem:[%s145 + $0x128] sm:$0xf] %vm1638, %v1584
      %1714 = vst.msk [vmem:[%s145 + $0x12c] sm:$0xf] %vm1638, %v1585
      %1715 = vst.msk [vmem:[%s145 + $0x130] sm:$0xf] %vm1638, %v1586
      %1716 = vst.msk [vmem:[%s145 + $0x134] sm:$0xf] %vm1638, %v1587
      %1717 = vst.msk [vmem:[%s145 + $0x138] sm:$0xf] %vm1638, %v1588
      %1718 = vst.msk [vmem:[%s145 + $0x13c] sm:$0xf] %vm1638, %v1589
      %1719 = vst.msk [vmem:[%s145 + $0x140] sm:$0xf] %vm1638, %v1590
      %1720 = vst.msk [vmem:[%s145 + $0x144] sm:$0xf] %vm1638, %v1591
      %1721 = vst.msk [vmem:[%s145 + $0x148] sm:$0xf] %vm1638, %v1592
      %1722 = vst.msk [vmem:[%s145 + $0x14c] sm:$0xf] %vm1638, %v1593
      %1723 = vst.msk [vmem:[%s145 + $0x150] sm:$0xf] %vm1638, %v1594
      %1724 = vst.msk [vmem:[%s145 + $0x154] sm:$0xf] %vm1638, %v1595
      %1725 = vst.msk [vmem:[%s145 + $0x158] sm:$0xf] %vm1638, %v1596
      %1726 = vst.msk [vmem:[%s145 + $0x15c] sm:$0xf] %vm1638, %v1597
      %1727 = vst.msk [vmem:[%s145 + $0x160] sm:$0xf] %vm1638, %v1598
      %1728 = vst.msk [vmem:[%s145 + $0x164] sm:$0xf] %vm1638, %v1599
      %1729 = vst.msk [vmem:[%s145 + $0x168] sm:$0xf] %vm1638, %v1600
      %1730 = vst.msk [vmem:[%s145 + $0x16c] sm:$0xf] %vm1638, %v1601
      %1731 = vst.msk [vmem:[%s145 + $0x170] sm:$0xf] %vm1638, %v1602
      %1732 = vst.msk [vmem:[%s145 + $0x174] sm:$0xf] %vm1638, %v1603
      %1733 = vst.msk [vmem:[%s145 + $0x178] sm:$0xf] %vm1638, %v1604
      %1734 = vst.msk [vmem:[%s145 + $0x17c] sm:$0xf] %vm1638, %v1605
      %1735 = vst.msk [vmem:[%s145 + $0x180] sm:$0xf] %vm1638, %v1606
      %1736 = vst.msk [vmem:[%s145 + $0x184] sm:$0xf] %vm1638, %v1607
      %1737 = vst.msk [vmem:[%s145 + $0x188] sm:$0xf] %vm1638, %v1608
      %1738 = vst.msk [vmem:[%s145 + $0x18c] sm:$0xf] %vm1638, %v1609
      %1739 = vst.msk [vmem:[%s145 + $0x190] sm:$0xf] %vm1638, %v1610
      %1740 = vst.msk [vmem:[%s145 + $0x194] sm:$0xf] %vm1638, %v1611
      %1741 = vst.msk [vmem:[%s145 + $0x198] sm:$0xf] %vm1638, %v1612
      %1742 = vst.msk [vmem:[%s145 + $0x19c] sm:$0xf] %vm1638, %v1613
      %1743 = vst.msk [vmem:[%s145 + $0x1a0] sm:$0xf] %vm1638, %v1614
      %1744 = vst.msk [vmem:[%s145 + $0x1a4] sm:$0xf] %vm1638, %v1615
      %1745 = vst.msk [vmem:[%s145 + $0x1a8] sm:$0xf] %vm1638, %v1616
      %1746 = vst.msk [vmem:[%s145 + $0x1ac] sm:$0xf] %vm1638, %v1617
      %1747 = vst.msk [vmem:[%s145 + $0x1b0] sm:$0xf] %vm1638, %v1618
      %1748 = vst.msk [vmem:[%s145 + $0x1b4] sm:$0xf] %vm1638, %v1619
      %1749 = vst.msk [vmem:[%s145 + $0x1b8] sm:$0xf] %vm1638, %v1620
      %1750 = vst.msk [vmem:[%s145 + $0x1bc] sm:$0xf] %vm1638, %v1621
      %1751 = vst.msk [vmem:[%s145 + $0x1c0] sm:$0xf] %vm1638, %v1622
      %1752 = vst.msk [vmem:[%s145 + $0x1c4] sm:$0xf] %vm1638, %v1623
      %1753 = vst.msk [vmem:[%s145 + $0x1c8] sm:$0xf] %vm1638, %v1624
      %1754 = vst.msk [vmem:[%s145 + $0x1cc] sm:$0xf] %vm1638, %v1625
      %1755 = vst.msk [vmem:[%s145 + $0x1d0] sm:$0xf] %vm1638, %v1626
      %1756 = vst.msk [vmem:[%s145 + $0x1d4] sm:$0xf] %vm1638, %v1627
      %1757 = vst.msk [vmem:[%s145 + $0x1d8] sm:$0xf] %vm1638, %v1628
      %1758 = vst.msk [vmem:[%s145 + $0x1dc] sm:$0xf] %vm1638, %v1629
      %1759 = vst.msk [vmem:[%s145 + $0x1e0] sm:$0xf] %vm1638, %v1630
      %1760 = vst.msk [vmem:[%s145 + $0x1e4] sm:$0xf] %vm1638, %v1631
      %1761 = vst.msk [vmem:[%s145 + $0x1e8] sm:$0xf] %vm1638, %v1632
      %1762 = vst.msk [vmem:[%s145 + $0x1ec] sm:$0xf] %vm1638, %v1633
      %1763 = vst.msk [vmem:[%s145 + $0x1f0] sm:$0xf] %vm1638, %v1634
      %1764 = vst.msk [vmem:[%s145 + $0x1f4] sm:$0xf] %vm1638, %v1635
      %1765 = vst.msk [vmem:[%s145 + $0x1f8] sm:$0xf] %vm1638, %v1636
      %1766 = vst.msk [vmem:[%s145 + $0x1fc] sm:$0xf] %vm1638, %v1637
      %s1767 = smul.u32 128, %s13
      %p1768 = scmp.lt.s32.totalorder %s1767, 255
      %s1769 = scalar_select %p1768, %s1767, 255
      %s1770 = smul.addr %s1769, 4
      %s1771 = scalar_lea.vmem %s2, %s1770
      // Predicated region
      $region29: #{conv_discriminator_forward.4} parent=27 // pred_check
        %p1772 = pneg %p78
      $region30: #{conv_discriminator_forward.4} parent=27 // pred_check_branch
        %1774 = sbr.rel (%p1772) target = $region32
      $region31: #{conv_discriminator_forward.4} parent=27 // pred_region
        %s1775 = smul.u32 128, %s13
      $region32: #{conv_discriminator_forward.4} parent=27 // pred_fallthru
        _
    $region28: #{conv_discriminator_forward.4} parent=5 // pred_fallthru
      _
    %p1776 = scmp.le.s32.totalorder 2, %s8
    // Predicated region
    $region33: #{conv_discriminator_forward.4} parent=5 // pred_check
      %p1777 = pneg %p1776
    $region34: #{conv_discriminator_forward.4} parent=5 // pred_check_branch
      %1779 = sbr.rel (%p1777) target = $region36
    $region35: #{conv_discriminator_forward.4} parent=5 // pred_region
      %s1780 = ssub.s32 %s8, 2
      // Predicated region
      $region37: #{conv_discriminator_forward.4} parent=35 // pred_check
        %p1781 = pneg %p84
      $region38: #{conv_discriminator_forward.4} parent=35 // pred_check_branch
        %1783 = sbr.rel (%p1781) target = $region40
      $region39: #{conv_discriminator_forward.4} parent=35 // pred_region
        %s1784 = smul.u32 128, %s14
        %p1785 = scmp.lt.s32.totalorder %s1784, 255
        %s1786 = scalar_select %p1785, %s1784, 255
        %s1787 = smul.addr %s1786, 4
        %s1788 = scalar_lea.vmem %s2, %s1787
      $region40: #{conv_discriminator_forward.4} parent=35 // pred_fallthru
        _
    $region36: #{conv_discriminator_forward.4} parent=5 // pred_fallthru
      _
  $region6: #{conv_discriminator_forward.4} parent=0 // loop_footer
    %s12 = sadd.s32 1, %s8
  $region7: #{conv_discriminator_forward.4} parent=0 // loop_footer_branch
    %7 = sbr.rel target = $region3
  $region8: #{conv_discriminator_forward.4} parent=0 // loop_exit
    _

// kernel: conv_discriminator_forward.5
$region0: #{conv_discriminator_forward.5}
  #allocation0 [shape = 'u32[]', space=smem, size = 0x4, offset = 0x4, fixed_abs, tag = 'smem constant byte address 0x4 - core index']
  #allocation1 [shape = 'u32[72,128]{1,0:T(1,128)}', space=vmem, size = 0x9000, scoped, tag = 'internal scratch']
  %s0 = inlined_call_operand.vmem [shape: bf16[512,256], index: 0, kind: input, shape index: {}]
  %s1 = inlined_call_operand.vmem [shape: bf16[256,32], index: 1, kind: input, shape index: {}]
  %s2 = inlined_call_operand.vmem [shape: f32[1,32], index: 2, kind: input, shape index: {}]
  %s3 = inlined_call_operand.vmem [shape: f32[1,32], index: 3, kind: input, shape index: {}]
  %s4 = inlined_call_operand.vmem [shape: bf16[512,32], index: 4, kind: output, shape index: {}]
  %s5 = sld [smem:[#allocation0]]
  $region26: #{conv_discriminator_forward.5} parent=0
    _
  %s7 = ssub.s32 1, %s5
  %s8 = scalar_select 0, %s7, %s5
  // Predicated region
  $region2: #{conv_discriminator_forward.5} parent=0 // pred_check
    _
  $region3: #{conv_discriminator_forward.5} parent=0 // pred_check_branch
    %10 = sbr.rel (0) target = $region5
  $region4: #{conv_discriminator_forward.5} parent=0 // pred_region
    _
  $region5: #{conv_discriminator_forward.5} parent=0 // pred_fallthru
    _
  // Predicated region
  $region6: #{conv_discriminator_forward.5} parent=0 // pred_check
    _
  $region7: #{conv_discriminator_forward.5} parent=0 // pred_check_branch
    %12 = sbr.rel (0) target = $region9
  $region8: #{conv_discriminator_forward.5} parent=0 // pred_region
    _
  $region9: #{conv_discriminator_forward.5} parent=0 // pred_fallthru
    _
  // Predicated region
  $region10: #{conv_discriminator_forward.5} parent=0 // pred_check
    _
  $region11: #{conv_discriminator_forward.5} parent=0 // pred_check_branch
    %14 = sbr.rel (0) target = $region13
  $region12: #{conv_discriminator_forward.5} parent=0 // pred_region
    _
  $region13: #{conv_discriminator_forward.5} parent=0 // pred_fallthru
    _
  // Predicated region
  $region14: #{conv_discriminator_forward.5} parent=0 // pred_check
    _
  $region15: #{conv_discriminator_forward.5} parent=0 // pred_check_branch
    %16 = sbr.rel (0) target = $region17
  $region16: #{conv_discriminator_forward.5} parent=0 // pred_region
    _
  $region17: #{conv_discriminator_forward.5} parent=0 // pred_fallthru
    _
  %v17 = vld [vmem:[%s0] sm:$0xff]
  %v18 = vld [vmem:[%s0 + $0x8] sm:$0xff]
  %v19 = vld [vmem:[%s0 + $0x10] sm:$0xff]
  %v20 = vld [vmem:[%s0 + $0x18] sm:$0xff]
  %v21 = vld [vmem:[%s0 + $0x20] sm:$0xff]
  %v22 = vld [vmem:[%s0 + $0x28] sm:$0xff]
  %v23 = vld [vmem:[%s0 + $0x30] sm:$0xff]
  %v24 = vld [vmem:[%s0 + $0x38] sm:$0xff]
  %v25 = vld [vmem:[%s0 + $0x40] sm:$0xff]
  %v26 = vld [vmem:[%s0 + $0x48] sm:$0xff]
  %v27 = vld [vmem:[%s0 + $0x50] sm:$0xff]
  %v28 = vld [vmem:[%s0 + $0x58] sm:$0xff]
  %v29 = vld [vmem:[%s0 + $0x60] sm:$0xff]
  %v30 = vld [vmem:[%s0 + $0x68] sm:$0xff]
  %v31 = vld [vmem:[%s0 + $0x70] sm:$0xff]
  %v32 = vld [vmem:[%s0 + $0x78] sm:$0xff]
  %v33 = vld [vmem:[%s0 + $0x80] sm:$0xff]
  %v34 = vld [vmem:[%s0 + $0x88] sm:$0xff]
  %v35 = vld [vmem:[%s0 + $0x90] sm:$0xff]
  %v36 = vld [vmem:[%s0 + $0x98] sm:$0xff]
  %v37 = vld [vmem:[%s0 + $0xa0] sm:$0xff]
  %v38 = vld [vmem:[%s0 + $0xa8] sm:$0xff]
  %v39 = vld [vmem:[%s0 + $0xb0] sm:$0xff]
  %v40 = vld [vmem:[%s0 + $0xb8] sm:$0xff]
  %v41 = vld [vmem:[%s0 + $0xc0] sm:$0xff]
  %v42 = vld [vmem:[%s0 + $0xc8] sm:$0xff]
  %v43 = vld [vmem:[%s0 + $0xd0] sm:$0xff]
  %v44 = vld [vmem:[%s0 + $0xd8] sm:$0xff]
  %v45 = vld [vmem:[%s0 + $0xe0] sm:$0xff]
  %v46 = vld [vmem:[%s0 + $0xe8] sm:$0xff]
  %v47 = vld [vmem:[%s0 + $0xf0] sm:$0xff]
  %v48 = vld [vmem:[%s0 + $0xf8] sm:$0xff]
  %v49 = vld [vmem:[%s0 + $0x100] sm:$0xff]
  %v50 = vld [vmem:[%s0 + $0x108] sm:$0xff]
  %v51 = vld [vmem:[%s0 + $0x110] sm:$0xff]
  %v52 = vld [vmem:[%s0 + $0x118] sm:$0xff]
  %v53 = vld [vmem:[%s0 + $0x120] sm:$0xff]
  %v54 = vld [vmem:[%s0 + $0x128] sm:$0xff]
  %v55 = vld [vmem:[%s0 + $0x130] sm:$0xff]
  %v56 = vld [vmem:[%s0 + $0x138] sm:$0xff]
  %v57 = vld [vmem:[%s0 + $0x140] sm:$0xff]
  %v58 = vld [vmem:[%s0 + $0x148] sm:$0xff]
  %v59 = vld [vmem:[%s0 + $0x150] sm:$0xff]
  %v60 = vld [vmem:[%s0 + $0x158] sm:$0xff]
  %v61 = vld [vmem:[%s0 + $0x160] sm:$0xff]
  %v62 = vld [vmem:[%s0 + $0x168] sm:$0xff]
  %v63 = vld [vmem:[%s0 + $0x170] sm:$0xff]
  %v64 = vld [vmem:[%s0 + $0x178] sm:$0xff]
  %v65 = vld [vmem:[%s0 + $0x180] sm:$0xff]
  %v66 = vld [vmem:[%s0 + $0x188] sm:$0xff]
  %v67 = vld [vmem:[%s0 + $0x190] sm:$0xff]
  %v68 = vld [vmem:[%s0 + $0x198] sm:$0xff]
  %v69 = vld [vmem:[%s0 + $0x1a0] sm:$0xff]
  %v70 = vld [vmem:[%s0 + $0x1a8] sm:$0xff]
  %v71 = vld [vmem:[%s0 + $0x1b0] sm:$0xff]
  %v72 = vld [vmem:[%s0 + $0x1b8] sm:$0xff]
  %v73 = vld [vmem:[%s0 + $0x1c0] sm:$0xff]
  %v74 = vld [vmem:[%s0 + $0x1c8] sm:$0xff]
  %v75 = vld [vmem:[%s0 + $0x1d0] sm:$0xff]
  %v76 = vld [vmem:[%s0 + $0x1d8] sm:$0xff]
  %v77 = vld [vmem:[%s0 + $0x1e0] sm:$0xff]
  %v78 = vld [vmem:[%s0 + $0x1e8] sm:$0xff]
  %v79 = vld [vmem:[%s0 + $0x1f0] sm:$0xff]
  %v80 = vld [vmem:[%s0 + $0x1f8] sm:$0xff]
  %v81 = vld [vmem:[%s1] sm:$0xf]
  %v82 = vld [vmem:[%s1 + $0x4] sm:$0xf]
  %v83 = vld [vmem:[%s1 + $0x8] sm:$0xf]
  %v84 = vld [vmem:[%s1 + $0xc] sm:$0xf]
  %v85 = vld [vmem:[%s1 + $0x10] sm:$0xf]
  %v86 = vld [vmem:[%s1 + $0x14] sm:$0xf]
  %v87 = vld [vmem:[%s1 + $0x18] sm:$0xf]
  %v88 = vld [vmem:[%s1 + $0x1c] sm:$0xf]
  %v89 = vld [vmem:[%s1 + $0x20] sm:$0xf]
  %v90 = vld [vmem:[%s1 + $0x24] sm:$0xf]
  %v91 = vld [vmem:[%s1 + $0x28] sm:$0xf]
  %v92 = vld [vmem:[%s1 + $0x2c] sm:$0xf]
  %v93 = vld [vmem:[%s1 + $0x30] sm:$0xf]
  %v94 = vld [vmem:[%s1 + $0x34] sm:$0xf]
  %v95 = vld [vmem:[%s1 + $0x38] sm:$0xf]
  %v96 = vld [vmem:[%s1 + $0x3c] sm:$0xf]
  %v97 = vld [vmem:[%s1 + $0x40] sm:$0xf]
  %v98 = vld [vmem:[%s1 + $0x44] sm:$0xf]
  %v99 = vld [vmem:[%s1 + $0x48] sm:$0xf]
  %v100 = vld [vmem:[%s1 + $0x4c] sm:$0xf]
  %v101 = vld [vmem:[%s1 + $0x50] sm:$0xf]
  %v102 = vld [vmem:[%s1 + $0x54] sm:$0xf]
  %v103 = vld [vmem:[%s1 + $0x58] sm:$0xf]
  %v104 = vld [vmem:[%s1 + $0x5c] sm:$0xf]
  %v105 = vld [vmem:[%s1 + $0x60] sm:$0xf]
  %v106 = vld [vmem:[%s1 + $0x64] sm:$0xf]
  %v107 = vld [vmem:[%s1 + $0x68] sm:$0xf]
  %v108 = vld [vmem:[%s1 + $0x6c] sm:$0xf]
  %v109 = vld [vmem:[%s1 + $0x70] sm:$0xf]
  %v110 = vld [vmem:[%s1 + $0x74] sm:$0xf]
  %v111 = vld [vmem:[%s1 + $0x78] sm:$0xf]
  %v112 = vld [vmem:[%s1 + $0x7c] sm:$0xf]
  %v177 = vunpack.c.l.b16 %v17
  %v178 = vunpack.c.h.b16 %v17
  %v179 = vunpack.c.l.b16 %v18
  %v180 = vunpack.c.h.b16 %v18
  %v181 = vunpack.c.l.b16 %v19
  %v182 = vunpack.c.h.b16 %v19
  %v183 = vunpack.c.l.b16 %v20
  %v184 = vunpack.c.h.b16 %v20
  %v185 = vunpack.c.l.b16 %v21
  %v186 = vunpack.c.h.b16 %v21
  %v187 = vunpack.c.l.b16 %v22
  %v188 = vunpack.c.h.b16 %v22
  %v189 = vunpack.c.l.b16 %v23
  %v190 = vunpack.c.h.b16 %v23
  %v191 = vunpack.c.l.b16 %v24
  %v192 = vunpack.c.h.b16 %v24
  %v193 = vunpack.c.l.b16 %v25
  %v194 = vunpack.c.h.b16 %v25
  %v195 = vunpack.c.l.b16 %v26
  %v196 = vunpack.c.h.b16 %v26
  %v197 = vunpack.c.l.b16 %v27
  %v198 = vunpack.c.h.b16 %v27
  %v199 = vunpack.c.l.b16 %v28
  %v200 = vunpack.c.h.b16 %v28
  %v201 = vunpack.c.l.b16 %v29
  %v202 = vunpack.c.h.b16 %v29
  %v203 = vunpack.c.l.b16 %v30
  %v204 = vunpack.c.h.b16 %v30
  %v205 = vunpack.c.l.b16 %v31
  %v206 = vunpack.c.h.b16 %v31
  %v207 = vunpack.c.l.b16 %v32
  %v208 = vunpack.c.h.b16 %v32
  %v209 = vunpack.c.l.b16 %v33
  %v210 = vunpack.c.h.b16 %v33
  %v211 = vunpack.c.l.b16 %v34
  %v212 = vunpack.c.h.b16 %v34
  %v213 = vunpack.c.l.b16 %v35
  %v214 = vunpack.c.h.b16 %v35
  %v215 = vunpack.c.l.b16 %v36
  %v216 = vunpack.c.h.b16 %v36
  %v217 = vunpack.c.l.b16 %v37
  %v218 = vunpack.c.h.b16 %v37
  %v219 = vunpack.c.l.b16 %v38
  %v220 = vunpack.c.h.b16 %v38
  %v221 = vunpack.c.l.b16 %v39
  %v222 = vunpack.c.h.b16 %v39
  %v223 = vunpack.c.l.b16 %v40
  %v224 = vunpack.c.h.b16 %v40
  %v225 = vunpack.c.l.b16 %v41
  %v226 = vunpack.c.h.b16 %v41
  %v227 = vunpack.c.l.b16 %v42
  %v228 = vunpack.c.h.b16 %v42
  %v229 = vunpack.c.l.b16 %v43
  %v230 = vunpack.c.h.b16 %v43
  %v231 = vunpack.c.l.b16 %v44
  %v232 = vunpack.c.h.b16 %v44
  %v233 = vunpack.c.l.b16 %v45
  %v234 = vunpack.c.h.b16 %v45
  %v235 = vunpack.c.l.b16 %v46
  %v236 = vunpack.c.h.b16 %v46
  %v237 = vunpack.c.l.b16 %v47
  %v238 = vunpack.c.h.b16 %v47
  %v239 = vunpack.c.l.b16 %v48
  %v240 = vunpack.c.h.b16 %v48
  %v241 = vunpack.c.l.b16 %v49
  %v242 = vunpack.c.h.b16 %v49
  %v243 = vunpack.c.l.b16 %v50
  %v244 = vunpack.c.h.b16 %v50
  %v245 = vunpack.c.l.b16 %v51
  %v246 = vunpack.c.h.b16 %v51
  %v247 = vunpack.c.l.b16 %v52
  %v248 = vunpack.c.h.b16 %v52
  %v249 = vunpack.c.l.b16 %v53
  %v250 = vunpack.c.h.b16 %v53
  %v251 = vunpack.c.l.b16 %v54
  %v252 = vunpack.c.h.b16 %v54
  %v253 = vunpack.c.l.b16 %v55
  %v254 = vunpack.c.h.b16 %v55
  %v255 = vunpack.c.l.b16 %v56
  %v256 = vunpack.c.h.b16 %v56
  %v257 = vunpack.c.l.b16 %v57
  %v258 = vunpack.c.h.b16 %v57
  %v259 = vunpack.c.l.b16 %v58
  %v260 = vunpack.c.h.b16 %v58
  %v261 = vunpack.c.l.b16 %v59
  %v262 = vunpack.c.h.b16 %v59
  %v263 = vunpack.c.l.b16 %v60
  %v264 = vunpack.c.h.b16 %v60
  %v265 = vunpack.c.l.b16 %v61
  %v266 = vunpack.c.h.b16 %v61
  %v267 = vunpack.c.l.b16 %v62
  %v268 = vunpack.c.h.b16 %v62
  %v269 = vunpack.c.l.b16 %v63
  %v270 = vunpack.c.h.b16 %v63
  %v271 = vunpack.c.l.b16 %v64
  %v272 = vunpack.c.h.b16 %v64
  %v273 = vunpack.c.l.b16 %v65
  %v274 = vunpack.c.h.b16 %v65
  %v275 = vunpack.c.l.b16 %v66
  %v276 = vunpack.c.h.b16 %v66
  %v277 = vunpack.c.l.b16 %v67
  %v278 = vunpack.c.h.b16 %v67
  %v279 = vunpack.c.l.b16 %v68
  %v280 = vunpack.c.h.b16 %v68
  %v281 = vunpack.c.l.b16 %v69
  %v282 = vunpack.c.h.b16 %v69
  %v283 = vunpack.c.l.b16 %v70
  %v284 = vunpack.c.h.b16 %v70
  %v285 = vunpack.c.l.b16 %v71
  %v286 = vunpack.c.h.b16 %v71
  %v287 = vunpack.c.l.b16 %v72
  %v288 = vunpack.c.h.b16 %v72
  %v289 = vunpack.c.l.b16 %v73
  %v290 = vunpack.c.h.b16 %v73
  %v291 = vunpack.c.l.b16 %v74
  %v292 = vunpack.c.h.b16 %v74
  %v293 = vunpack.c.l.b16 %v75
  %v294 = vunpack.c.h.b16 %v75
  %v295 = vunpack.c.l.b16 %v76
  %v296 = vunpack.c.h.b16 %v76
  %v297 = vunpack.c.l.b16 %v77
  %v298 = vunpack.c.h.b16 %v77
  %v299 = vunpack.c.l.b16 %v78
  %v300 = vunpack.c.h.b16 %v78
  %v301 = vunpack.c.l.b16 %v79
  %v302 = vunpack.c.h.b16 %v79
  %v303 = vunpack.c.l.b16 %v80
  %v304 = vunpack.c.h.b16 %v80
  %v305 = vpack.c.b16 %v179, %v177
  %v306 = vpack.c.b16 %v180, %v178
  %v307 = vpack.c.b16 %v183, %v181
  %v308 = vpack.c.b16 %v184, %v182
  %v309 = vpack.c.b16 %v187, %v185
  %v310 = vpack.c.b16 %v188, %v186
  %v311 = vpack.c.b16 %v191, %v189
  %v312 = vpack.c.b16 %v192, %v190
  %v313 = vpack.c.b16 %v195, %v193
  %v314 = vpack.c.b16 %v196, %v194
  %v315 = vpack.c.b16 %v199, %v197
  %v316 = vpack.c.b16 %v200, %v198
  %v317 = vpack.c.b16 %v203, %v201
  %v318 = vpack.c.b16 %v204, %v202
  %v319 = vpack.c.b16 %v207, %v205
  %v320 = vpack.c.b16 %v208, %v206
  %v321 = vpack.c.b16 %v211, %v209
  %v322 = vpack.c.b16 %v212, %v210
  %v323 = vpack.c.b16 %v215, %v213
  %v324 = vpack.c.b16 %v216, %v214
  %v325 = vpack.c.b16 %v219, %v217
  %v326 = vpack.c.b16 %v220, %v218
  %v327 = vpack.c.b16 %v223, %v221
  %v328 = vpack.c.b16 %v224, %v222
  %v329 = vpack.c.b16 %v227, %v225
  %v330 = vpack.c.b16 %v228, %v226
  %v331 = vpack.c.b16 %v231, %v229
  %v332 = vpack.c.b16 %v232, %v230
  %v333 = vpack.c.b16 %v235, %v233
  %v334 = vpack.c.b16 %v236, %v234
  %v335 = vpack.c.b16 %v239, %v237
  %v336 = vpack.c.b16 %v240, %v238
  %v337 = vpack.c.b16 %v243, %v241
  %v338 = vpack.c.b16 %v244, %v242
  %v339 = vpack.c.b16 %v247, %v245
  %v340 = vpack.c.b16 %v248, %v246
  %v341 = vpack.c.b16 %v251, %v249
  %v342 = vpack.c.b16 %v252, %v250
  %v343 = vpack.c.b16 %v255, %v253
  %v344 = vpack.c.b16 %v256, %v254
  %v345 = vpack.c.b16 %v259, %v257
  %v346 = vpack.c.b16 %v260, %v258
  %v347 = vpack.c.b16 %v263, %v261
  %v348 = vpack.c.b16 %v264, %v262
  %v349 = vpack.c.b16 %v267, %v265
  %v350 = vpack.c.b16 %v268, %v266
  %v351 = vpack.c.b16 %v271, %v269
  %v352 = vpack.c.b16 %v272, %v270
  %v353 = vpack.c.b16 %v275, %v273
  %v354 = vpack.c.b16 %v276, %v274
  %v355 = vpack.c.b16 %v279, %v277
  %v356 = vpack.c.b16 %v280, %v278
  %v357 = vpack.c.b16 %v283, %v281
  %v358 = vpack.c.b16 %v284, %v282
  %v359 = vpack.c.b16 %v287, %v285
  %v360 = vpack.c.b16 %v288, %v286
  %v361 = vpack.c.b16 %v291, %v289
  %v362 = vpack.c.b16 %v292, %v290
  %v363 = vpack.c.b16 %v295, %v293
  %v364 = vpack.c.b16 %v296, %v294
  %v365 = vpack.c.b16 %v299, %v297
  %v366 = vpack.c.b16 %v300, %v298
  %v367 = vpack.c.b16 %v303, %v301
  %v368 = vpack.c.b16 %v304, %v302
  %v465 = vunpack.c.l.b16 %v81
  %v466 = vunpack.c.l.b16 %v82
  %v467 = vunpack.c.l.b16 %v83
  %v468 = vunpack.c.l.b16 %v84
  %v469 = vunpack.c.l.b16 %v85
  %v470 = vunpack.c.l.b16 %v86
  %v471 = vunpack.c.l.b16 %v87
  %v472 = vunpack.c.l.b16 %v88
  %v473 = vunpack.c.l.b16 %v89
  %v474 = vunpack.c.l.b16 %v90
  %v475 = vunpack.c.l.b16 %v91
  %v476 = vunpack.c.l.b16 %v92
  %v477 = vunpack.c.l.b16 %v93
  %v478 = vunpack.c.l.b16 %v94
  %v479 = vunpack.c.l.b16 %v95
  %v480 = vunpack.c.l.b16 %v96
  %v481 = vunpack.c.l.b16 %v97
  %v482 = vunpack.c.l.b16 %v98
  %v483 = vunpack.c.l.b16 %v99
  %v484 = vunpack.c.l.b16 %v100
  %v485 = vunpack.c.l.b16 %v101
  %v486 = vunpack.c.l.b16 %v102
  %v487 = vunpack.c.l.b16 %v103
  %v488 = vunpack.c.l.b16 %v104
  %v489 = vunpack.c.l.b16 %v105
  %v490 = vunpack.c.l.b16 %v106
  %v491 = vunpack.c.l.b16 %v107
  %v492 = vunpack.c.l.b16 %v108
  %v493 = vunpack.c.l.b16 %v109
  %v494 = vunpack.c.l.b16 %v110
  %v495 = vunpack.c.l.b16 %v111
  %v496 = vunpack.c.l.b16 %v112
  %v497 = vpack.c.b16 %v466, %v465
  %v498 = vpack.c.b16 %v468, %v467
  %v499 = vpack.c.b16 %v470, %v469
  %v500 = vpack.c.b16 %v472, %v471
  %v501 = vpack.c.b16 %v474, %v473
  %v502 = vpack.c.b16 %v476, %v475
  %v503 = vpack.c.b16 %v478, %v477
  %v504 = vpack.c.b16 %v480, %v479
  %v505 = vpack.c.b16 %v482, %v481
  %v506 = vpack.c.b16 %v484, %v483
  %v507 = vpack.c.b16 %v486, %v485
  %v508 = vpack.c.b16 %v488, %v487
  %v509 = vpack.c.b16 %v490, %v489
  %v510 = vpack.c.b16 %v492, %v491
  %v511 = vpack.c.b16 %v494, %v493
  %v512 = vpack.c.b16 %v496, %v495
  %529 = vmatpush.bf16.msra.mxu0 %v504
  %530 = vmatpush.bf16.msra.mxu0 %v503
  %531 = vmatpush.bf16.msra.mxu0 %v502
  %532 = vmatpush.bf16.msra.mxu0 %v501
  %533 = vmatpush.bf16.msra.mxu0 %v500
  %534 = vmatpush.bf16.msra.mxu0 %v499
  %535 = vmatpush.bf16.msra.mxu0 %v498
  %536 = vmatpush.bf16.msra.mxu0 %v497
  %537 = vmatmul.bf16.gmra.mxu0 %v305
  %v538 = vpop.f32.mrf.mxu0
  %v539 = vadd.f32 0.0, %v538
  %v540 = vpop.f32.mrf.mxu0
  %v541 = vadd.f32 0.0, %v540
  %542 = vmatmul.bf16.gmra.mxu0 %v307
  %v543 = vpop.f32.mrf.mxu0
  %v544 = vadd.f32 0.0, %v543
  %v545 = vpop.f32.mrf.mxu0
  %v546 = vadd.f32 0.0, %v545
  %547 = vmatmul.bf16.gmra.mxu0 %v309
  %v548 = vpop.f32.mrf.mxu0
  %v549 = vadd.f32 0.0, %v548
  %v550 = vpop.f32.mrf.mxu0
  %v551 = vadd.f32 0.0, %v550
  %552 = vmatmul.bf16.gmra.mxu0 %v311
  %v553 = vpop.f32.mrf.mxu0
  %v554 = vadd.f32 0.0, %v553
  %v555 = vpop.f32.mrf.mxu0
  %v556 = vadd.f32 0.0, %v555
  %557 = vmatmul.bf16.gmra.mxu0 %v313
  %v558 = vpop.f32.mrf.mxu0
  %v559 = vadd.f32 0.0, %v558
  %v560 = vpop.f32.mrf.mxu0
  %v561 = vadd.f32 0.0, %v560
  %562 = vmatmul.bf16.gmra.mxu0 %v315
  %v563 = vpop.f32.mrf.mxu0
  %v564 = vadd.f32 0.0, %v563
  %v565 = vpop.f32.mrf.mxu0
  %v566 = vadd.f32 0.0, %v565
  %567 = vmatmul.bf16.gmra.mxu0 %v317
  %v568 = vpop.f32.mrf.mxu0
  %v569 = vadd.f32 0.0, %v568
  %v570 = vpop.f32.mrf.mxu0
  %v571 = vadd.f32 0.0, %v570
  %572 = vmatmul.bf16.gmra.mxu0 %v319
  %v573 = vpop.f32.mrf.mxu0
  %v574 = vadd.f32 0.0, %v573
  %v575 = vpop.f32.mrf.mxu0
  %v576 = vadd.f32 0.0, %v575
  %577 = vmatmul.bf16.gmra.mxu0 %v321
  %v578 = vpop.f32.mrf.mxu0
  %v579 = vadd.f32 0.0, %v578
  %v580 = vpop.f32.mrf.mxu0
  %v581 = vadd.f32 0.0, %v580
  %582 = vmatmul.bf16.gmra.mxu0 %v323
  %v583 = vpop.f32.mrf.mxu0
  %v584 = vadd.f32 0.0, %v583
  %v585 = vpop.f32.mrf.mxu0
  %v586 = vadd.f32 0.0, %v585
  %587 = vmatmul.bf16.gmra.mxu0 %v325
  %v588 = vpop.f32.mrf.mxu0
  %v589 = vadd.f32 0.0, %v588
  %v590 = vpop.f32.mrf.mxu0
  %v591 = vadd.f32 0.0, %v590
  %592 = vmatmul.bf16.gmra.mxu0 %v327
  %v593 = vpop.f32.mrf.mxu0
  %v594 = vadd.f32 0.0, %v593
  %v595 = vpop.f32.mrf.mxu0
  %v596 = vadd.f32 0.0, %v595
  %597 = vmatmul.bf16.gmra.mxu0 %v329
  %v598 = vpop.f32.mrf.mxu0
  %v599 = vadd.f32 0.0, %v598
  %v600 = vpop.f32.mrf.mxu0
  %v601 = vadd.f32 0.0, %v600
  %602 = vmatmul.bf16.gmra.mxu0 %v331
  %v603 = vpop.f32.mrf.mxu0
  %v604 = vadd.f32 0.0, %v603
  %v605 = vpop.f32.mrf.mxu0
  %v606 = vadd.f32 0.0, %v605
  %607 = vmatmul.bf16.gmra.mxu0 %v333
  %v608 = vpop.f32.mrf.mxu0
  %v609 = vadd.f32 0.0, %v608
  %v610 = vpop.f32.mrf.mxu0
  %v611 = vadd.f32 0.0, %v610
  %612 = vmatmul.bf16.gmra.mxu0 %v335
  %v613 = vpop.f32.mrf.mxu0
  %v614 = vadd.f32 0.0, %v613
  %v615 = vpop.f32.mrf.mxu0
  %v616 = vadd.f32 0.0, %v615
  %617 = vmatmul.bf16.gmra.mxu0 %v337
  %v618 = vpop.f32.mrf.mxu0
  %v619 = vadd.f32 0.0, %v618
  %v620 = vpop.f32.mrf.mxu0
  %v621 = vadd.f32 0.0, %v620
  %622 = vmatmul.bf16.gmra.mxu0 %v339
  %v623 = vpop.f32.mrf.mxu0
  %v624 = vadd.f32 0.0, %v623
  %v625 = vpop.f32.mrf.mxu0
  %v626 = vadd.f32 0.0, %v625
  %627 = vmatmul.bf16.gmra.mxu0 %v341
  %v628 = vpop.f32.mrf.mxu0
  %v629 = vadd.f32 0.0, %v628
  %v630 = vpop.f32.mrf.mxu0
  %v631 = vadd.f32 0.0, %v630
  %632 = vmatmul.bf16.gmra.mxu0 %v343
  %v633 = vpop.f32.mrf.mxu0
  %v634 = vadd.f32 0.0, %v633
  %v635 = vpop.f32.mrf.mxu0
  %v636 = vadd.f32 0.0, %v635
  %637 = vmatmul.bf16.gmra.mxu0 %v345
  %v638 = vpop.f32.mrf.mxu0
  %v639 = vadd.f32 0.0, %v638
  %v640 = vpop.f32.mrf.mxu0
  %v641 = vadd.f32 0.0, %v640
  %642 = vmatmul.bf16.gmra.mxu0 %v347
  %v643 = vpop.f32.mrf.mxu0
  %v644 = vadd.f32 0.0, %v643
  %v645 = vpop.f32.mrf.mxu0
  %v646 = vadd.f32 0.0, %v645
  %647 = vmatmul.bf16.gmra.mxu0 %v349
  %v648 = vpop.f32.mrf.mxu0
  %v649 = vadd.f32 0.0, %v648
  %v650 = vpop.f32.mrf.mxu0
  %v651 = vadd.f32 0.0, %v650
  %652 = vmatmul.bf16.gmra.mxu0 %v351
  %v653 = vpop.f32.mrf.mxu0
  %v654 = vadd.f32 0.0, %v653
  %v655 = vpop.f32.mrf.mxu0
  %v656 = vadd.f32 0.0, %v655
  %657 = vmatmul.bf16.gmra.mxu0 %v353
  %v658 = vpop.f32.mrf.mxu0
  %v659 = vadd.f32 0.0, %v658
  %v660 = vpop.f32.mrf.mxu0
  %v661 = vadd.f32 0.0, %v660
  %662 = vmatmul.bf16.gmra.mxu0 %v355
  %v663 = vpop.f32.mrf.mxu0
  %v664 = vadd.f32 0.0, %v663
  %v665 = vpop.f32.mrf.mxu0
  %v666 = vadd.f32 0.0, %v665
  %667 = vmatmul.bf16.gmra.mxu0 %v357
  %v668 = vpop.f32.mrf.mxu0
  %v669 = vadd.f32 0.0, %v668
  %v670 = vpop.f32.mrf.mxu0
  %v671 = vadd.f32 0.0, %v670
  %672 = vmatmul.bf16.gmra.mxu0 %v359
  %v673 = vpop.f32.mrf.mxu0
  %v674 = vadd.f32 0.0, %v673
  %v675 = vpop.f32.mrf.mxu0
  %v676 = vadd.f32 0.0, %v675
  %677 = vmatmul.bf16.gmra.mxu0 %v361
  %v678 = vpop.f32.mrf.mxu0
  %v679 = vadd.f32 0.0, %v678
  %v680 = vpop.f32.mrf.mxu0
  %v681 = vadd.f32 0.0, %v680
  %682 = vmatmul.bf16.gmra.mxu0 %v363
  %v683 = vpop.f32.mrf.mxu0
  %v684 = vadd.f32 0.0, %v683
  %v685 = vpop.f32.mrf.mxu0
  %v686 = vadd.f32 0.0, %v685
  %687 = vmatmul.bf16.gmra.mxu0 %v365
  %v688 = vpop.f32.mrf.mxu0
  %v689 = vadd.f32 0.0, %v688
  %v690 = vpop.f32.mrf.mxu0
  %v691 = vadd.f32 0.0, %v690
  %692 = vmatmul.bf16.gmra.mxu0 %v367
  %v693 = vpop.f32.mrf.mxu0
  %v694 = vadd.f32 0.0, %v693
  %v695 = vpop.f32.mrf.mxu0
  %v696 = vadd.f32 0.0, %v695
  %697 = vdwg.mxu0
  %698 = vmatpush.bf16.msra.mxu0 %v512
  %699 = vmatpush.bf16.msra.mxu0 %v511
  %700 = vmatpush.bf16.msra.mxu0 %v510
  %701 = vmatpush.bf16.msra.mxu0 %v509
  %702 = vmatpush.bf16.msra.mxu0 %v508
  %703 = vmatpush.bf16.msra.mxu0 %v507
  %704 = vmatpush.bf16.msra.mxu0 %v506
  %705 = vmatpush.bf16.msra.mxu0 %v505
  %706 = vmatmul.bf16.gmra.mxu0 %v306
  %v707 = vpop.f32.mrf.mxu0
  %v708 = vadd.f32 %v539, %v707
  %v709 = vpop.f32.mrf.mxu0
  %v710 = vadd.f32 %v541, %v709
  %711 = vmatmul.bf16.gmra.mxu0 %v308
  %v712 = vpop.f32.mrf.mxu0
  %v713 = vadd.f32 %v544, %v712
  %v714 = vpop.f32.mrf.mxu0
  %v715 = vadd.f32 %v546, %v714
  %716 = vmatmul.bf16.gmra.mxu0 %v310
  %v717 = vpop.f32.mrf.mxu0
  %v718 = vadd.f32 %v549, %v717
  %v719 = vpop.f32.mrf.mxu0
  %v720 = vadd.f32 %v551, %v719
  %721 = vmatmul.bf16.gmra.mxu0 %v312
  %v722 = vpop.f32.mrf.mxu0
  %v723 = vadd.f32 %v554, %v722
  %v724 = vpop.f32.mrf.mxu0
  %v725 = vadd.f32 %v556, %v724
  %726 = vmatmul.bf16.gmra.mxu0 %v314
  %v727 = vpop.f32.mrf.mxu0
  %v728 = vadd.f32 %v559, %v727
  %v729 = vpop.f32.mrf.mxu0
  %v730 = vadd.f32 %v561, %v729
  %731 = vmatmul.bf16.gmra.mxu0 %v316
  %v732 = vpop.f32.mrf.mxu0
  %v733 = vadd.f32 %v564, %v732
  %v734 = vpop.f32.mrf.mxu0
  %v735 = vadd.f32 %v566, %v734
  %736 = vmatmul.bf16.gmra.mxu0 %v318
  %v737 = vpop.f32.mrf.mxu0
  %v738 = vadd.f32 %v569, %v737
  %v739 = vpop.f32.mrf.mxu0
  %v740 = vadd.f32 %v571, %v739
  %741 = vmatmul.bf16.gmra.mxu0 %v320
  %v742 = vpop.f32.mrf.mxu0
  %v743 = vadd.f32 %v574, %v742
  %v744 = vpop.f32.mrf.mxu0
  %v745 = vadd.f32 %v576, %v744
  %746 = vmatmul.bf16.gmra.mxu0 %v322
  %v747 = vpop.f32.mrf.mxu0
  %v748 = vadd.f32 %v579, %v747
  %v749 = vpop.f32.mrf.mxu0
  %v750 = vadd.f32 %v581, %v749
  %751 = vmatmul.bf16.gmra.mxu0 %v324
  %v752 = vpop.f32.mrf.mxu0
  %v753 = vadd.f32 %v584, %v752
  %v754 = vpop.f32.mrf.mxu0
  %v755 = vadd.f32 %v586, %v754
  %756 = vmatmul.bf16.gmra.mxu0 %v326
  %v757 = vpop.f32.mrf.mxu0
  %v758 = vadd.f32 %v589, %v757
  %v759 = vpop.f32.mrf.mxu0
  %v760 = vadd.f32 %v591, %v759
  %761 = vmatmul.bf16.gmra.mxu0 %v328
  %v762 = vpop.f32.mrf.mxu0
  %v763 = vadd.f32 %v594, %v762
  %v764 = vpop.f32.mrf.mxu0
  %v765 = vadd.f32 %v596, %v764
  %766 = vmatmul.bf16.gmra.mxu0 %v330
  %v767 = vpop.f32.mrf.mxu0
  %v768 = vadd.f32 %v599, %v767
  %v769 = vpop.f32.mrf.mxu0
  %v770 = vadd.f32 %v601, %v769
  %771 = vmatmul.bf16.gmra.mxu0 %v332
  %v772 = vpop.f32.mrf.mxu0
  %v773 = vadd.f32 %v604, %v772
  %v774 = vpop.f32.mrf.mxu0
  %v775 = vadd.f32 %v606, %v774
  %776 = vmatmul.bf16.gmra.mxu0 %v334
  %v777 = vpop.f32.mrf.mxu0
  %v778 = vadd.f32 %v609, %v777
  %v779 = vpop.f32.mrf.mxu0
  %v780 = vadd.f32 %v611, %v779
  %781 = vmatmul.bf16.gmra.mxu0 %v336
  %v782 = vpop.f32.mrf.mxu0
  %v783 = vadd.f32 %v614, %v782
  %v784 = vpop.f32.mrf.mxu0
  %v785 = vadd.f32 %v616, %v784
  %786 = vmatmul.bf16.gmra.mxu0 %v338
  %v787 = vpop.f32.mrf.mxu0
  %v788 = vadd.f32 %v619, %v787
  %v789 = vpop.f32.mrf.mxu0
  %v790 = vadd.f32 %v621, %v789
  %791 = vmatmul.bf16.gmra.mxu0 %v340
  %v792 = vpop.f32.mrf.mxu0
  %v793 = vadd.f32 %v624, %v792
  %v794 = vpop.f32.mrf.mxu0
  %v795 = vadd.f32 %v626, %v794
  %796 = vmatmul.bf16.gmra.mxu0 %v342
  %v797 = vpop.f32.mrf.mxu0
  %v798 = vadd.f32 %v629, %v797
  %v799 = vpop.f32.mrf.mxu0
  %v800 = vadd.f32 %v631, %v799
  %801 = vmatmul.bf16.gmra.mxu0 %v344
  %v802 = vpop.f32.mrf.mxu0
  %v803 = vadd.f32 %v634, %v802
  %v804 = vpop.f32.mrf.mxu0
  %v805 = vadd.f32 %v636, %v804
  %806 = vmatmul.bf16.gmra.mxu0 %v346
  %v807 = vpop.f32.mrf.mxu0
  %v808 = vadd.f32 %v639, %v807
  %v809 = vpop.f32.mrf.mxu0
  %v810 = vadd.f32 %v641, %v809
  %811 = vmatmul.bf16.gmra.mxu0 %v348
  %v812 = vpop.f32.mrf.mxu0
  %v813 = vadd.f32 %v644, %v812
  %v814 = vpop.f32.mrf.mxu0
  %v815 = vadd.f32 %v646, %v814
  %816 = vmatmul.bf16.gmra.mxu0 %v350
  %v817 = vpop.f32.mrf.mxu0
  %v818 = vadd.f32 %v649, %v817
  %v819 = vpop.f32.mrf.mxu0
  %v820 = vadd.f32 %v651, %v819
  %821 = vmatmul.bf16.gmra.mxu0 %v352
  %v822 = vpop.f32.mrf.mxu0
  %v823 = vadd.f32 %v654, %v822
  %v824 = vpop.f32.mrf.mxu0
  %v825 = vadd.f32 %v656, %v824
  %826 = vmatmul.bf16.gmra.mxu0 %v354
  %v827 = vpop.f32.mrf.mxu0
  %v828 = vadd.f32 %v659, %v827
  %v829 = vpop.f32.mrf.mxu0
  %v830 = vadd.f32 %v661, %v829
  %831 = vmatmul.bf16.gmra.mxu0 %v356
  %v832 = vpop.f32.mrf.mxu0
  %v833 = vadd.f32 %v664, %v832
  %v834 = vpop.f32.mrf.mxu0
  %v835 = vadd.f32 %v666, %v834
  %836 = vmatmul.bf16.gmra.mxu0 %v358
  %v837 = vpop.f32.mrf.mxu0
  %v838 = vadd.f32 %v669, %v837
  %v839 = vpop.f32.mrf.mxu0
  %v840 = vadd.f32 %v671, %v839
  %841 = vmatmul.bf16.gmra.mxu0 %v360
  %v842 = vpop.f32.mrf.mxu0
  %v843 = vadd.f32 %v674, %v842
  %v844 = vpop.f32.mrf.mxu0
  %v845 = vadd.f32 %v676, %v844
  %846 = vmatmul.bf16.gmra.mxu0 %v362
  %v847 = vpop.f32.mrf.mxu0
  %v848 = vadd.f32 %v679, %v847
  %v849 = vpop.f32.mrf.mxu0
  %v850 = vadd.f32 %v681, %v849
  %851 = vmatmul.bf16.gmra.mxu0 %v364
  %v852 = vpop.f32.mrf.mxu0
  %v853 = vadd.f32 %v684, %v852
  %v854 = vpop.f32.mrf.mxu0
  %v855 = vadd.f32 %v686, %v854
  %856 = vmatmul.bf16.gmra.mxu0 %v366
  %v857 = vpop.f32.mrf.mxu0
  %v858 = vadd.f32 %v689, %v857
  %v859 = vpop.f32.mrf.mxu0
  %v860 = vadd.f32 %v691, %v859
  %861 = vmatmul.bf16.gmra.mxu0 %v368
  %v862 = vpop.f32.mrf.mxu0
  %v863 = vadd.f32 %v694, %v862
  %v864 = vpop.f32.mrf.mxu0
  %v865 = vadd.f32 %v696, %v864
  %866 = vdwg.mxu0
  %vm867 = vcmask 261120
  %v868 = vsel %vm867, %v708, 0.0
  %v869 = vsel %vm867, %v710, 0.0
  %v870 = vadd.f32 %v868, %v869
  %v871 = vsel %vm867, %v713, 0.0
  %v872 = vadd.f32 %v870, %v871
  %v873 = vsel %vm867, %v715, 0.0
  %v874 = vadd.f32 %v872, %v873
  %v875 = vsel %vm867, %v718, 0.0
  %v876 = vadd.f32 %v874, %v875
  %v877 = vsel %vm867, %v720, 0.0
  %v878 = vadd.f32 %v876, %v877
  %v879 = vsel %vm867, %v723, 0.0
  %v880 = vadd.f32 %v878, %v879
  %v881 = vsel %vm867, %v725, 0.0
  %v882 = vadd.f32 %v880, %v881
  %v883 = vsel %vm867, %v728, 0.0
  %v884 = vadd.f32 %v882, %v883
  %v885 = vsel %vm867, %v730, 0.0
  %v886 = vadd.f32 %v884, %v885
  %v887 = vsel %vm867, %v733, 0.0
  %v888 = vadd.f32 %v886, %v887
  %v889 = vsel %vm867, %v735, 0.0
  %v890 = vadd.f32 %v888, %v889
  %v891 = vsel %vm867, %v738, 0.0
  %v892 = vadd.f32 %v890, %v891
  %v893 = vsel %vm867, %v740, 0.0
  %v894 = vadd.f32 %v892, %v893
  %v895 = vsel %vm867, %v743, 0.0
  %v896 = vadd.f32 %v894, %v895
  %v897 = vsel %vm867, %v745, 0.0
  %v898 = vadd.f32 %v896, %v897
  %v899 = vsel %vm867, %v748, 0.0
  %v900 = vadd.f32 %v898, %v899
  %v901 = vsel %vm867, %v750, 0.0
  %v902 = vadd.f32 %v900, %v901
  %v903 = vsel %vm867, %v753, 0.0
  %v904 = vadd.f32 %v902, %v903
  %v905 = vsel %vm867, %v755, 0.0
  %v906 = vadd.f32 %v904, %v905
  %v907 = vsel %vm867, %v758, 0.0
  %v908 = vadd.f32 %v906, %v907
  %v909 = vsel %vm867, %v760, 0.0
  %v910 = vadd.f32 %v908, %v909
  %v911 = vsel %vm867, %v763, 0.0
  %v912 = vadd.f32 %v910, %v911
  %v913 = vsel %vm867, %v765, 0.0
  %v914 = vadd.f32 %v912, %v913
  %v915 = vsel %vm867, %v768, 0.0
  %v916 = vadd.f32 %v914, %v915
  %v917 = vsel %vm867, %v770, 0.0
  %v918 = vadd.f32 %v916, %v917
  %v919 = vsel %vm867, %v773, 0.0
  %v920 = vadd.f32 %v918, %v919
  %v921 = vsel %vm867, %v775, 0.0
  %v922 = vadd.f32 %v920, %v921
  %v923 = vsel %vm867, %v778, 0.0
  %v924 = vadd.f32 %v922, %v923
  %v925 = vsel %vm867, %v780, 0.0
  %v926 = vadd.f32 %v924, %v925
  %v927 = vsel %vm867, %v783, 0.0
  %v928 = vadd.f32 %v926, %v927
  %v929 = vsel %vm867, %v785, 0.0
  %v930 = vadd.f32 %v928, %v929
  %v931 = vsel %vm867, %v788, 0.0
  %v932 = vadd.f32 %v930, %v931
  %v933 = vsel %vm867, %v790, 0.0
  %v934 = vadd.f32 %v932, %v933
  %v935 = vsel %vm867, %v793, 0.0
  %v936 = vadd.f32 %v934, %v935
  %v937 = vsel %vm867, %v795, 0.0
  %v938 = vadd.f32 %v936, %v937
  %v939 = vsel %vm867, %v798, 0.0
  %v940 = vadd.f32 %v938, %v939
  %v941 = vsel %vm867, %v800, 0.0
  %v942 = vadd.f32 %v940, %v941
  %v943 = vsel %vm867, %v803, 0.0
  %v944 = vadd.f32 %v942, %v943
  %v945 = vsel %vm867, %v805, 0.0
  %v946 = vadd.f32 %v944, %v945
  %v947 = vsel %vm867, %v808, 0.0
  %v948 = vadd.f32 %v946, %v947
  %v949 = vsel %vm867, %v810, 0.0
  %v950 = vadd.f32 %v948, %v949
  %v951 = vsel %vm867, %v813, 0.0
  %v952 = vadd.f32 %v950, %v951
  %v953 = vsel %vm867, %v815, 0.0
  %v954 = vadd.f32 %v952, %v953
  %v955 = vsel %vm867, %v818, 0.0
  %v956 = vadd.f32 %v954, %v955
  %v957 = vsel %vm867, %v820, 0.0
  %v958 = vadd.f32 %v956, %v957
  %v959 = vsel %vm867, %v823, 0.0
  %v960 = vadd.f32 %v958, %v959
  %v961 = vsel %vm867, %v825, 0.0
  %v962 = vadd.f32 %v960, %v961
  %v963 = vsel %vm867, %v828, 0.0
  %v964 = vadd.f32 %v962, %v963
  %v965 = vsel %vm867, %v830, 0.0
  %v966 = vadd.f32 %v964, %v965
  %v967 = vsel %vm867, %v833, 0.0
  %v968 = vadd.f32 %v966, %v967
  %v969 = vsel %vm867, %v835, 0.0
  %v970 = vadd.f32 %v968, %v969
  %v971 = vsel %vm867, %v838, 0.0
  %v972 = vadd.f32 %v970, %v971
  %v973 = vsel %vm867, %v840, 0.0
  %v974 = vadd.f32 %v972, %v973
  %v975 = vsel %vm867, %v843, 0.0
  %v976 = vadd.f32 %v974, %v975
  %v977 = vsel %vm867, %v845, 0.0
  %v978 = vadd.f32 %v976, %v977
  %v979 = vsel %vm867, %v848, 0.0
  %v980 = vadd.f32 %v978, %v979
  %v981 = vsel %vm867, %v850, 0.0
  %v982 = vadd.f32 %v980, %v981
  %v983 = vsel %vm867, %v853, 0.0
  %v984 = vadd.f32 %v982, %v983
  %v985 = vsel %vm867, %v855, 0.0
  %v986 = vadd.f32 %v984, %v985
  %v987 = vsel %vm867, %v858, 0.0
  %v988 = vadd.f32 %v986, %v987
  %v989 = vsel %vm867, %v860, 0.0
  %v990 = vadd.f32 %v988, %v989
  %v991 = vsel %vm867, %v863, 0.0
  %v992 = vadd.f32 %v990, %v991
  %v993 = vsel %vm867, %v865, 0.0
  %v994 = vadd.f32 %v992, %v993
  %v995 = vrot.slane %v994, 4
  %v996 = vadd.f32 %v994, %v995
  %v997 = vrot.slane %v996, 2
  %v998 = vadd.f32 %v996, %v997
  %v999 = vrot.slane %v998, 1
  %v1000 = vadd.f32 %v998, %v999
  %v1001 = vmul.f32 %v1000, 0.001953125
  %v1002 = vmul.f32 %v708, %v708
  %v1003 = vmul.f32 %v710, %v710
  %v1004 = vmul.f32 %v713, %v713
  %v1005 = vmul.f32 %v715, %v715
  %v1006 = vmul.f32 %v718, %v718
  %v1007 = vmul.f32 %v720, %v720
  %v1008 = vmul.f32 %v723, %v723
  %v1009 = vmul.f32 %v725, %v725
  %v1010 = vmul.f32 %v728, %v728
  %v1011 = vmul.f32 %v730, %v730
  %v1012 = vmul.f32 %v733, %v733
  %v1013 = vmul.f32 %v735, %v735
  %v1014 = vmul.f32 %v738, %v738
  %v1015 = vmul.f32 %v740, %v740
  %v1016 = vmul.f32 %v743, %v743
  %v1017 = vmul.f32 %v745, %v745
  %v1018 = vmul.f32 %v748, %v748
  %v1019 = vmul.f32 %v750, %v750
  %v1020 = vmul.f32 %v753, %v753
  %v1021 = vmul.f32 %v755, %v755
  %v1022 = vmul.f32 %v758, %v758
  %v1023 = vmul.f32 %v760, %v760
  %v1024 = vmul.f32 %v763, %v763
  %v1025 = vmul.f32 %v765, %v765
  %v1026 = vmul.f32 %v768, %v768
  %v1027 = vmul.f32 %v770, %v770
  %v1028 = vmul.f32 %v773, %v773
  %v1029 = vmul.f32 %v775, %v775
  %v1030 = vmul.f32 %v778, %v778
  %v1031 = vmul.f32 %v780, %v780
  %v1032 = vmul.f32 %v783, %v783
  %v1033 = vmul.f32 %v785, %v785
  %v1034 = vmul.f32 %v788, %v788
  %v1035 = vmul.f32 %v790, %v790
  %v1036 = vmul.f32 %v793, %v793
  %v1037 = vmul.f32 %v795, %v795
  %v1038 = vmul.f32 %v798, %v798
  %v1039 = vmul.f32 %v800, %v800
  %v1040 = vmul.f32 %v803, %v803
  %v1041 = vmul.f32 %v805, %v805
  %v1042 = vmul.f32 %v808, %v808
  %v1043 = vmul.f32 %v810, %v810
  %v1044 = vmul.f32 %v813, %v813
  %v1045 = vmul.f32 %v815, %v815
  %v1046 = vmul.f32 %v818, %v818
  %v1047 = vmul.f32 %v820, %v820
  %v1048 = vmul.f32 %v823, %v823
  %v1049 = vmul.f32 %v825, %v825
  %v1050 = vmul.f32 %v828, %v828
  %v1051 = vmul.f32 %v830, %v830
  %v1052 = vmul.f32 %v833, %v833
  %v1053 = vmul.f32 %v835, %v835
  %v1054 = vmul.f32 %v838, %v838
  %v1055 = vmul.f32 %v840, %v840
  %v1056 = vmul.f32 %v843, %v843
  %v1057 = vmul.f32 %v845, %v845
  %v1058 = vmul.f32 %v848, %v848
  %v1059 = vmul.f32 %v850, %v850
  %v1060 = vmul.f32 %v853, %v853
  %v1061 = vmul.f32 %v855, %v855
  %v1062 = vmul.f32 %v858, %v858
  %v1063 = vmul.f32 %v860, %v860
  %v1064 = vmul.f32 %v863, %v863
  %v1065 = vmul.f32 %v865, %v865
  %v1066 = vsel %vm867, %v1002, 0.0
  %v1067 = vsel %vm867, %v1003, 0.0
  %v1068 = vadd.f32 %v1066, %v1067
  %v1069 = vsel %vm867, %v1004, 0.0
  %v1070 = vadd.f32 %v1068, %v1069
  %v1071 = vsel %vm867, %v1005, 0.0
  %v1072 = vadd.f32 %v1070, %v1071
  %v1073 = vsel %vm867, %v1006, 0.0
  %v1074 = vadd.f32 %v1072, %v1073
  %v1075 = vsel %vm867, %v1007, 0.0
  %v1076 = vadd.f32 %v1074, %v1075
  %v1077 = vsel %vm867, %v1008, 0.0
  %v1078 = vadd.f32 %v1076, %v1077
  %v1079 = vsel %vm867, %v1009, 0.0
  %v1080 = vadd.f32 %v1078, %v1079
  %v1081 = vsel %vm867, %v1010, 0.0
  %v1082 = vadd.f32 %v1080, %v1081
  %v1083 = vsel %vm867, %v1011, 0.0
  %v1084 = vadd.f32 %v1082, %v1083
  %v1085 = vsel %vm867, %v1012, 0.0
  %v1086 = vadd.f32 %v1084, %v1085
  %v1087 = vsel %vm867, %v1013, 0.0
  %v1088 = vadd.f32 %v1086, %v1087
  %v1089 = vsel %vm867, %v1014, 0.0
  %v1090 = vadd.f32 %v1088, %v1089
  %v1091 = vsel %vm867, %v1015, 0.0
  %v1092 = vadd.f32 %v1090, %v1091
  %v1093 = vsel %vm867, %v1016, 0.0
  %v1094 = vadd.f32 %v1092, %v1093
  %v1095 = vsel %vm867, %v1017, 0.0
  %v1096 = vadd.f32 %v1094, %v1095
  %v1097 = vsel %vm867, %v1018, 0.0
  %v1098 = vadd.f32 %v1096, %v1097
  %v1099 = vsel %vm867, %v1019, 0.0
  %v1100 = vadd.f32 %v1098, %v1099
  %v1101 = vsel %vm867, %v1020, 0.0
  %v1102 = vadd.f32 %v1100, %v1101
  %v1103 = vsel %vm867, %v1021, 0.0
  %v1104 = vadd.f32 %v1102, %v1103
  %v1105 = vsel %vm867, %v1022, 0.0
  %v1106 = vadd.f32 %v1104, %v1105
  %v1107 = vsel %vm867, %v1023, 0.0
  %v1108 = vadd.f32 %v1106, %v1107
  %v1109 = vsel %vm867, %v1024, 0.0
  %v1110 = vadd.f32 %v1108, %v1109
  %v1111 = vsel %vm867, %v1025, 0.0
  %v1112 = vadd.f32 %v1110, %v1111
  %v1113 = vsel %vm867, %v1026, 0.0
  %v1114 = vadd.f32 %v1112, %v1113
  %v1115 = vsel %vm867, %v1027, 0.0
  %v1116 = vadd.f32 %v1114, %v1115
  %v1117 = vsel %vm867, %v1028, 0.0
  %v1118 = vadd.f32 %v1116, %v1117
  %v1119 = vsel %vm867, %v1029, 0.0
  %v1120 = vadd.f32 %v1118, %v1119
  %v1121 = vsel %vm867, %v1030, 0.0
  %v1122 = vadd.f32 %v1120, %v1121
  %v1123 = vsel %vm867, %v1031, 0.0
  %v1124 = vadd.f32 %v1122, %v1123
  %v1125 = vsel %vm867, %v1032, 0.0
  %v1126 = vadd.f32 %v1124, %v1125
  %v1127 = vsel %vm867, %v1033, 0.0
  %v1128 = vadd.f32 %v1126, %v1127
  %v1129 = vsel %vm867, %v1034, 0.0
  %v1130 = vadd.f32 %v1128, %v1129
  %v1131 = vsel %vm867, %v1035, 0.0
  %v1132 = vadd.f32 %v1130, %v1131
  %v1133 = vsel %vm867, %v1036, 0.0
  %v1134 = vadd.f32 %v1132, %v1133
  %v1135 = vsel %vm867, %v1037, 0.0
  %v1136 = vadd.f32 %v1134, %v1135
  %v1137 = vsel %vm867, %v1038, 0.0
  %v1138 = vadd.f32 %v1136, %v1137
  %v1139 = vsel %vm867, %v1039, 0.0
  %v1140 = vadd.f32 %v1138, %v1139
  %v1141 = vsel %vm867, %v1040, 0.0
  %v1142 = vadd.f32 %v1140, %v1141
  %v1143 = vsel %vm867, %v1041, 0.0
  %v1144 = vadd.f32 %v1142, %v1143
  %v1145 = vsel %vm867, %v1042, 0.0
  %v1146 = vadd.f32 %v1144, %v1145
  %v1147 = vsel %vm867, %v1043, 0.0
  %v1148 = vadd.f32 %v1146, %v1147
  %v1149 = vsel %vm867, %v1044, 0.0
  %v1150 = vadd.f32 %v1148, %v1149
  %v1151 = vsel %vm867, %v1045, 0.0
  %v1152 = vadd.f32 %v1150, %v1151
  %v1153 = vsel %vm867, %v1046, 0.0
  %v1154 = vadd.f32 %v1152, %v1153
  %v1155 = vsel %vm867, %v1047, 0.0
  %v1156 = vadd.f32 %v1154, %v1155
  %v1157 = vsel %vm867, %v1048, 0.0
  %v1158 = vadd.f32 %v1156, %v1157
  %v1159 = vsel %vm867, %v1049, 0.0
  %v1160 = vadd.f32 %v1158, %v1159
  %v1161 = vsel %vm867, %v1050, 0.0
  %v1162 = vadd.f32 %v1160, %v1161
  %v1163 = vsel %vm867, %v1051, 0.0
  %v1164 = vadd.f32 %v1162, %v1163
  %v1165 = vsel %vm867, %v1052, 0.0
  %v1166 = vadd.f32 %v1164, %v1165
  %v1167 = vsel %vm867, %v1053, 0.0
  %v1168 = vadd.f32 %v1166, %v1167
  %v1169 = vsel %vm867, %v1054, 0.0
  %v1170 = vadd.f32 %v1168, %v1169
  %v1171 = vsel %vm867, %v1055, 0.0
  %v1172 = vadd.f32 %v1170, %v1171
  %v1173 = vsel %vm867, %v1056, 0.0
  %v1174 = vadd.f32 %v1172, %v1173
  %v1175 = vsel %vm867, %v1057, 0.0
  %v1176 = vadd.f32 %v1174, %v1175
  %v1177 = vsel %vm867, %v1058, 0.0
  %v1178 = vadd.f32 %v1176, %v1177
  %v1179 = vsel %vm867, %v1059, 0.0
  %v1180 = vadd.f32 %v1178, %v1179
  %v1181 = vsel %vm867, %v1060, 0.0
  %v1182 = vadd.f32 %v1180, %v1181
  %v1183 = vsel %vm867, %v1061, 0.0
  %v1184 = vadd.f32 %v1182, %v1183
  %v1185 = vsel %vm867, %v1062, 0.0
  %v1186 = vadd.f32 %v1184, %v1185
  %v1187 = vsel %vm867, %v1063, 0.0
  %v1188 = vadd.f32 %v1186, %v1187
  %v1189 = vsel %vm867, %v1064, 0.0
  %v1190 = vadd.f32 %v1188, %v1189
  %v1191 = vsel %vm867, %v1065, 0.0
  %v1192 = vadd.f32 %v1190, %v1191
  %v1193 = vrot.slane %v1192, 4
  %v1194 = vadd.f32 %v1192, %v1193
  %v1195 = vrot.slane %v1194, 2
  %v1196 = vadd.f32 %v1194, %v1195
  %v1197 = vrot.slane %v1196, 1
  %v1198 = vadd.f32 %v1196, %v1197
  %v1199 = vmul.f32 %v1198, 0.001953125
  %v1200 = vmul.f32 %v1001, %v1001
  %v1201 = vsub.f32 %v1199, %v1200
  %v1202 = vmax.f32 %v1201, 0.0
  %v1203 = vadd.f32 %v1202, 1e-05
  %v1204 = vrsqrt.pop %v1203
  %v1205 = vmul.f32 %v1204, %v1203
  %v1206 = vmul.f32 %v1205, %v1204
  %v1207 = vmul.f32 0.5, %v1206
  %v1208 = vsub.f32 1.5, %v1207
  %v1209 = vmul.f32 %v1204, %v1208
  %vm1210 = vweird.f32 %v1203
  %vm1211 = vweird.f32 %v1204
  %vm1212 = vmor %vm1210, %vm1211
  %v1213 = vsel %vm1212, %v1204, %v1209
  %v1214 = vld [vmem:[%s2] sm:$0x1]
  %v1215 = vmul.f32 %v1214, %v1213
  %v1216 = vld [vmem:[%s3] sm:$0x1]
  %v1217 = vmul.f32 %v1001, %v1215
  %v1218 = vsub.f32 %v1216, %v1217
  %v1220 = vperm.slane %v1215, 0
  %v1222 = vmul.f32 %v708, %v1220
  %v1223 = vmul.f32 %v710, %v1220
  %v1224 = vmul.f32 %v713, %v1220
  %v1225 = vmul.f32 %v715, %v1220
  %v1226 = vmul.f32 %v718, %v1220
  %v1227 = vmul.f32 %v720, %v1220
  %v1228 = vmul.f32 %v723, %v1220
  %v1229 = vmul.f32 %v725, %v1220
  %v1230 = vmul.f32 %v728, %v1220
  %v1231 = vmul.f32 %v730, %v1220
  %v1232 = vmul.f32 %v733, %v1220
  %v1233 = vmul.f32 %v735, %v1220
  %v1234 = vmul.f32 %v738, %v1220
  %v1235 = vmul.f32 %v740, %v1220
  %v1236 = vmul.f32 %v743, %v1220
  %v1237 = vmul.f32 %v745, %v1220
  %v1238 = vmul.f32 %v748, %v1220
  %v1239 = vmul.f32 %v750, %v1220
  %v1240 = vmul.f32 %v753, %v1220
  %v1241 = vmul.f32 %v755, %v1220
  %v1242 = vmul.f32 %v758, %v1220
  %v1243 = vmul.f32 %v760, %v1220
  %v1244 = vmul.f32 %v763, %v1220
  %v1245 = vmul.f32 %v765, %v1220
  %v1246 = vmul.f32 %v768, %v1220
  %v1247 = vmul.f32 %v770, %v1220
  %v1248 = vmul.f32 %v773, %v1220
  %v1249 = vmul.f32 %v775, %v1220
  %v1250 = vmul.f32 %v778, %v1220
  %v1251 = vmul.f32 %v780, %v1220
  %v1252 = vmul.f32 %v783, %v1220
  %v1253 = vmul.f32 %v785, %v1220
  %v1254 = vmul.f32 %v788, %v1220
  %v1255 = vmul.f32 %v790, %v1220
  %v1256 = vmul.f32 %v793, %v1220
  %v1257 = vmul.f32 %v795, %v1220
  %v1258 = vmul.f32 %v798, %v1220
  %v1259 = vmul.f32 %v800, %v1220
  %v1260 = vmul.f32 %v803, %v1220
  %v1261 = vmul.f32 %v805, %v1220
  %v1262 = vmul.f32 %v808, %v1220
  %v1263 = vmul.f32 %v810, %v1220
  %v1264 = vmul.f32 %v813, %v1220
  %v1265 = vmul.f32 %v815, %v1220
  %v1266 = vmul.f32 %v818, %v1220
  %v1267 = vmul.f32 %v820, %v1220
  %v1268 = vmul.f32 %v823, %v1220
  %v1269 = vmul.f32 %v825, %v1220
  %v1270 = vmul.f32 %v828, %v1220
  %v1271 = vmul.f32 %v830, %v1220
  %v1272 = vmul.f32 %v833, %v1220
  %v1273 = vmul.f32 %v835, %v1220
  %v1274 = vmul.f32 %v838, %v1220
  %v1275 = vmul.f32 %v840, %v1220
  %v1276 = vmul.f32 %v843, %v1220
  %v1277 = vmul.f32 %v845, %v1220
  %v1278 = vmul.f32 %v848, %v1220
  %v1279 = vmul.f32 %v850, %v1220
  %v1280 = vmul.f32 %v853, %v1220
  %v1281 = vmul.f32 %v855, %v1220
  %v1282 = vmul.f32 %v858, %v1220
  %v1283 = vmul.f32 %v860, %v1220
  %v1284 = vmul.f32 %v863, %v1220
  %v1285 = vmul.f32 %v865, %v1220
  %v1287 = vperm.slane %v1218, 0
  %v1289 = vadd.f32 %v1222, %v1287
  %v1290 = vadd.f32 %v1223, %v1287
  %v1291 = vadd.f32 %v1224, %v1287
  %v1292 = vadd.f32 %v1225, %v1287
  %v1293 = vadd.f32 %v1226, %v1287
  %v1294 = vadd.f32 %v1227, %v1287
  %v1295 = vadd.f32 %v1228, %v1287
  %v1296 = vadd.f32 %v1229, %v1287
  %v1297 = vadd.f32 %v1230, %v1287
  %v1298 = vadd.f32 %v1231, %v1287
  %v1299 = vadd.f32 %v1232, %v1287
  %v1300 = vadd.f32 %v1233, %v1287
  %v1301 = vadd.f32 %v1234, %v1287
  %v1302 = vadd.f32 %v1235, %v1287
  %v1303 = vadd.f32 %v1236, %v1287
  %v1304 = vadd.f32 %v1237, %v1287
  %v1305 = vadd.f32 %v1238, %v1287
  %v1306 = vadd.f32 %v1239, %v1287
  %v1307 = vadd.f32 %v1240, %v1287
  %v1308 = vadd.f32 %v1241, %v1287
  %v1309 = vadd.f32 %v1242, %v1287
  %v1310 = vadd.f32 %v1243, %v1287
  %v1311 = vadd.f32 %v1244, %v1287
  %v1312 = vadd.f32 %v1245, %v1287
  %v1313 = vadd.f32 %v1246, %v1287
  %v1314 = vadd.f32 %v1247, %v1287
  %v1315 = vadd.f32 %v1248, %v1287
  %v1316 = vadd.f32 %v1249, %v1287
  %v1317 = vadd.f32 %v1250, %v1287
  %v1318 = vadd.f32 %v1251, %v1287
  %v1319 = vadd.f32 %v1252, %v1287
  %v1320 = vadd.f32 %v1253, %v1287
  %v1321 = vadd.f32 %v1254, %v1287
  %v1322 = vadd.f32 %v1255, %v1287
  %v1323 = vadd.f32 %v1256, %v1287
  %v1324 = vadd.f32 %v1257, %v1287
  %v1325 = vadd.f32 %v1258, %v1287
  %v1326 = vadd.f32 %v1259, %v1287
  %v1327 = vadd.f32 %v1260, %v1287
  %v1328 = vadd.f32 %v1261, %v1287
  %v1329 = vadd.f32 %v1262, %v1287
  %v1330 = vadd.f32 %v1263, %v1287
  %v1331 = vadd.f32 %v1264, %v1287
  %v1332 = vadd.f32 %v1265, %v1287
  %v1333 = vadd.f32 %v1266, %v1287
  %v1334 = vadd.f32 %v1267, %v1287
  %v1335 = vadd.f32 %v1268, %v1287
  %v1336 = vadd.f32 %v1269, %v1287
  %v1337 = vadd.f32 %v1270, %v1287
  %v1338 = vadd.f32 %v1271, %v1287
  %v1339 = vadd.f32 %v1272, %v1287
  %v1340 = vadd.f32 %v1273, %v1287
  %v1341 = vadd.f32 %v1274, %v1287
  %v1342 = vadd.f32 %v1275, %v1287
  %v1343 = vadd.f32 %v1276, %v1287
  %v1344 = vadd.f32 %v1277, %v1287
  %v1345 = vadd.f32 %v1278, %v1287
  %v1346 = vadd.f32 %v1279, %v1287
  %v1347 = vadd.f32 %v1280, %v1287
  %v1348 = vadd.f32 %v1281, %v1287
  %v1349 = vadd.f32 %v1282, %v1287
  %v1350 = vadd.f32 %v1283, %v1287
  %v1351 = vadd.f32 %v1284, %v1287
  %v1352 = vadd.f32 %v1285, %v1287
  %vm1353 = vcmp.gt.f32.partialorder %v1289, 0.0
  %vm1354 = vcmp.gt.f32.partialorder %v1290, 0.0
  %vm1355 = vcmp.gt.f32.partialorder %v1291, 0.0
  %vm1356 = vcmp.gt.f32.partialorder %v1292, 0.0
  %vm1357 = vcmp.gt.f32.partialorder %v1293, 0.0
  %vm1358 = vcmp.gt.f32.partialorder %v1294, 0.0
  %vm1359 = vcmp.gt.f32.partialorder %v1295, 0.0
  %vm1360 = vcmp.gt.f32.partialorder %v1296, 0.0
  %vm1361 = vcmp.gt.f32.partialorder %v1297, 0.0
  %vm1362 = vcmp.gt.f32.partialorder %v1298, 0.0
  %vm1363 = vcmp.gt.f32.partialorder %v1299, 0.0
  %vm1364 = vcmp.gt.f32.partialorder %v1300, 0.0
  %vm1365 = vcmp.gt.f32.partialorder %v1301, 0.0
  %vm1366 = vcmp.gt.f32.partialorder %v1302, 0.0
  %vm1367 = vcmp.gt.f32.partialorder %v1303, 0.0
  %vm1368 = vcmp.gt.f32.partialorder %v1304, 0.0
  %vm1369 = vcmp.gt.f32.partialorder %v1305, 0.0
  %vm1370 = vcmp.gt.f32.partialorder %v1306, 0.0
  %vm1371 = vcmp.gt.f32.partialorder %v1307, 0.0
  %vm1372 = vcmp.gt.f32.partialorder %v1308, 0.0
  %vm1373 = vcmp.gt.f32.partialorder %v1309, 0.0
  %vm1374 = vcmp.gt.f32.partialorder %v1310, 0.0
  %vm1375 = vcmp.gt.f32.partialorder %v1311, 0.0
  %vm1376 = vcmp.gt.f32.partialorder %v1312, 0.0
  %vm1377 = vcmp.gt.f32.partialorder %v1313, 0.0
  %vm1378 = vcmp.gt.f32.partialorder %v1314, 0.0
  %vm1379 = vcmp.gt.f32.partialorder %v1315, 0.0
  %vm1380 = vcmp.gt.f32.partialorder %v1316, 0.0
  %vm1381 = vcmp.gt.f32.partialorder %v1317, 0.0
  %vm1382 = vcmp.gt.f32.partialorder %v1318, 0.0
  %vm1383 = vcmp.gt.f32.partialorder %v1319, 0.0
  %vm1384 = vcmp.gt.f32.partialorder %v1320, 0.0
  %vm1385 = vcmp.gt.f32.partialorder %v1321, 0.0
  %vm1386 = vcmp.gt.f32.partialorder %v1322, 0.0
  %vm1387 = vcmp.gt.f32.partialorder %v1323, 0.0
  %vm1388 = vcmp.gt.f32.partialorder %v1324, 0.0
  %vm1389 = vcmp.gt.f32.partialorder %v1325, 0.0
  %vm1390 = vcmp.gt.f32.partialorder %v1326, 0.0
  %vm1391 = vcmp.gt.f32.partialorder %v1327, 0.0
  %vm1392 = vcmp.gt.f32.partialorder %v1328, 0.0
  %vm1393 = vcmp.gt.f32.partialorder %v1329, 0.0
  %vm1394 = vcmp.gt.f32.partialorder %v1330, 0.0
  %vm1395 = vcmp.gt.f32.partialorder %v1331, 0.0
  %vm1396 = vcmp.gt.f32.partialorder %v1332, 0.0
  %vm1397 = vcmp.gt.f32.partialorder %v1333, 0.0
  %vm1398 = vcmp.gt.f32.partialorder %v1334, 0.0
  %vm1399 = vcmp.gt.f32.partialorder %v1335, 0.0
  %vm1400 = vcmp.gt.f32.partialorder %v1336, 0.0
  %vm1401 = vcmp.gt.f32.partialorder %v1337, 0.0
  %vm1402 = vcmp.gt.f32.partialorder %v1338, 0.0
  %vm1403 = vcmp.gt.f32.partialorder %v1339, 0.0
  %vm1404 = vcmp.gt.f32.partialorder %v1340, 0.0
  %vm1405 = vcmp.gt.f32.partialorder %v1341, 0.0
  %vm1406 = vcmp.gt.f32.partialorder %v1342, 0.0
  %vm1407 = vcmp.gt.f32.partialorder %v1343, 0.0
  %vm1408 = vcmp.gt.f32.partialorder %v1344, 0.0
  %vm1409 = vcmp.gt.f32.partialorder %v1345, 0.0
  %vm1410 = vcmp.gt.f32.partialorder %v1346, 0.0
  %vm1411 = vcmp.gt.f32.partialorder %v1347, 0.0
  %vm1412 = vcmp.gt.f32.partialorder %v1348, 0.0
  %vm1413 = vcmp.gt.f32.partialorder %v1349, 0.0
  %vm1414 = vcmp.gt.f32.partialorder %v1350, 0.0
  %vm1415 = vcmp.gt.f32.partialorder %v1351, 0.0
  %vm1416 = vcmp.gt.f32.partialorder %v1352, 0.0
  %v1417 = vmul.f32 %v1289, 0.2
  %v1418 = vmul.f32 %v1290, 0.2
  %v1419 = vmul.f32 %v1291, 0.2
  %v1420 = vmul.f32 %v1292, 0.2
  %v1421 = vmul.f32 %v1293, 0.2
  %v1422 = vmul.f32 %v1294, 0.2
  %v1423 = vmul.f32 %v1295, 0.2
  %v1424 = vmul.f32 %v1296, 0.2
  %v1425 = vmul.f32 %v1297, 0.2
  %v1426 = vmul.f32 %v1298, 0.2
  %v1427 = vmul.f32 %v1299, 0.2
  %v1428 = vmul.f32 %v1300, 0.2
  %v1429 = vmul.f32 %v1301, 0.2
  %v1430 = vmul.f32 %v1302, 0.2
  %v1431 = vmul.f32 %v1303, 0.2
  %v1432 = vmul.f32 %v1304, 0.2
  %v1433 = vmul.f32 %v1305, 0.2
  %v1434 = vmul.f32 %v1306, 0.2
  %v1435 = vmul.f32 %v1307, 0.2
  %v1436 = vmul.f32 %v1308, 0.2
  %v1437 = vmul.f32 %v1309, 0.2
  %v1438 = vmul.f32 %v1310, 0.2
  %v1439 = vmul.f32 %v1311, 0.2
  %v1440 = vmul.f32 %v1312, 0.2
  %v1441 = vmul.f32 %v1313, 0.2
  %v1442 = vmul.f32 %v1314, 0.2
  %v1443 = vmul.f32 %v1315, 0.2
  %v1444 = vmul.f32 %v1316, 0.2
  %v1445 = vmul.f32 %v1317, 0.2
  %v1446 = vmul.f32 %v1318, 0.2
  %v1447 = vmul.f32 %v1319, 0.2
  %v1448 = vmul.f32 %v1320, 0.2
  %v1449 = vmul.f32 %v1321, 0.2
  %v1450 = vmul.f32 %v1322, 0.2
  %v1451 = vmul.f32 %v1323, 0.2
  %v1452 = vmul.f32 %v1324, 0.2
  %v1453 = vmul.f32 %v1325, 0.2
  %v1454 = vmul.f32 %v1326, 0.2
  %v1455 = vmul.f32 %v1327, 0.2
  %v1456 = vmul.f32 %v1328, 0.2
  %v1457 = vmul.f32 %v1329, 0.2
  %v1458 = vmul.f32 %v1330, 0.2
  %v1459 = vmul.f32 %v1331, 0.2
  %v1460 = vmul.f32 %v1332, 0.2
  %v1461 = vmul.f32 %v1333, 0.2
  %v1462 = vmul.f32 %v1334, 0.2
  %v1463 = vmul.f32 %v1335, 0.2
  %v1464 = vmul.f32 %v1336, 0.2
  %v1465 = vmul.f32 %v1337, 0.2
  %v1466 = vmul.f32 %v1338, 0.2
  %v1467 = vmul.f32 %v1339, 0.2
  %v1468 = vmul.f32 %v1340, 0.2
  %v1469 = vmul.f32 %v1341, 0.2
  %v1470 = vmul.f32 %v1342, 0.2
  %v1471 = vmul.f32 %v1343, 0.2
  %v1472 = vmul.f32 %v1344, 0.2
  %v1473 = vmul.f32 %v1345, 0.2
  %v1474 = vmul.f32 %v1346, 0.2
  %v1475 = vmul.f32 %v1347, 0.2
  %v1476 = vmul.f32 %v1348, 0.2
  %v1477 = vmul.f32 %v1349, 0.2
  %v1478 = vmul.f32 %v1350, 0.2
  %v1479 = vmul.f32 %v1351, 0.2
  %v1480 = vmul.f32 %v1352, 0.2
  %v1481 = vsel %vm1353, %v1289, %v1417
  %v1482 = vsel %vm1354, %v1290, %v1418
  %v1483 = vsel %vm1355, %v1291, %v1419
  %v1484 = vsel %vm1356, %v1292, %v1420
  %v1485 = vsel %vm1357, %v1293, %v1421
  %v1486 = vsel %vm1358, %v1294, %v1422
  %v1487 = vsel %vm1359, %v1295, %v1423
  %v1488 = vsel %vm1360, %v1296, %v1424
  %v1489 = vsel %vm1361, %v1297, %v1425
  %v1490 = vsel %vm1362, %v1298, %v1426
  %v1491 = vsel %vm1363, %v1299, %v1427
  %v1492 = vsel %vm1364, %v1300, %v1428
  %v1493 = vsel %vm1365, %v1301, %v1429
  %v1494 = vsel %vm1366, %v1302, %v1430
  %v1495 = vsel %vm1367, %v1303, %v1431
  %v1496 = vsel %vm1368, %v1304, %v1432
  %v1497 = vsel %vm1369, %v1305, %v1433
  %v1498 = vsel %vm1370, %v1306, %v1434
  %v1499 = vsel %vm1371, %v1307, %v1435
  %v1500 = vsel %vm1372, %v1308, %v1436
  %v1501 = vsel %vm1373, %v1309, %v1437
  %v1502 = vsel %vm1374, %v1310, %v1438
  %v1503 = vsel %vm1375, %v1311, %v1439
  %v1504 = vsel %vm1376, %v1312, %v1440
  %v1505 = vsel %vm1377, %v1313, %v1441
  %v1506 = vsel %vm1378, %v1314, %v1442
  %v1507 = vsel %vm1379, %v1315, %v1443
  %v1508 = vsel %vm1380, %v1316, %v1444
  %v1509 = vsel %vm1381, %v1317, %v1445
  %v1510 = vsel %vm1382, %v1318, %v1446
  %v1511 = vsel %vm1383, %v1319, %v1447
  %v1512 = vsel %vm1384, %v1320, %v1448
  %v1513 = vsel %vm1385, %v1321, %v1449
  %v1514 = vsel %vm1386, %v1322, %v1450
  %v1515 = vsel %vm1387, %v1323, %v1451
  %v1516 = vsel %vm1388, %v1324, %v1452
  %v1517 = vsel %vm1389, %v1325, %v1453
  %v1518 = vsel %vm1390, %v1326, %v1454
  %v1519 = vsel %vm1391, %v1327, %v1455
  %v1520 = vsel %vm1392, %v1328, %v1456
  %v1521 = vsel %vm1393, %v1329, %v1457
  %v1522 = vsel %vm1394, %v1330, %v1458
  %v1523 = vsel %vm1395, %v1331, %v1459
  %v1524 = vsel %vm1396, %v1332, %v1460
  %v1525 = vsel %vm1397, %v1333, %v1461
  %v1526 = vsel %vm1398, %v1334, %v1462
  %v1527 = vsel %vm1399, %v1335, %v1463
  %v1528 = vsel %vm1400, %v1336, %v1464
  %v1529 = vsel %vm1401, %v1337, %v1465
  %v1530 = vsel %vm1402, %v1338, %v1466
  %v1531 = vsel %vm1403, %v1339, %v1467
  %v1532 = vsel %vm1404, %v1340, %v1468
  %v1533 = vsel %vm1405, %v1341, %v1469
  %v1534 = vsel %vm1406, %v1342, %v1470
  %v1535 = vsel %vm1407, %v1343, %v1471
  %v1536 = vsel %vm1408, %v1344, %v1472
  %v1537 = vsel %vm1409, %v1345, %v1473
  %v1538 = vsel %vm1410, %v1346, %v1474
  %v1539 = vsel %vm1411, %v1347, %v1475
  %v1540 = vsel %vm1412, %v1348, %v1476
  %v1541 = vsel %vm1413, %v1349, %v1477
  %v1542 = vsel %vm1414, %v1350, %v1478
  %v1543 = vsel %vm1415, %v1351, %v1479
  %v1544 = vsel %vm1416, %v1352, %v1480
  %v1545 = vpack.c.bf16 %v1481, %v1481
  %v1546 = vpack.c.bf16 %v1482, %v1482
  %v1547 = vpack.c.bf16 %v1483, %v1483
  %v1548 = vpack.c.bf16 %v1484, %v1484
  %v1549 = vpack.c.bf16 %v1485, %v1485
  %v1550 = vpack.c.bf16 %v1486, %v1486
  %v1551 = vpack.c.bf16 %v1487, %v1487
  %v1552 = vpack.c.bf16 %v1488, %v1488
  %v1553 = vpack.c.bf16 %v1489, %v1489
  %v1554 = vpack.c.bf16 %v1490, %v1490
  %v1555 = vpack.c.bf16 %v1491, %v1491
  %v1556 = vpack.c.bf16 %v1492, %v1492
  %v1557 = vpack.c.bf16 %v1493, %v1493
  %v1558 = vpack.c.bf16 %v1494, %v1494
  %v1559 = vpack.c.bf16 %v1495, %v1495
  %v1560 = vpack.c.bf16 %v1496, %v1496
  %v1561 = vpack.c.bf16 %v1497, %v1497
  %v1562 = vpack.c.bf16 %v1498, %v1498
  %v1563 = vpack.c.bf16 %v1499, %v1499
  %v1564 = vpack.c.bf16 %v1500, %v1500
  %v1565 = vpack.c.bf16 %v1501, %v1501
  %v1566 = vpack.c.bf16 %v1502, %v1502
  %v1567 = vpack.c.bf16 %v1503, %v1503
  %v1568 = vpack.c.bf16 %v1504, %v1504
  %v1569 = vpack.c.bf16 %v1505, %v1505
  %v1570 = vpack.c.bf16 %v1506, %v1506
  %v1571 = vpack.c.bf16 %v1507, %v1507
  %v1572 = vpack.c.bf16 %v1508, %v1508
  %v1573 = vpack.c.bf16 %v1509, %v1509
  %v1574 = vpack.c.bf16 %v1510, %v1510
  %v1575 = vpack.c.bf16 %v1511, %v1511
  %v1576 = vpack.c.bf16 %v1512, %v1512
  %v1577 = vpack.c.bf16 %v1513, %v1513
  %v1578 = vpack.c.bf16 %v1514, %v1514
  %v1579 = vpack.c.bf16 %v1515, %v1515
  %v1580 = vpack.c.bf16 %v1516, %v1516
  %v1581 = vpack.c.bf16 %v1517, %v1517
  %v1582 = vpack.c.bf16 %v1518, %v1518
  %v1583 = vpack.c.bf16 %v1519, %v1519
  %v1584 = vpack.c.bf16 %v1520, %v1520
  %v1585 = vpack.c.bf16 %v1521, %v1521
  %v1586 = vpack.c.bf16 %v1522, %v1522
  %v1587 = vpack.c.bf16 %v1523, %v1523
  %v1588 = vpack.c.bf16 %v1524, %v1524
  %v1589 = vpack.c.bf16 %v1525, %v1525
  %v1590 = vpack.c.bf16 %v1526, %v1526
  %v1591 = vpack.c.bf16 %v1527, %v1527
  %v1592 = vpack.c.bf16 %v1528, %v1528
  %v1593 = vpack.c.bf16 %v1529, %v1529
  %v1594 = vpack.c.bf16 %v1530, %v1530
  %v1595 = vpack.c.bf16 %v1531, %v1531
  %v1596 = vpack.c.bf16 %v1532, %v1532
  %v1597 = vpack.c.bf16 %v1533, %v1533
  %v1598 = vpack.c.bf16 %v1534, %v1534
  %v1599 = vpack.c.bf16 %v1535, %v1535
  %v1600 = vpack.c.bf16 %v1536, %v1536
  %v1601 = vpack.c.bf16 %v1537, %v1537
  %v1602 = vpack.c.bf16 %v1538, %v1538
  %v1603 = vpack.c.bf16 %v1539, %v1539
  %v1604 = vpack.c.bf16 %v1540, %v1540
  %v1605 = vpack.c.bf16 %v1541, %v1541
  %v1606 = vpack.c.bf16 %v1542, %v1542
  %v1607 = vpack.c.bf16 %v1543, %v1543
  %v1608 = vpack.c.bf16 %v1544, %v1544
  %vm1609 = vcmask 257024
  %1610 = vst.msk [vmem:[%s4] sm:$0xf] %vm1609, %v1545
  %1611 = vst.msk [vmem:[%s4 + $0x4] sm:$0xf] %vm1609, %v1546
  %1612 = vst.msk [vmem:[%s4 + $0x8] sm:$0xf] %vm1609, %v1547
  %1613 = vst.msk [vmem:[%s4 + $0xc] sm:$0xf] %vm1609, %v1548
  %1614 = vst.msk [vmem:[%s4 + $0x10] sm:$0xf] %vm1609, %v1549
  %1615 = vst.msk [vmem:[%s4 + $0x14] sm:$0xf] %vm1609, %v1550
  %1616 = vst.msk [vmem:[%s4 + $0x18] sm:$0xf] %vm1609, %v1551
  %1617 = vst.msk [vmem:[%s4 + $0x1c] sm:$0xf] %vm1609, %v1552
  %1618 = vst.msk [vmem:[%s4 + $0x20] sm:$0xf] %vm1609, %v1553
  %1619 = vst.msk [vmem:[%s4 + $0x24] sm:$0xf] %vm1609, %v1554
  %1620 = vst.msk [vmem:[%s4 + $0x28] sm:$0xf] %vm1609, %v1555
  %1621 = vst.msk [vmem:[%s4 + $0x2c] sm:$0xf] %vm1609, %v1556
  %1622 = vst.msk [vmem:[%s4 + $0x30] sm:$0xf] %vm1609, %v1557
  %1623 = vst.msk [vmem:[%s4 + $0x34] sm:$0xf] %vm1609, %v1558
  %1624 = vst.msk [vmem:[%s4 + $0x38] sm:$0xf] %vm1609, %v1559
  %1625 = vst.msk [vmem:[%s4 + $0x3c] sm:$0xf] %vm1609, %v1560
  %1626 = vst.msk [vmem:[%s4 + $0x40] sm:$0xf] %vm1609, %v1561
  %1627 = vst.msk [vmem:[%s4 + $0x44] sm:$0xf] %vm1609, %v1562
  %1628 = vst.msk [vmem:[%s4 + $0x48] sm:$0xf] %vm1609, %v1563
  %1629 = vst.msk [vmem:[%s4 + $0x4c] sm:$0xf] %vm1609, %v1564
  %1630 = vst.msk [vmem:[%s4 + $0x50] sm:$0xf] %vm1609, %v1565
  %1631 = vst.msk [vmem:[%s4 + $0x54] sm:$0xf] %vm1609, %v1566
  %1632 = vst.msk [vmem:[%s4 + $0x58] sm:$0xf] %vm1609, %v1567
  %1633 = vst.msk [vmem:[%s4 + $0x5c] sm:$0xf] %vm1609, %v1568
  %1634 = vst.msk [vmem:[%s4 + $0x60] sm:$0xf] %vm1609, %v1569
  %1635 = vst.msk [vmem:[%s4 + $0x64] sm:$0xf] %vm1609, %v1570
  %1636 = vst.msk [vmem:[%s4 + $0x68] sm:$0xf] %vm1609, %v1571
  %1637 = vst.msk [vmem:[%s4 + $0x6c] sm:$0xf] %vm1609, %v1572
  %1638 = vst.msk [vmem:[%s4 + $0x70] sm:$0xf] %vm1609, %v1573
  %1639 = vst.msk [vmem:[%s4 + $0x74] sm:$0xf] %vm1609, %v1574
  %1640 = vst.msk [vmem:[%s4 + $0x78] sm:$0xf] %vm1609, %v1575
  %1641 = vst.msk [vmem:[%s4 + $0x7c] sm:$0xf] %vm1609, %v1576
  %1642 = vst.msk [vmem:[%s4 + $0x80] sm:$0xf] %vm1609, %v1577
  %1643 = vst.msk [vmem:[%s4 + $0x84] sm:$0xf] %vm1609, %v1578
  %1644 = vst.msk [vmem:[%s4 + $0x88] sm:$0xf] %vm1609, %v1579
  %1645 = vst.msk [vmem:[%s4 + $0x8c] sm:$0xf] %vm1609, %v1580
  %1646 = vst.msk [vmem:[%s4 + $0x90] sm:$0xf] %vm1609, %v1581
  %1647 = vst.msk [vmem:[%s4 + $0x94] sm:$0xf] %vm1609, %v1582
  %1648 = vst.msk [vmem:[%s4 + $0x98] sm:$0xf] %vm1609, %v1583
  %1649 = vst.msk [vmem:[%s4 + $0x9c] sm:$0xf] %vm1609, %v1584
  %1650 = vst.msk [vmem:[%s4 + $0xa0] sm:$0xf] %vm1609, %v1585
  %1651 = vst.msk [vmem:[%s4 + $0xa4] sm:$0xf] %vm1609, %v1586
  %1652 = vst.msk [vmem:[%s4 + $0xa8] sm:$0xf] %vm1609, %v1587
  %1653 = vst.msk [vmem:[%s4 + $0xac] sm:$0xf] %vm1609, %v1588
  %1654 = vst.msk [vmem:[%s4 + $0xb0] sm:$0xf] %vm1609, %v1589
  %1655 = vst.msk [vmem:[%s4 + $0xb4] sm:$0xf] %vm1609, %v1590
  %1656 = vst.msk [vmem:[%s4 + $0xb8] sm:$0xf] %vm1609, %v1591
  %1657 = vst.msk [vmem:[%s4 + $0xbc] sm:$0xf] %vm1609, %v1592
  %1658 = vst.msk [vmem:[%s4 + $0xc0] sm:$0xf] %vm1609, %v1593
  %1659 = vst.msk [vmem:[%s4 + $0xc4] sm:$0xf] %vm1609, %v1594
  %1660 = vst.msk [vmem:[%s4 + $0xc8] sm:$0xf] %vm1609, %v1595
  %1661 = vst.msk [vmem:[%s4 + $0xcc] sm:$0xf] %vm1609, %v1596
  %1662 = vst.msk [vmem:[%s4 + $0xd0] sm:$0xf] %vm1609, %v1597
  %1663 = vst.msk [vmem:[%s4 + $0xd4] sm:$0xf] %vm1609, %v1598
  %1664 = vst.msk [vmem:[%s4 + $0xd8] sm:$0xf] %vm1609, %v1599
  %1665 = vst.msk [vmem:[%s4 + $0xdc] sm:$0xf] %vm1609, %v1600
  %1666 = vst.msk [vmem:[%s4 + $0xe0] sm:$0xf] %vm1609, %v1601
  %1667 = vst.msk [vmem:[%s4 + $0xe4] sm:$0xf] %vm1609, %v1602
  %1668 = vst.msk [vmem:[%s4 + $0xe8] sm:$0xf] %vm1609, %v1603
  %1669 = vst.msk [vmem:[%s4 + $0xec] sm:$0xf] %vm1609, %v1604
  %1670 = vst.msk [vmem:[%s4 + $0xf0] sm:$0xf] %vm1609, %v1605
  %1671 = vst.msk [vmem:[%s4 + $0xf4] sm:$0xf] %vm1609, %v1606
  %1672 = vst.msk [vmem:[%s4 + $0xf8] sm:$0xf] %vm1609, %v1607
  %1673 = vst.msk [vmem:[%s4 + $0xfc] sm:$0xf] %vm1609, %v1608
  // Predicated region
  $region18: #{conv_discriminator_forward.5} parent=0 // pred_check
    _
  $region19: #{conv_discriminator_forward.5} parent=0 // pred_check_branch
    %1675 = sbr.rel (0) target = $region21
  $region20: #{conv_discriminator_forward.5} parent=0 // pred_region
    _
  $region21: #{conv_discriminator_forward.5} parent=0 // pred_fallthru
    _
  // Predicated region
  $region22: #{conv_discriminator_forward.5} parent=0 // pred_check
    _
  $region23: #{conv_discriminator_forward.5} parent=0 // pred_check_branch
    %1677 = sbr.rel (0) target = $region25
  $region24: #{conv_discriminator_forward.5} parent=0 // pred_region
    _
  $region25: #{conv_discriminator_forward.5} parent=0 // pred_fallthru
    _

// kernel: conv_discriminator_forward.6
$region0: #{conv_discriminator_forward.6}
  #allocation0 [shape = 'u32[]', space=smem, size = 0x4, offset = 0x4, fixed_abs, tag = 'smem constant byte address 0x4 - core index']
  #allocation1 [shape = 'u32[72,128]{1,0:T(1,128)}', space=vmem, size = 0x9000, scoped, tag = 'internal scratch']
  %s0 = inlined_call_operand.vmem [shape: bf16[128,512], index: 0, kind: input, shape index: {}]
  %s1 = inlined_call_operand.vmem [shape: bf16[512,64], index: 1, kind: input, shape index: {}]
  %s2 = inlined_call_operand.vmem [shape: f32[1,64], index: 2, kind: input, shape index: {}]
  %s3 = inlined_call_operand.vmem [shape: f32[1,64], index: 3, kind: input, shape index: {}]
  %s4 = inlined_call_operand.vmem [shape: bf16[128,64], index: 4, kind: output, shape index: {}]
  %s5 = sld [smem:[#allocation0]]
  $region26: #{conv_discriminator_forward.6} parent=0
    _
  %s7 = ssub.s32 1, %s5
  %s8 = scalar_select 0, %s7, %s5
  // Predicated region
  $region2: #{conv_discriminator_forward.6} parent=0 // pred_check
    _
  $region3: #{conv_discriminator_forward.6} parent=0 // pred_check_branch
    %10 = sbr.rel (0) target = $region5
  $region4: #{conv_discriminator_forward.6} parent=0 // pred_region
    _
  $region5: #{conv_discriminator_forward.6} parent=0 // pred_fallthru
    _
  // Predicated region
  $region6: #{conv_discriminator_forward.6} parent=0 // pred_check
    _
  $region7: #{conv_discriminator_forward.6} parent=0 // pred_check_branch
    %12 = sbr.rel (0) target = $region9
  $region8: #{conv_discriminator_forward.6} parent=0 // pred_region
    _
  $region9: #{conv_discriminator_forward.6} parent=0 // pred_fallthru
    _
  // Predicated region
  $region10: #{conv_discriminator_forward.6} parent=0 // pred_check
    _
  $region11: #{conv_discriminator_forward.6} parent=0 // pred_check_branch
    %14 = sbr.rel (0) target = $region13
  $region12: #{conv_discriminator_forward.6} parent=0 // pred_region
    _
  $region13: #{conv_discriminator_forward.6} parent=0 // pred_fallthru
    _
  // Predicated region
  $region14: #{conv_discriminator_forward.6} parent=0 // pred_check
    _
  $region15: #{conv_discriminator_forward.6} parent=0 // pred_check_branch
    %16 = sbr.rel (0) target = $region17
  $region16: #{conv_discriminator_forward.6} parent=0 // pred_region
    _
  $region17: #{conv_discriminator_forward.6} parent=0 // pred_fallthru
    _
  %v17 = vld [vmem:[%s0] sm:$0xff]
  %v18 = vld [vmem:[%s0 + $0x8] sm:$0xff]
  %v19 = vld [vmem:[%s0 + $0x10] sm:$0xff]
  %v20 = vld [vmem:[%s0 + $0x18] sm:$0xff]
  %v21 = vld [vmem:[%s0 + $0x20] sm:$0xff]
  %v22 = vld [vmem:[%s0 + $0x28] sm:$0xff]
  %v23 = vld [vmem:[%s0 + $0x30] sm:$0xff]
  %v24 = vld [vmem:[%s0 + $0x38] sm:$0xff]
  %v25 = vld [vmem:[%s0 + $0x40] sm:$0xff]
  %v26 = vld [vmem:[%s0 + $0x48] sm:$0xff]
  %v27 = vld [vmem:[%s0 + $0x50] sm:$0xff]
  %v28 = vld [vmem:[%s0 + $0x58] sm:$0xff]
  %v29 = vld [vmem:[%s0 + $0x60] sm:$0xff]
  %v30 = vld [vmem:[%s0 + $0x68] sm:$0xff]
  %v31 = vld [vmem:[%s0 + $0x70] sm:$0xff]
  %v32 = vld [vmem:[%s0 + $0x78] sm:$0xff]
  %v33 = vld [vmem:[%s0 + $0x80] sm:$0xff]
  %v34 = vld [vmem:[%s0 + $0x88] sm:$0xff]
  %v35 = vld [vmem:[%s0 + $0x90] sm:$0xff]
  %v36 = vld [vmem:[%s0 + $0x98] sm:$0xff]
  %v37 = vld [vmem:[%s0 + $0xa0] sm:$0xff]
  %v38 = vld [vmem:[%s0 + $0xa8] sm:$0xff]
  %v39 = vld [vmem:[%s0 + $0xb0] sm:$0xff]
  %v40 = vld [vmem:[%s0 + $0xb8] sm:$0xff]
  %v41 = vld [vmem:[%s0 + $0xc0] sm:$0xff]
  %v42 = vld [vmem:[%s0 + $0xc8] sm:$0xff]
  %v43 = vld [vmem:[%s0 + $0xd0] sm:$0xff]
  %v44 = vld [vmem:[%s0 + $0xd8] sm:$0xff]
  %v45 = vld [vmem:[%s0 + $0xe0] sm:$0xff]
  %v46 = vld [vmem:[%s0 + $0xe8] sm:$0xff]
  %v47 = vld [vmem:[%s0 + $0xf0] sm:$0xff]
  %v48 = vld [vmem:[%s0 + $0xf8] sm:$0xff]
  %v49 = vld [vmem:[%s1] sm:$0xf]
  %v50 = vld [vmem:[%s1 + $0x4] sm:$0xf]
  %v51 = vld [vmem:[%s1 + $0x8] sm:$0xf]
  %v52 = vld [vmem:[%s1 + $0xc] sm:$0xf]
  %v53 = vld [vmem:[%s1 + $0x10] sm:$0xf]
  %v54 = vld [vmem:[%s1 + $0x14] sm:$0xf]
  %v55 = vld [vmem:[%s1 + $0x18] sm:$0xf]
  %v56 = vld [vmem:[%s1 + $0x1c] sm:$0xf]
  %v57 = vld [vmem:[%s1 + $0x20] sm:$0xf]
  %v58 = vld [vmem:[%s1 + $0x24] sm:$0xf]
  %v59 = vld [vmem:[%s1 + $0x28] sm:$0xf]
  %v60 = vld [vmem:[%s1 + $0x2c] sm:$0xf]
  %v61 = vld [vmem:[%s1 + $0x30] sm:$0xf]
  %v62 = vld [vmem:[%s1 + $0x34] sm:$0xf]
  %v63 = vld [vmem:[%s1 + $0x38] sm:$0xf]
  %v64 = vld [vmem:[%s1 + $0x3c] sm:$0xf]
  %v65 = vld [vmem:[%s1 + $0x40] sm:$0xf]
  %v66 = vld [vmem:[%s1 + $0x44] sm:$0xf]
  %v67 = vld [vmem:[%s1 + $0x48] sm:$0xf]
  %v68 = vld [vmem:[%s1 + $0x4c] sm:$0xf]
  %v69 = vld [vmem:[%s1 + $0x50] sm:$0xf]
  %v70 = vld [vmem:[%s1 + $0x54] sm:$0xf]
  %v71 = vld [vmem:[%s1 + $0x58] sm:$0xf]
  %v72 = vld [vmem:[%s1 + $0x5c] sm:$0xf]
  %v73 = vld [vmem:[%s1 + $0x60] sm:$0xf]
  %v74 = vld [vmem:[%s1 + $0x64] sm:$0xf]
  %v75 = vld [vmem:[%s1 + $0x68] sm:$0xf]
  %v76 = vld [vmem:[%s1 + $0x6c] sm:$0xf]
  %v77 = vld [vmem:[%s1 + $0x70] sm:$0xf]
  %v78 = vld [vmem:[%s1 + $0x74] sm:$0xf]
  %v79 = vld [vmem:[%s1 + $0x78] sm:$0xf]
  %v80 = vld [vmem:[%s1 + $0x7c] sm:$0xf]
  %v81 = vld [vmem:[%s1 + $0x80] sm:$0xf]
  %v82 = vld [vmem:[%s1 + $0x84] sm:$0xf]
  %v83 = vld [vmem:[%s1 + $0x88] sm:$0xf]
  %v84 = vld [vmem:[%s1 + $0x8c] sm:$0xf]
  %v85 = vld [vmem:[%s1 + $0x90] sm:$0xf]
  %v86 = vld [vmem:[%s1 + $0x94] sm:$0xf]
  %v87 = vld [vmem:[%s1 + $0x98] sm:$0xf]
  %v88 = vld [vmem:[%s1 + $0x9c] sm:$0xf]
  %v89 = vld [vmem:[%s1 + $0xa0] sm:$0xf]
  %v90 = vld [vmem:[%s1 + $0xa4] sm:$0xf]
  %v91 = vld [vmem:[%s1 + $0xa8] sm:$0xf]
  %v92 = vld [vmem:[%s1 + $0xac] sm:$0xf]
  %v93 = vld [vmem:[%s1 + $0xb0] sm:$0xf]
  %v94 = vld [vmem:[%s1 + $0xb4] sm:$0xf]
  %v95 = vld [vmem:[%s1 + $0xb8] sm:$0xf]
  %v96 = vld [vmem:[%s1 + $0xbc] sm:$0xf]
  %v97 = vld [vmem:[%s1 + $0xc0] sm:$0xf]
  %v98 = vld [vmem:[%s1 + $0xc4] sm:$0xf]
  %v99 = vld [vmem:[%s1 + $0xc8] sm:$0xf]
  %v100 = vld [vmem:[%s1 + $0xcc] sm:$0xf]
  %v101 = vld [vmem:[%s1 + $0xd0] sm:$0xf]
  %v102 = vld [vmem:[%s1 + $0xd4] sm:$0xf]
  %v103 = vld [vmem:[%s1 + $0xd8] sm:$0xf]
  %v104 = vld [vmem:[%s1 + $0xdc] sm:$0xf]
  %v105 = vld [vmem:[%s1 + $0xe0] sm:$0xf]
  %v106 = vld [vmem:[%s1 + $0xe4] sm:$0xf]
  %v107 = vld [vmem:[%s1 + $0xe8] sm:$0xf]
  %v108 = vld [vmem:[%s1 + $0xec] sm:$0xf]
  %v109 = vld [vmem:[%s1 + $0xf0] sm:$0xf]
  %v110 = vld [vmem:[%s1 + $0xf4] sm:$0xf]
  %v111 = vld [vmem:[%s1 + $0xf8] sm:$0xf]
  %v112 = vld [vmem:[%s1 + $0xfc] sm:$0xf]
  %v145 = vunpack.c.l.b16 %v17
  %v146 = vunpack.c.h.b16 %v17
  %v147 = vunpack.c.l.b16 %v18
  %v148 = vunpack.c.h.b16 %v18
  %v149 = vunpack.c.l.b16 %v19
  %v150 = vunpack.c.h.b16 %v19
  %v151 = vunpack.c.l.b16 %v20
  %v152 = vunpack.c.h.b16 %v20
  %v153 = vunpack.c.l.b16 %v21
  %v154 = vunpack.c.h.b16 %v21
  %v155 = vunpack.c.l.b16 %v22
  %v156 = vunpack.c.h.b16 %v22
  %v157 = vunpack.c.l.b16 %v23
  %v158 = vunpack.c.h.b16 %v23
  %v159 = vunpack.c.l.b16 %v24
  %v160 = vunpack.c.h.b16 %v24
  %v161 = vunpack.c.l.b16 %v25
  %v162 = vunpack.c.h.b16 %v25
  %v163 = vunpack.c.l.b16 %v26
  %v164 = vunpack.c.h.b16 %v26
  %v165 = vunpack.c.l.b16 %v27
  %v166 = vunpack.c.h.b16 %v27
  %v167 = vunpack.c.l.b16 %v28
  %v168 = vunpack.c.h.b16 %v28
  %v169 = vunpack.c.l.b16 %v29
  %v170 = vunpack.c.h.b16 %v29
  %v171 = vunpack.c.l.b16 %v30
  %v172 = vunpack.c.h.b16 %v30
  %v173 = vunpack.c.l.b16 %v31
  %v174 = vunpack.c.h.b16 %v31
  %v175 = vunpack.c.l.b16 %v32
  %v176 = vunpack.c.h.b16 %v32
  %v177 = vunpack.c.l.b16 %v33
  %v178 = vunpack.c.h.b16 %v33
  %v179 = vunpack.c.l.b16 %v34
  %v180 = vunpack.c.h.b16 %v34
  %v181 = vunpack.c.l.b16 %v35
  %v182 = vunpack.c.h.b16 %v35
  %v183 = vunpack.c.l.b16 %v36
  %v184 = vunpack.c.h.b16 %v36
  %v185 = vunpack.c.l.b16 %v37
  %v186 = vunpack.c.h.b16 %v37
  %v187 = vunpack.c.l.b16 %v38
  %v188 = vunpack.c.h.b16 %v38
  %v189 = vunpack.c.l.b16 %v39
  %v190 = vunpack.c.h.b16 %v39
  %v191 = vunpack.c.l.b16 %v40
  %v192 = vunpack.c.h.b16 %v40
  %v193 = vunpack.c.l.b16 %v41
  %v194 = vunpack.c.h.b16 %v41
  %v195 = vunpack.c.l.b16 %v42
  %v196 = vunpack.c.h.b16 %v42
  %v197 = vunpack.c.l.b16 %v43
  %v198 = vunpack.c.h.b16 %v43
  %v199 = vunpack.c.l.b16 %v44
  %v200 = vunpack.c.h.b16 %v44
  %v201 = vunpack.c.l.b16 %v45
  %v202 = vunpack.c.h.b16 %v45
  %v203 = vunpack.c.l.b16 %v46
  %v204 = vunpack.c.h.b16 %v46
  %v205 = vunpack.c.l.b16 %v47
  %v206 = vunpack.c.h.b16 %v47
  %v207 = vunpack.c.l.b16 %v48
  %v208 = vunpack.c.h.b16 %v48
  %v209 = vpack.c.b16 %v149, %v145
  %v210 = vpack.c.b16 %v150, %v146
  %v211 = vpack.c.b16 %v151, %v147
  %v212 = vpack.c.b16 %v152, %v148
  %v213 = vpack.c.b16 %v157, %v153
  %v214 = vpack.c.b16 %v158, %v154
  %v215 = vpack.c.b16 %v159, %v155
  %v216 = vpack.c.b16 %v160, %v156
  %v217 = vpack.c.b16 %v165, %v161
  %v218 = vpack.c.b16 %v166, %v162
  %v219 = vpack.c.b16 %v167, %v163
  %v220 = vpack.c.b16 %v168, %v164
  %v221 = vpack.c.b16 %v173, %v169
  %v222 = vpack.c.b16 %v174, %v170
  %v223 = vpack.c.b16 %v175, %v171
  %v224 = vpack.c.b16 %v176, %v172
  %v225 = vpack.c.b16 %v181, %v177
  %v226 = vpack.c.b16 %v182, %v178
  %v227 = vpack.c.b16 %v183, %v179
  %v228 = vpack.c.b16 %v184, %v180
  %v229 = vpack.c.b16 %v189, %v185
  %v230 = vpack.c.b16 %v190, %v186
  %v231 = vpack.c.b16 %v191, %v187
  %v232 = vpack.c.b16 %v192, %v188
  %v233 = vpack.c.b16 %v197, %v193
  %v234 = vpack.c.b16 %v198, %v194
  %v235 = vpack.c.b16 %v199, %v195
  %v236 = vpack.c.b16 %v200, %v196
  %v237 = vpack.c.b16 %v205, %v201
  %v238 = vpack.c.b16 %v206, %v202
  %v239 = vpack.c.b16 %v207, %v203
  %v240 = vpack.c.b16 %v208, %v204
  %v337 = vunpack.c.l.b16 %v49
  %v338 = vunpack.c.l.b16 %v50
  %v339 = vunpack.c.l.b16 %v51
  %v340 = vunpack.c.l.b16 %v52
  %v341 = vunpack.c.l.b16 %v53
  %v342 = vunpack.c.l.b16 %v54
  %v343 = vunpack.c.l.b16 %v55
  %v344 = vunpack.c.l.b16 %v56
  %v345 = vunpack.c.l.b16 %v57
  %v346 = vunpack.c.l.b16 %v58
  %v347 = vunpack.c.l.b16 %v59
  %v348 = vunpack.c.l.b16 %v60
  %v349 = vunpack.c.l.b16 %v61
  %v350 = vunpack.c.l.b16 %v62
  %v351 = vunpack.c.l.b16 %v63
  %v352 = vunpack.c.l.b16 %v64
  %v353 = vunpack.c.l.b16 %v65
  %v354 = vunpack.c.l.b16 %v66
  %v355 = vunpack.c.l.b16 %v67
  %v356 = vunpack.c.l.b16 %v68
  %v357 = vunpack.c.l.b16 %v69
  %v358 = vunpack.c.l.b16 %v70
  %v359 = vunpack.c.l.b16 %v71
  %v360 = vunpack.c.l.b16 %v72
  %v361 = vunpack.c.l.b16 %v73
  %v362 = vunpack.c.l.b16 %v74
  %v363 = vunpack.c.l.b16 %v75
  %v364 = vunpack.c.l.b16 %v76
  %v365 = vunpack.c.l.b16 %v77
  %v366 = vunpack.c.l.b16 %v78
  %v367 = vunpack.c.l.b16 %v79
  %v368 = vunpack.c.l.b16 %v80
  %v369 = vunpack.c.l.b16 %v81
  %v370 = vunpack.c.l.b16 %v82
  %v371 = vunpack.c.l.b16 %v83
  %v372 = vunpack.c.l.b16 %v84
  %v373 = vunpack.c.l.b16 %v85
  %v374 = vunpack.c.l.b16 %v86
  %v375 = vunpack.c.l.b16 %v87
  %v376 = vunpack.c.l.b16 %v88
  %v377 = vunpack.c.l.b16 %v89
  %v378 = vunpack.c.l.b16 %v90
  %v379 = vunpack.c.l.b16 %v91
  %v380 = vunpack.c.l.b16 %v92
  %v381 = vunpack.c.l.b16 %v93
  %v382 = vunpack.c.l.b16 %v94
  %v383 = vunpack.c.l.b16 %v95
  %v384 = vunpack.c.l.b16 %v96
  %v385 = vunpack.c.l.b16 %v97
  %v386 = vunpack.c.l.b16 %v98
  %v387 = vunpack.c.l.b16 %v99
  %v388 = vunpack.c.l.b16 %v100
  %v389 = vunpack.c.l.b16 %v101
  %v390 = vunpack.c.l.b16 %v102
  %v391 = vunpack.c.l.b16 %v103
  %v392 = vunpack.c.l.b16 %v104
  %v393 = vunpack.c.l.b16 %v105
  %v394 = vunpack.c.l.b16 %v106
  %v395 = vunpack.c.l.b16 %v107
  %v396 = vunpack.c.l.b16 %v108
  %v397 = vunpack.c.l.b16 %v109
  %v398 = vunpack.c.l.b16 %v110
  %v399 = vunpack.c.l.b16 %v111
  %v400 = vunpack.c.l.b16 %v112
  %v401 = vpack.c.b16 %v338, %v337
  %v402 = vpack.c.b16 %v340, %v339
  %v403 = vpack.c.b16 %v342, %v341
  %v404 = vpack.c.b16 %v344, %v343
  %v405 = vpack.c.b16 %v346, %v345
  %v406 = vpack.c.b16 %v348, %v347
  %v407 = vpack.c.b16 %v350, %v349
  %v408 = vpack.c.b16 %v352, %v351
  %v409 = vpack.c.b16 %v354, %v353
  %v410 = vpack.c.b16 %v356, %v355
  %v411 = vpack.c.b16 %v358, %v357
  %v412 = vpack.c.b16 %v360, %v359
  %v413 = vpack.c.b16 %v362, %v361
  %v414 = vpack.c.b16 %v364, %v363
  %v415 = vpack.c.b16 %v366, %v365
  %v416 = vpack.c.b16 %v368, %v367
  %v417 = vpack.c.b16 %v370, %v369
  %v418 = vpack.c.b16 %v372, %v371
  %v419 = vpack.c.b16 %v374, %v373
  %v420 = vpack.c.b16 %v376, %v375
  %v421 = vpack.c.b16 %v378, %v377
  %v422 = vpack.c.b16 %v380, %v379
  %v423 = vpack.c.b16 %v382, %v381
  %v424 = vpack.c.b16 %v384, %v383
  %v425 = vpack.c.b16 %v386, %v385
  %v426 = vpack.c.b16 %v388, %v387
  %v427 = vpack.c.b16 %v390, %v389
  %v428 = vpack.c.b16 %v392, %v391
  %v429 = vpack.c.b16 %v394, %v393
  %v430 = vpack.c.b16 %v396, %v395
  %v431 = vpack.c.b16 %v398, %v397
  %v432 = vpack.c.b16 %v400, %v399
  %465 = vmatpush.bf16.msra.mxu0 %v408
  %466 = vmatpush.bf16.msra.mxu0 %v407
  %467 = vmatpush.bf16.msra.mxu0 %v406
  %468 = vmatpush.bf16.msra.mxu0 %v405
  %469 = vmatpush.bf16.msra.mxu0 %v404
  %470 = vmatpush.bf16.msra.mxu0 %v403
  %471 = vmatpush.bf16.msra.mxu0 %v402
  %472 = vmatpush.bf16.msra.mxu0 %v401
  %473 = vmatmul.bf16.gmra.mxu0 %v209
  %v474 = vpop.f32.mrf.mxu0
  %v475 = vadd.f32 0.0, %v474
  %v476 = vpop.f32.mrf.mxu0
  %v477 = vadd.f32 0.0, %v476
  %478 = vmatmul.bf16.gmra.mxu0 %v213
  %v479 = vpop.f32.mrf.mxu0
  %v480 = vadd.f32 0.0, %v479
  %v481 = vpop.f32.mrf.mxu0
  %v482 = vadd.f32 0.0, %v481
  %483 = vmatmul.bf16.gmra.mxu0 %v217
  %v484 = vpop.f32.mrf.mxu0
  %v485 = vadd.f32 0.0, %v484
  %v486 = vpop.f32.mrf.mxu0
  %v487 = vadd.f32 0.0, %v486
  %488 = vmatmul.bf16.gmra.mxu0 %v221
  %v489 = vpop.f32.mrf.mxu0
  %v490 = vadd.f32 0.0, %v489
  %v491 = vpop.f32.mrf.mxu0
  %v492 = vadd.f32 0.0, %v491
  %493 = vmatmul.bf16.gmra.mxu0 %v225
  %v494 = vpop.f32.mrf.mxu0
  %v495 = vadd.f32 0.0, %v494
  %v496 = vpop.f32.mrf.mxu0
  %v497 = vadd.f32 0.0, %v496
  %498 = vmatmul.bf16.gmra.mxu0 %v229
  %v499 = vpop.f32.mrf.mxu0
  %v500 = vadd.f32 0.0, %v499
  %v501 = vpop.f32.mrf.mxu0
  %v502 = vadd.f32 0.0, %v501
  %503 = vmatmul.bf16.gmra.mxu0 %v233
  %v504 = vpop.f32.mrf.mxu0
  %v505 = vadd.f32 0.0, %v504
  %v506 = vpop.f32.mrf.mxu0
  %v507 = vadd.f32 0.0, %v506
  %508 = vmatmul.bf16.gmra.mxu0 %v237
  %v509 = vpop.f32.mrf.mxu0
  %v510 = vadd.f32 0.0, %v509
  %v511 = vpop.f32.mrf.mxu0
  %v512 = vadd.f32 0.0, %v511
  %513 = vdwg.mxu0
  %514 = vmatpush.bf16.msra.mxu0 %v416
  %515 = vmatpush.bf16.msra.mxu0 %v415
  %516 = vmatpush.bf16.msra.mxu0 %v414
  %517 = vmatpush.bf16.msra.mxu0 %v413
  %518 = vmatpush.bf16.msra.mxu0 %v412
  %519 = vmatpush.bf16.msra.mxu0 %v411
  %520 = vmatpush.bf16.msra.mxu0 %v410
  %521 = vmatpush.bf16.msra.mxu0 %v409
  %522 = vmatmul.bf16.gmra.mxu0 %v210
  %v523 = vpop.f32.mrf.mxu0
  %v524 = vadd.f32 %v475, %v523
  %v525 = vpop.f32.mrf.mxu0
  %v526 = vadd.f32 %v477, %v525
  %527 = vmatmul.bf16.gmra.mxu0 %v214
  %v528 = vpop.f32.mrf.mxu0
  %v529 = vadd.f32 %v480, %v528
  %v530 = vpop.f32.mrf.mxu0
  %v531 = vadd.f32 %v482, %v530
  %532 = vmatmul.bf16.gmra.mxu0 %v218
  %v533 = vpop.f32.mrf.mxu0
  %v534 = vadd.f32 %v485, %v533
  %v535 = vpop.f32.mrf.mxu0
  %v536 = vadd.f32 %v487, %v535
  %537 = vmatmul.bf16.gmra.mxu0 %v222
  %v538 = vpop.f32.mrf.mxu0
  %v539 = vadd.f32 %v490, %v538
  %v540 = vpop.f32.mrf.mxu0
  %v541 = vadd.f32 %v492, %v540
  %542 = vmatmul.bf16.gmra.mxu0 %v226
  %v543 = vpop.f32.mrf.mxu0
  %v544 = vadd.f32 %v495, %v543
  %v545 = vpop.f32.mrf.mxu0
  %v546 = vadd.f32 %v497, %v545
  %547 = vmatmul.bf16.gmra.mxu0 %v230
  %v548 = vpop.f32.mrf.mxu0
  %v549 = vadd.f32 %v500, %v548
  %v550 = vpop.f32.mrf.mxu0
  %v551 = vadd.f32 %v502, %v550
  %552 = vmatmul.bf16.gmra.mxu0 %v234
  %v553 = vpop.f32.mrf.mxu0
  %v554 = vadd.f32 %v505, %v553
  %v555 = vpop.f32.mrf.mxu0
  %v556 = vadd.f32 %v507, %v555
  %557 = vmatmul.bf16.gmra.mxu0 %v238
  %v558 = vpop.f32.mrf.mxu0
  %v559 = vadd.f32 %v510, %v558
  %v560 = vpop.f32.mrf.mxu0
  %v561 = vadd.f32 %v512, %v560
  %562 = vdwg.mxu0
  %563 = vmatpush.bf16.msra.mxu0 %v424
  %564 = vmatpush.bf16.msra.mxu0 %v423
  %565 = vmatpush.bf16.msra.mxu0 %v422
  %566 = vmatpush.bf16.msra.mxu0 %v421
  %567 = vmatpush.bf16.msra.mxu0 %v420
  %568 = vmatpush.bf16.msra.mxu0 %v419
  %569 = vmatpush.bf16.msra.mxu0 %v418
  %570 = vmatpush.bf16.msra.mxu0 %v417
  %571 = vmatmul.bf16.gmra.mxu0 %v211
  %v572 = vpop.f32.mrf.mxu0
  %v573 = vadd.f32 %v524, %v572
  %v574 = vpop.f32.mrf.mxu0
  %v575 = vadd.f32 %v526, %v574
  %576 = vmatmul.bf16.gmra.mxu0 %v215
  %v577 = vpop.f32.mrf.mxu0
  %v578 = vadd.f32 %v529, %v577
  %v579 = vpop.f32.mrf.mxu0
  %v580 = vadd.f32 %v531, %v579
  %581 = vmatmul.bf16.gmra.mxu0 %v219
  %v582 = vpop.f32.mrf.mxu0
  %v583 = vadd.f32 %v534, %v582
  %v584 = vpop.f32.mrf.mxu0
  %v585 = vadd.f32 %v536, %v584
  %586 = vmatmul.bf16.gmra.mxu0 %v223
  %v587 = vpop.f32.mrf.mxu0
  %v588 = vadd.f32 %v539, %v587
  %v589 = vpop.f32.mrf.mxu0
  %v590 = vadd.f32 %v541, %v589
  %591 = vmatmul.bf16.gmra.mxu0 %v227
  %v592 = vpop.f32.mrf.mxu0
  %v593 = vadd.f32 %v544, %v592
  %v594 = vpop.f32.mrf.mxu0
  %v595 = vadd.f32 %v546, %v594
  %596 = vmatmul.bf16.gmra.mxu0 %v231
  %v597 = vpop.f32.mrf.mxu0
  %v598 = vadd.f32 %v549, %v597
  %v599 = vpop.f32.mrf.mxu0
  %v600 = vadd.f32 %v551, %v599
  %601 = vmatmul.bf16.gmra.mxu0 %v235
  %v602 = vpop.f32.mrf.mxu0
  %v603 = vadd.f32 %v554, %v602
  %v604 = vpop.f32.mrf.mxu0
  %v605 = vadd.f32 %v556, %v604
  %606 = vmatmul.bf16.gmra.mxu0 %v239
  %v607 = vpop.f32.mrf.mxu0
  %v608 = vadd.f32 %v559, %v607
  %v609 = vpop.f32.mrf.mxu0
  %v610 = vadd.f32 %v561, %v609
  %611 = vdwg.mxu0
  %612 = vmatpush.bf16.msra.mxu0 %v432
  %613 = vmatpush.bf16.msra.mxu0 %v431
  %614 = vmatpush.bf16.msra.mxu0 %v430
  %615 = vmatpush.bf16.msra.mxu0 %v429
  %616 = vmatpush.bf16.msra.mxu0 %v428
  %617 = vmatpush.bf16.msra.mxu0 %v427
  %618 = vmatpush.bf16.msra.mxu0 %v426
  %619 = vmatpush.bf16.msra.mxu0 %v425
  %620 = vmatmul.bf16.gmra.mxu0 %v212
  %v621 = vpop.f32.mrf.mxu0
  %v622 = vadd.f32 %v573, %v621
  %v623 = vpop.f32.mrf.mxu0
  %v624 = vadd.f32 %v575, %v623
  %625 = vmatmul.bf16.gmra.mxu0 %v216
  %v626 = vpop.f32.mrf.mxu0
  %v627 = vadd.f32 %v578, %v626
  %v628 = vpop.f32.mrf.mxu0
  %v629 = vadd.f32 %v580, %v628
  %630 = vmatmul.bf16.gmra.mxu0 %v220
  %v631 = vpop.f32.mrf.mxu0
  %v632 = vadd.f32 %v583, %v631
  %v633 = vpop.f32.mrf.mxu0
  %v634 = vadd.f32 %v585, %v633
  %635 = vmatmul.bf16.gmra.mxu0 %v224
  %v636 = vpop.f32.mrf.mxu0
  %v637 = vadd.f32 %v588, %v636
  %v638 = vpop.f32.mrf.mxu0
  %v639 = vadd.f32 %v590, %v638
  %640 = vmatmul.bf16.gmra.mxu0 %v228
  %v641 = vpop.f32.mrf.mxu0
  %v642 = vadd.f32 %v593, %v641
  %v643 = vpop.f32.mrf.mxu0
  %v644 = vadd.f32 %v595, %v643
  %645 = vmatmul.bf16.gmra.mxu0 %v232
  %v646 = vpop.f32.mrf.mxu0
  %v647 = vadd.f32 %v598, %v646
  %v648 = vpop.f32.mrf.mxu0
  %v649 = vadd.f32 %v600, %v648
  %650 = vmatmul.bf16.gmra.mxu0 %v236
  %v651 = vpop.f32.mrf.mxu0
  %v652 = vadd.f32 %v603, %v651
  %v653 = vpop.f32.mrf.mxu0
  %v654 = vadd.f32 %v605, %v653
  %655 = vmatmul.bf16.gmra.mxu0 %v240
  %v656 = vpop.f32.mrf.mxu0
  %v657 = vadd.f32 %v608, %v656
  %v658 = vpop.f32.mrf.mxu0
  %v659 = vadd.f32 %v610, %v658
  %660 = vdwg.mxu0
  %vm661 = vcmask 523264
  %v662 = vsel %vm661, %v622, 0.0
  %v663 = vsel %vm661, %v624, 0.0
  %v664 = vadd.f32 %v662, %v663
  %v665 = vsel %vm661, %v627, 0.0
  %v666 = vadd.f32 %v664, %v665
  %v667 = vsel %vm661, %v629, 0.0
  %v668 = vadd.f32 %v666, %v667
  %v669 = vsel %vm661, %v632, 0.0
  %v670 = vadd.f32 %v668, %v669
  %v671 = vsel %vm661, %v634, 0.0
  %v672 = vadd.f32 %v670, %v671
  %v673 = vsel %vm661, %v637, 0.0
  %v674 = vadd.f32 %v672, %v673
  %v675 = vsel %vm661, %v639, 0.0
  %v676 = vadd.f32 %v674, %v675
  %v677 = vsel %vm661, %v642, 0.0
  %v678 = vadd.f32 %v676, %v677
  %v679 = vsel %vm661, %v644, 0.0
  %v680 = vadd.f32 %v678, %v679
  %v681 = vsel %vm661, %v647, 0.0
  %v682 = vadd.f32 %v680, %v681
  %v683 = vsel %vm661, %v649, 0.0
  %v684 = vadd.f32 %v682, %v683
  %v685 = vsel %vm661, %v652, 0.0
  %v686 = vadd.f32 %v684, %v685
  %v687 = vsel %vm661, %v654, 0.0
  %v688 = vadd.f32 %v686, %v687
  %v689 = vsel %vm661, %v657, 0.0
  %v690 = vadd.f32 %v688, %v689
  %v691 = vsel %vm661, %v659, 0.0
  %v692 = vadd.f32 %v690, %v691
  %v693 = vrot.slane %v692, 4
  %v694 = vadd.f32 %v692, %v693
  %v695 = vrot.slane %v694, 2
  %v696 = vadd.f32 %v694, %v695
  %v697 = vrot.slane %v696, 1
  %v698 = vadd.f32 %v696, %v697
  %v699 = vmul.f32 %v698, 0.0078125
  %v700 = vmul.f32 %v622, %v622
  %v701 = vmul.f32 %v624, %v624
  %v702 = vmul.f32 %v627, %v627
  %v703 = vmul.f32 %v629, %v629
  %v704 = vmul.f32 %v632, %v632
  %v705 = vmul.f32 %v634, %v634
  %v706 = vmul.f32 %v637, %v637
  %v707 = vmul.f32 %v639, %v639
  %v708 = vmul.f32 %v642, %v642
  %v709 = vmul.f32 %v644, %v644
  %v710 = vmul.f32 %v647, %v647
  %v711 = vmul.f32 %v649, %v649
  %v712 = vmul.f32 %v652, %v652
  %v713 = vmul.f32 %v654, %v654
  %v714 = vmul.f32 %v657, %v657
  %v715 = vmul.f32 %v659, %v659
  %v716 = vsel %vm661, %v700, 0.0
  %v717 = vsel %vm661, %v701, 0.0
  %v718 = vadd.f32 %v716, %v717
  %v719 = vsel %vm661, %v702, 0.0
  %v720 = vadd.f32 %v718, %v719
  %v721 = vsel %vm661, %v703, 0.0
  %v722 = vadd.f32 %v720, %v721
  %v723 = vsel %vm661, %v704, 0.0
  %v724 = vadd.f32 %v722, %v723
  %v725 = vsel %vm661, %v705, 0.0
  %v726 = vadd.f32 %v724, %v725
  %v727 = vsel %vm661, %v706, 0.0
  %v728 = vadd.f32 %v726, %v727
  %v729 = vsel %vm661, %v707, 0.0
  %v730 = vadd.f32 %v728, %v729
  %v731 = vsel %vm661, %v708, 0.0
  %v732 = vadd.f32 %v730, %v731
  %v733 = vsel %vm661, %v709, 0.0
  %v734 = vadd.f32 %v732, %v733
  %v735 = vsel %vm661, %v710, 0.0
  %v736 = vadd.f32 %v734, %v735
  %v737 = vsel %vm661, %v711, 0.0
  %v738 = vadd.f32 %v736, %v737
  %v739 = vsel %vm661, %v712, 0.0
  %v740 = vadd.f32 %v738, %v739
  %v741 = vsel %vm661, %v713, 0.0
  %v742 = vadd.f32 %v740, %v741
  %v743 = vsel %vm661, %v714, 0.0
  %v744 = vadd.f32 %v742, %v743
  %v745 = vsel %vm661, %v715, 0.0
  %v746 = vadd.f32 %v744, %v745
  %v747 = vrot.slane %v746, 4
  %v748 = vadd.f32 %v746, %v747
  %v749 = vrot.slane %v748, 2
  %v750 = vadd.f32 %v748, %v749
  %v751 = vrot.slane %v750, 1
  %v752 = vadd.f32 %v750, %v751
  %v753 = vmul.f32 %v752, 0.0078125
  %v754 = vmul.f32 %v699, %v699
  %v755 = vsub.f32 %v753, %v754
  %v756 = vmax.f32 %v755, 0.0
  %v757 = vadd.f32 %v756, 1e-05
  %v758 = vrsqrt.pop %v757
  %v759 = vmul.f32 %v758, %v757
  %v760 = vmul.f32 %v759, %v758
  %v761 = vmul.f32 0.5, %v760
  %v762 = vsub.f32 1.5, %v761
  %v763 = vmul.f32 %v758, %v762
  %vm764 = vweird.f32 %v757
  %vm765 = vweird.f32 %v758
  %vm766 = vmor %vm764, %vm765
  %v767 = vsel %vm766, %v758, %v763
  %v768 = vld [vmem:[%s2] sm:$0x1]
  %v769 = vmul.f32 %v768, %v767
  %v770 = vld [vmem:[%s3] sm:$0x1]
  %v771 = vmul.f32 %v699, %v769
  %v772 = vsub.f32 %v770, %v771
  %v774 = vperm.slane %v769, 0
  %v776 = vmul.f32 %v622, %v774
  %v777 = vmul.f32 %v624, %v774
  %v778 = vmul.f32 %v627, %v774
  %v779 = vmul.f32 %v629, %v774
  %v780 = vmul.f32 %v632, %v774
  %v781 = vmul.f32 %v634, %v774
  %v782 = vmul.f32 %v637, %v774
  %v783 = vmul.f32 %v639, %v774
  %v784 = vmul.f32 %v642, %v774
  %v785 = vmul.f32 %v644, %v774
  %v786 = vmul.f32 %v647, %v774
  %v787 = vmul.f32 %v649, %v774
  %v788 = vmul.f32 %v652, %v774
  %v789 = vmul.f32 %v654, %v774
  %v790 = vmul.f32 %v657, %v774
  %v791 = vmul.f32 %v659, %v774
  %v793 = vperm.slane %v772, 0
  %v795 = vadd.f32 %v776, %v793
  %v796 = vadd.f32 %v777, %v793
  %v797 = vadd.f32 %v778, %v793
  %v798 = vadd.f32 %v779, %v793
  %v799 = vadd.f32 %v780, %v793
  %v800 = vadd.f32 %v781, %v793
  %v801 = vadd.f32 %v782, %v793
  %v802 = vadd.f32 %v783, %v793
  %v803 = vadd.f32 %v784, %v793
  %v804 = vadd.f32 %v785, %v793
  %v805 = vadd.f32 %v786, %v793
  %v806 = vadd.f32 %v787, %v793
  %v807 = vadd.f32 %v788, %v793
  %v808 = vadd.f32 %v789, %v793
  %v809 = vadd.f32 %v790, %v793
  %v810 = vadd.f32 %v791, %v793
  %vm811 = vcmp.gt.f32.partialorder %v795, 0.0
  %vm812 = vcmp.gt.f32.partialorder %v796, 0.0
  %vm813 = vcmp.gt.f32.partialorder %v797, 0.0
  %vm814 = vcmp.gt.f32.partialorder %v798, 0.0
  %vm815 = vcmp.gt.f32.partialorder %v799, 0.0
  %vm816 = vcmp.gt.f32.partialorder %v800, 0.0
  %vm817 = vcmp.gt.f32.partialorder %v801, 0.0
  %vm818 = vcmp.gt.f32.partialorder %v802, 0.0
  %vm819 = vcmp.gt.f32.partialorder %v803, 0.0
  %vm820 = vcmp.gt.f32.partialorder %v804, 0.0
  %vm821 = vcmp.gt.f32.partialorder %v805, 0.0
  %vm822 = vcmp.gt.f32.partialorder %v806, 0.0
  %vm823 = vcmp.gt.f32.partialorder %v807, 0.0
  %vm824 = vcmp.gt.f32.partialorder %v808, 0.0
  %vm825 = vcmp.gt.f32.partialorder %v809, 0.0
  %vm826 = vcmp.gt.f32.partialorder %v810, 0.0
  %v827 = vmul.f32 %v795, 0.2
  %v828 = vmul.f32 %v796, 0.2
  %v829 = vmul.f32 %v797, 0.2
  %v830 = vmul.f32 %v798, 0.2
  %v831 = vmul.f32 %v799, 0.2
  %v832 = vmul.f32 %v800, 0.2
  %v833 = vmul.f32 %v801, 0.2
  %v834 = vmul.f32 %v802, 0.2
  %v835 = vmul.f32 %v803, 0.2
  %v836 = vmul.f32 %v804, 0.2
  %v837 = vmul.f32 %v805, 0.2
  %v838 = vmul.f32 %v806, 0.2
  %v839 = vmul.f32 %v807, 0.2
  %v840 = vmul.f32 %v808, 0.2
  %v841 = vmul.f32 %v809, 0.2
  %v842 = vmul.f32 %v810, 0.2
  %v843 = vsel %vm811, %v795, %v827
  %v844 = vsel %vm812, %v796, %v828
  %v845 = vsel %vm813, %v797, %v829
  %v846 = vsel %vm814, %v798, %v830
  %v847 = vsel %vm815, %v799, %v831
  %v848 = vsel %vm816, %v800, %v832
  %v849 = vsel %vm817, %v801, %v833
  %v850 = vsel %vm818, %v802, %v834
  %v851 = vsel %vm819, %v803, %v835
  %v852 = vsel %vm820, %v804, %v836
  %v853 = vsel %vm821, %v805, %v837
  %v854 = vsel %vm822, %v806, %v838
  %v855 = vsel %vm823, %v807, %v839
  %v856 = vsel %vm824, %v808, %v840
  %v857 = vsel %vm825, %v809, %v841
  %v858 = vsel %vm826, %v810, %v842
  %v859 = vpack.c.bf16 %v843, %v843
  %v860 = vpack.c.bf16 %v844, %v844
  %v861 = vpack.c.bf16 %v845, %v845
  %v862 = vpack.c.bf16 %v846, %v846
  %v863 = vpack.c.bf16 %v847, %v847
  %v864 = vpack.c.bf16 %v848, %v848
  %v865 = vpack.c.bf16 %v849, %v849
  %v866 = vpack.c.bf16 %v850, %v850
  %v867 = vpack.c.bf16 %v851, %v851
  %v868 = vpack.c.bf16 %v852, %v852
  %v869 = vpack.c.bf16 %v853, %v853
  %v870 = vpack.c.bf16 %v854, %v854
  %v871 = vpack.c.bf16 %v855, %v855
  %v872 = vpack.c.bf16 %v856, %v856
  %v873 = vpack.c.bf16 %v857, %v857
  %v874 = vpack.c.bf16 %v858, %v858
  %vm875 = vcmask 519168
  %876 = vst.msk [vmem:[%s4] sm:$0xf] %vm875, %v859
  %877 = vst.msk [vmem:[%s4 + $0x4] sm:$0xf] %vm875, %v860
  %878 = vst.msk [vmem:[%s4 + $0x8] sm:$0xf] %vm875, %v861
  %879 = vst.msk [vmem:[%s4 + $0xc] sm:$0xf] %vm875, %v862
  %880 = vst.msk [vmem:[%s4 + $0x10] sm:$0xf] %vm875, %v863
  %881 = vst.msk [vmem:[%s4 + $0x14] sm:$0xf] %vm875, %v864
  %882 = vst.msk [vmem:[%s4 + $0x18] sm:$0xf] %vm875, %v865
  %883 = vst.msk [vmem:[%s4 + $0x1c] sm:$0xf] %vm875, %v866
  %884 = vst.msk [vmem:[%s4 + $0x20] sm:$0xf] %vm875, %v867
  %885 = vst.msk [vmem:[%s4 + $0x24] sm:$0xf] %vm875, %v868
  %886 = vst.msk [vmem:[%s4 + $0x28] sm:$0xf] %vm875, %v869
  %887 = vst.msk [vmem:[%s4 + $0x2c] sm:$0xf] %vm875, %v870
  %888 = vst.msk [vmem:[%s4 + $0x30] sm:$0xf] %vm875, %v871
  %889 = vst.msk [vmem:[%s4 + $0x34] sm:$0xf] %vm875, %v872
  %890 = vst.msk [vmem:[%s4 + $0x38] sm:$0xf] %vm875, %v873
  %891 = vst.msk [vmem:[%s4 + $0x3c] sm:$0xf] %vm875, %v874
  // Predicated region
  $region18: #{conv_discriminator_forward.6} parent=0 // pred_check
    _
  $region19: #{conv_discriminator_forward.6} parent=0 // pred_check_branch
    %893 = sbr.rel (0) target = $region21
  $region20: #{conv_discriminator_forward.6} parent=0 // pred_region
    _
  $region21: #{conv_discriminator_forward.6} parent=0 // pred_fallthru
    _
  // Predicated region
  $region22: #{conv_discriminator_forward.6} parent=0 // pred_check
    _
  $region23: #{conv_discriminator_forward.6} parent=0 // pred_check_branch
    %895 = sbr.rel (0) target = $region25
  $region24: #{conv_discriminator_forward.6} parent=0 // pred_region
    _
  $region25: #{conv_discriminator_forward.6} parent=0 // pred_fallthru
    _

// kernel: conv_discriminator_forward.7
$region0: #{conv_discriminator_forward.7}
  #allocation0 [shape = 'u32[]', space=smem, size = 0x4, offset = 0x4, fixed_abs, tag = 'smem constant byte address 0x4 - core index']
  #allocation1 [shape = 'u32[72,128]{1,0:T(1,128)}', space=vmem, size = 0x9000, scoped, tag = 'internal scratch']
  %s0 = inlined_call_operand.vmem [shape: bf16[32,1024], index: 0, kind: input, shape index: {}]
  %s1 = inlined_call_operand.vmem [shape: bf16[1024,128], index: 1, kind: input, shape index: {}]
  %s2 = inlined_call_operand.vmem [shape: f32[1,128], index: 2, kind: input, shape index: {}]
  %s3 = inlined_call_operand.vmem [shape: f32[1,128], index: 3, kind: input, shape index: {}]
  %s4 = inlined_call_operand.vmem [shape: f32[16,128], index: 4, kind: input, shape index: {}]
  %s5 = inlined_call_operand.vmem [shape: f32[2,1], index: 5, kind: output, shape index: {}]
  %s6 = sld [smem:[#allocation0]]
  $region30: #{conv_discriminator_forward.7} parent=0
    _
  %s8 = ssub.s32 1, %s6
  %s9 = scalar_select 0, %s8, %s6
  // Predicated region
  $region2: #{conv_discriminator_forward.7} parent=0 // pred_check
    _
  $region3: #{conv_discriminator_forward.7} parent=0 // pred_check_branch
    %11 = sbr.rel (0) target = $region5
  $region4: #{conv_discriminator_forward.7} parent=0 // pred_region
    _
  $region5: #{conv_discriminator_forward.7} parent=0 // pred_fallthru
    _
  // Predicated region
  $region6: #{conv_discriminator_forward.7} parent=0 // pred_check
    _
  $region7: #{conv_discriminator_forward.7} parent=0 // pred_check_branch
    %13 = sbr.rel (0) target = $region9
  $region8: #{conv_discriminator_forward.7} parent=0 // pred_region
    _
  $region9: #{conv_discriminator_forward.7} parent=0 // pred_fallthru
    _
  // Predicated region
  $region10: #{conv_discriminator_forward.7} parent=0 // pred_check
    _
  $region11: #{conv_discriminator_forward.7} parent=0 // pred_check_branch
    %15 = sbr.rel (0) target = $region13
  $region12: #{conv_discriminator_forward.7} parent=0 // pred_region
    _
  $region13: #{conv_discriminator_forward.7} parent=0 // pred_fallthru
    _
  // Predicated region
  $region14: #{conv_discriminator_forward.7} parent=0 // pred_check
    _
  $region15: #{conv_discriminator_forward.7} parent=0 // pred_check_branch
    %17 = sbr.rel (0) target = $region17
  $region16: #{conv_discriminator_forward.7} parent=0 // pred_region
    _
  $region17: #{conv_discriminator_forward.7} parent=0 // pred_fallthru
    _
  // Predicated region
  $region18: #{conv_discriminator_forward.7} parent=0 // pred_check
    _
  $region19: #{conv_discriminator_forward.7} parent=0 // pred_check_branch
    %19 = sbr.rel (0) target = $region21
  $region20: #{conv_discriminator_forward.7} parent=0 // pred_region
    _
  $region21: #{conv_discriminator_forward.7} parent=0 // pred_fallthru
    _
  %v20 = vld [vmem:[%s0] sm:$0xff]
  %v21 = vld [vmem:[%s0 + $0x8] sm:$0xff]
  %v22 = vld [vmem:[%s0 + $0x10] sm:$0xff]
  %v23 = vld [vmem:[%s0 + $0x18] sm:$0xff]
  %v24 = vld [vmem:[%s0 + $0x20] sm:$0xff]
  %v25 = vld [vmem:[%s0 + $0x28] sm:$0xff]
  %v26 = vld [vmem:[%s0 + $0x30] sm:$0xff]
  %v27 = vld [vmem:[%s0 + $0x38] sm:$0xff]
  %v28 = vld [vmem:[%s0 + $0x40] sm:$0xff]
  %v29 = vld [vmem:[%s0 + $0x48] sm:$0xff]
  %v30 = vld [vmem:[%s0 + $0x50] sm:$0xff]
  %v31 = vld [vmem:[%s0 + $0x58] sm:$0xff]
  %v32 = vld [vmem:[%s0 + $0x60] sm:$0xff]
  %v33 = vld [vmem:[%s0 + $0x68] sm:$0xff]
  %v34 = vld [vmem:[%s0 + $0x70] sm:$0xff]
  %v35 = vld [vmem:[%s0 + $0x78] sm:$0xff]
  %v36 = vld [vmem:[%s1] sm:$0xf]
  %v37 = vld [vmem:[%s1 + $0x4] sm:$0xf]
  %v38 = vld [vmem:[%s1 + $0x8] sm:$0xf]
  %v39 = vld [vmem:[%s1 + $0xc] sm:$0xf]
  %v40 = vld [vmem:[%s1 + $0x10] sm:$0xf]
  %v41 = vld [vmem:[%s1 + $0x14] sm:$0xf]
  %v42 = vld [vmem:[%s1 + $0x18] sm:$0xf]
  %v43 = vld [vmem:[%s1 + $0x1c] sm:$0xf]
  %v44 = vld [vmem:[%s1 + $0x20] sm:$0xf]
  %v45 = vld [vmem:[%s1 + $0x24] sm:$0xf]
  %v46 = vld [vmem:[%s1 + $0x28] sm:$0xf]
  %v47 = vld [vmem:[%s1 + $0x2c] sm:$0xf]
  %v48 = vld [vmem:[%s1 + $0x30] sm:$0xf]
  %v49 = vld [vmem:[%s1 + $0x34] sm:$0xf]
  %v50 = vld [vmem:[%s1 + $0x38] sm:$0xf]
  %v51 = vld [vmem:[%s1 + $0x3c] sm:$0xf]
  %v52 = vld [vmem:[%s1 + $0x40] sm:$0xf]
  %v53 = vld [vmem:[%s1 + $0x44] sm:$0xf]
  %v54 = vld [vmem:[%s1 + $0x48] sm:$0xf]
  %v55 = vld [vmem:[%s1 + $0x4c] sm:$0xf]
  %v56 = vld [vmem:[%s1 + $0x50] sm:$0xf]
  %v57 = vld [vmem:[%s1 + $0x54] sm:$0xf]
  %v58 = vld [vmem:[%s1 + $0x58] sm:$0xf]
  %v59 = vld [vmem:[%s1 + $0x5c] sm:$0xf]
  %v60 = vld [vmem:[%s1 + $0x60] sm:$0xf]
  %v61 = vld [vmem:[%s1 + $0x64] sm:$0xf]
  %v62 = vld [vmem:[%s1 + $0x68] sm:$0xf]
  %v63 = vld [vmem:[%s1 + $0x6c] sm:$0xf]
  %v64 = vld [vmem:[%s1 + $0x70] sm:$0xf]
  %v65 = vld [vmem:[%s1 + $0x74] sm:$0xf]
  %v66 = vld [vmem:[%s1 + $0x78] sm:$0xf]
  %v67 = vld [vmem:[%s1 + $0x7c] sm:$0xf]
  %v68 = vld [vmem:[%s1 + $0x80] sm:$0xf]
  %v69 = vld [vmem:[%s1 + $0x84] sm:$0xf]
  %v70 = vld [vmem:[%s1 + $0x88] sm:$0xf]
  %v71 = vld [vmem:[%s1 + $0x8c] sm:$0xf]
  %v72 = vld [vmem:[%s1 + $0x90] sm:$0xf]
  %v73 = vld [vmem:[%s1 + $0x94] sm:$0xf]
  %v74 = vld [vmem:[%s1 + $0x98] sm:$0xf]
  %v75 = vld [vmem:[%s1 + $0x9c] sm:$0xf]
  %v76 = vld [vmem:[%s1 + $0xa0] sm:$0xf]
  %v77 = vld [vmem:[%s1 + $0xa4] sm:$0xf]
  %v78 = vld [vmem:[%s1 + $0xa8] sm:$0xf]
  %v79 = vld [vmem:[%s1 + $0xac] sm:$0xf]
  %v80 = vld [vmem:[%s1 + $0xb0] sm:$0xf]
  %v81 = vld [vmem:[%s1 + $0xb4] sm:$0xf]
  %v82 = vld [vmem:[%s1 + $0xb8] sm:$0xf]
  %v83 = vld [vmem:[%s1 + $0xbc] sm:$0xf]
  %v84 = vld [vmem:[%s1 + $0xc0] sm:$0xf]
  %v85 = vld [vmem:[%s1 + $0xc4] sm:$0xf]
  %v86 = vld [vmem:[%s1 + $0xc8] sm:$0xf]
  %v87 = vld [vmem:[%s1 + $0xcc] sm:$0xf]
  %v88 = vld [vmem:[%s1 + $0xd0] sm:$0xf]
  %v89 = vld [vmem:[%s1 + $0xd4] sm:$0xf]
  %v90 = vld [vmem:[%s1 + $0xd8] sm:$0xf]
  %v91 = vld [vmem:[%s1 + $0xdc] sm:$0xf]
  %v92 = vld [vmem:[%s1 + $0xe0] sm:$0xf]
  %v93 = vld [vmem:[%s1 + $0xe4] sm:$0xf]
  %v94 = vld [vmem:[%s1 + $0xe8] sm:$0xf]
  %v95 = vld [vmem:[%s1 + $0xec] sm:$0xf]
  %v96 = vld [vmem:[%s1 + $0xf0] sm:$0xf]
  %v97 = vld [vmem:[%s1 + $0xf4] sm:$0xf]
  %v98 = vld [vmem:[%s1 + $0xf8] sm:$0xf]
  %v99 = vld [vmem:[%s1 + $0xfc] sm:$0xf]
  %v100 = vld [vmem:[%s1 + $0x100] sm:$0xf]
  %v101 = vld [vmem:[%s1 + $0x104] sm:$0xf]
  %v102 = vld [vmem:[%s1 + $0x108] sm:$0xf]
  %v103 = vld [vmem:[%s1 + $0x10c] sm:$0xf]
  %v104 = vld [vmem:[%s1 + $0x110] sm:$0xf]
  %v105 = vld [vmem:[%s1 + $0x114] sm:$0xf]
  %v106 = vld [vmem:[%s1 + $0x118] sm:$0xf]
  %v107 = vld [vmem:[%s1 + $0x11c] sm:$0xf]
  %v108 = vld [vmem:[%s1 + $0x120] sm:$0xf]
  %v109 = vld [vmem:[%s1 + $0x124] sm:$0xf]
  %v110 = vld [vmem:[%s1 + $0x128] sm:$0xf]
  %v111 = vld [vmem:[%s1 + $0x12c] sm:$0xf]
  %v112 = vld [vmem:[%s1 + $0x130] sm:$0xf]
  %v113 = vld [vmem:[%s1 + $0x134] sm:$0xf]
  %v114 = vld [vmem:[%s1 + $0x138] sm:$0xf]
  %v115 = vld [vmem:[%s1 + $0x13c] sm:$0xf]
  %v116 = vld [vmem:[%s1 + $0x140] sm:$0xf]
  %v117 = vld [vmem:[%s1 + $0x144] sm:$0xf]
  %v118 = vld [vmem:[%s1 + $0x148] sm:$0xf]
  %v119 = vld [vmem:[%s1 + $0x14c] sm:$0xf]
  %v120 = vld [vmem:[%s1 + $0x150] sm:$0xf]
  %v121 = vld [vmem:[%s1 + $0x154] sm:$0xf]
  %v122 = vld [vmem:[%s1 + $0x158] sm:$0xf]
  %v123 = vld [vmem:[%s1 + $0x15c] sm:$0xf]
  %v124 = vld [vmem:[%s1 + $0x160] sm:$0xf]
  %v125 = vld [vmem:[%s1 + $0x164] sm:$0xf]
  %v126 = vld [vmem:[%s1 + $0x168] sm:$0xf]
  %v127 = vld [vmem:[%s1 + $0x16c] sm:$0xf]
  %v128 = vld [vmem:[%s1 + $0x170] sm:$0xf]
  %v129 = vld [vmem:[%s1 + $0x174] sm:$0xf]
  %v130 = vld [vmem:[%s1 + $0x178] sm:$0xf]
  %v131 = vld [vmem:[%s1 + $0x17c] sm:$0xf]
  %v132 = vld [vmem:[%s1 + $0x180] sm:$0xf]
  %v133 = vld [vmem:[%s1 + $0x184] sm:$0xf]
  %v134 = vld [vmem:[%s1 + $0x188] sm:$0xf]
  %v135 = vld [vmem:[%s1 + $0x18c] sm:$0xf]
  %v136 = vld [vmem:[%s1 + $0x190] sm:$0xf]
  %v137 = vld [vmem:[%s1 + $0x194] sm:$0xf]
  %v138 = vld [vmem:[%s1 + $0x198] sm:$0xf]
  %v139 = vld [vmem:[%s1 + $0x19c] sm:$0xf]
  %v140 = vld [vmem:[%s1 + $0x1a0] sm:$0xf]
  %v141 = vld [vmem:[%s1 + $0x1a4] sm:$0xf]
  %v142 = vld [vmem:[%s1 + $0x1a8] sm:$0xf]
  %v143 = vld [vmem:[%s1 + $0x1ac] sm:$0xf]
  %v144 = vld [vmem:[%s1 + $0x1b0] sm:$0xf]
  %v145 = vld [vmem:[%s1 + $0x1b4] sm:$0xf]
  %v146 = vld [vmem:[%s1 + $0x1b8] sm:$0xf]
  %v147 = vld [vmem:[%s1 + $0x1bc] sm:$0xf]
  %v148 = vld [vmem:[%s1 + $0x1c0] sm:$0xf]
  %v149 = vld [vmem:[%s1 + $0x1c4] sm:$0xf]
  %v150 = vld [vmem:[%s1 + $0x1c8] sm:$0xf]
  %v151 = vld [vmem:[%s1 + $0x1cc] sm:$0xf]
  %v152 = vld [vmem:[%s1 + $0x1d0] sm:$0xf]
  %v153 = vld [vmem:[%s1 + $0x1d4] sm:$0xf]
  %v154 = vld [vmem:[%s1 + $0x1d8] sm:$0xf]
  %v155 = vld [vmem:[%s1 + $0x1dc] sm:$0xf]
  %v156 = vld [vmem:[%s1 + $0x1e0] sm:$0xf]
  %v157 = vld [vmem:[%s1 + $0x1e4] sm:$0xf]
  %v158 = vld [vmem:[%s1 + $0x1e8] sm:$0xf]
  %v159 = vld [vmem:[%s1 + $0x1ec] sm:$0xf]
  %v160 = vld [vmem:[%s1 + $0x1f0] sm:$0xf]
  %v161 = vld [vmem:[%s1 + $0x1f4] sm:$0xf]
  %v162 = vld [vmem:[%s1 + $0x1f8] sm:$0xf]
  %v163 = vld [vmem:[%s1 + $0x1fc] sm:$0xf]
  %v180 = vunpack.c.l.b16 %v20
  %v181 = vunpack.c.h.b16 %v20
  %v182 = vunpack.c.l.b16 %v21
  %v183 = vunpack.c.h.b16 %v21
  %v184 = vunpack.c.l.b16 %v22
  %v185 = vunpack.c.h.b16 %v22
  %v186 = vunpack.c.l.b16 %v23
  %v187 = vunpack.c.h.b16 %v23
  %v188 = vunpack.c.l.b16 %v24
  %v189 = vunpack.c.h.b16 %v24
  %v190 = vunpack.c.l.b16 %v25
  %v191 = vunpack.c.h.b16 %v25
  %v192 = vunpack.c.l.b16 %v26
  %v193 = vunpack.c.h.b16 %v26
  %v194 = vunpack.c.l.b16 %v27
  %v195 = vunpack.c.h.b16 %v27
  %v196 = vunpack.c.l.b16 %v28
  %v197 = vunpack.c.h.b16 %v28
  %v198 = vunpack.c.l.b16 %v29
  %v199 = vunpack.c.h.b16 %v29
  %v200 = vunpack.c.l.b16 %v30
  %v201 = vunpack.c.h.b16 %v30
  %v202 = vunpack.c.l.b16 %v31
  %v203 = vunpack.c.h.b16 %v31
  %v204 = vunpack.c.l.b16 %v32
  %v205 = vunpack.c.h.b16 %v32
  %v206 = vunpack.c.l.b16 %v33
  %v207 = vunpack.c.h.b16 %v33
  %v208 = vunpack.c.l.b16 %v34
  %v209 = vunpack.c.h.b16 %v34
  %v210 = vunpack.c.l.b16 %v35
  %v211 = vunpack.c.h.b16 %v35
  %v212 = vpack.c.b16 %v188, %v180
  %v213 = vpack.c.b16 %v189, %v181
  %v214 = vpack.c.b16 %v190, %v182
  %v215 = vpack.c.b16 %v191, %v183
  %v216 = vpack.c.b16 %v192, %v184
  %v217 = vpack.c.b16 %v193, %v185
  %v218 = vpack.c.b16 %v194, %v186
  %v219 = vpack.c.b16 %v195, %v187
  %v220 = vpack.c.b16 %v204, %v196
  %v221 = vpack.c.b16 %v205, %v197
  %v222 = vpack.c.b16 %v206, %v198
  %v223 = vpack.c.b16 %v207, %v199
  %v224 = vpack.c.b16 %v208, %v200
  %v225 = vpack.c.b16 %v209, %v201
  %v226 = vpack.c.b16 %v210, %v202
  %v227 = vpack.c.b16 %v211, %v203
  %v372 = vunpack.c.l.b16 %v36
  %v373 = vunpack.c.l.b16 %v37
  %v374 = vunpack.c.l.b16 %v38
  %v375 = vunpack.c.l.b16 %v39
  %v376 = vunpack.c.l.b16 %v40
  %v377 = vunpack.c.l.b16 %v41
  %v378 = vunpack.c.l.b16 %v42
  %v379 = vunpack.c.l.b16 %v43
  %v380 = vunpack.c.l.b16 %v44
  %v381 = vunpack.c.l.b16 %v45
  %v382 = vunpack.c.l.b16 %v46
  %v383 = vunpack.c.l.b16 %v47
  %v384 = vunpack.c.l.b16 %v48
  %v385 = vunpack.c.l.b16 %v49
  %v386 = vunpack.c.l.b16 %v50
  %v387 = vunpack.c.l.b16 %v51
  %v388 = vunpack.c.l.b16 %v52
  %v389 = vunpack.c.l.b16 %v53
  %v390 = vunpack.c.l.b16 %v54
  %v391 = vunpack.c.l.b16 %v55
  %v392 = vunpack.c.l.b16 %v56
  %v393 = vunpack.c.l.b16 %v57
  %v394 = vunpack.c.l.b16 %v58
  %v395 = vunpack.c.l.b16 %v59
  %v396 = vunpack.c.l.b16 %v60
  %v397 = vunpack.c.l.b16 %v61
  %v398 = vunpack.c.l.b16 %v62
  %v399 = vunpack.c.l.b16 %v63
  %v400 = vunpack.c.l.b16 %v64
  %v401 = vunpack.c.l.b16 %v65
  %v402 = vunpack.c.l.b16 %v66
  %v403 = vunpack.c.l.b16 %v67
  %v404 = vunpack.c.l.b16 %v68
  %v405 = vunpack.c.l.b16 %v69
  %v406 = vunpack.c.l.b16 %v70
  %v407 = vunpack.c.l.b16 %v71
  %v408 = vunpack.c.l.b16 %v72
  %v409 = vunpack.c.l.b16 %v73
  %v410 = vunpack.c.l.b16 %v74
  %v411 = vunpack.c.l.b16 %v75
  %v412 = vunpack.c.l.b16 %v76
  %v413 = vunpack.c.l.b16 %v77
  %v414 = vunpack.c.l.b16 %v78
  %v415 = vunpack.c.l.b16 %v79
  %v416 = vunpack.c.l.b16 %v80
  %v417 = vunpack.c.l.b16 %v81
  %v418 = vunpack.c.l.b16 %v82
  %v419 = vunpack.c.l.b16 %v83
  %v420 = vunpack.c.l.b16 %v84
  %v421 = vunpack.c.l.b16 %v85
  %v422 = vunpack.c.l.b16 %v86
  %v423 = vunpack.c.l.b16 %v87
  %v424 = vunpack.c.l.b16 %v88
  %v425 = vunpack.c.l.b16 %v89
  %v426 = vunpack.c.l.b16 %v90
  %v427 = vunpack.c.l.b16 %v91
  %v428 = vunpack.c.l.b16 %v92
  %v429 = vunpack.c.l.b16 %v93
  %v430 = vunpack.c.l.b16 %v94
  %v431 = vunpack.c.l.b16 %v95
  %v432 = vunpack.c.l.b16 %v96
  %v433 = vunpack.c.l.b16 %v97
  %v434 = vunpack.c.l.b16 %v98
  %v435 = vunpack.c.l.b16 %v99
  %v436 = vunpack.c.l.b16 %v100
  %v437 = vunpack.c.l.b16 %v101
  %v438 = vunpack.c.l.b16 %v102
  %v439 = vunpack.c.l.b16 %v103
  %v440 = vunpack.c.l.b16 %v104
  %v441 = vunpack.c.l.b16 %v105
  %v442 = vunpack.c.l.b16 %v106
  %v443 = vunpack.c.l.b16 %v107
  %v444 = vunpack.c.l.b16 %v108
  %v445 = vunpack.c.l.b16 %v109
  %v446 = vunpack.c.l.b16 %v110
  %v447 = vunpack.c.l.b16 %v111
  %v448 = vunpack.c.l.b16 %v112
  %v449 = vunpack.c.l.b16 %v113
  %v450 = vunpack.c.l.b16 %v114
  %v451 = vunpack.c.l.b16 %v115
  %v452 = vunpack.c.l.b16 %v116
  %v453 = vunpack.c.l.b16 %v117
  %v454 = vunpack.c.l.b16 %v118
  %v455 = vunpack.c.l.b16 %v119
  %v456 = vunpack.c.l.b16 %v120
  %v457 = vunpack.c.l.b16 %v121
  %v458 = vunpack.c.l.b16 %v122
  %v459 = vunpack.c.l.b16 %v123
  %v460 = vunpack.c.l.b16 %v124
  %v461 = vunpack.c.l.b16 %v125
  %v462 = vunpack.c.l.b16 %v126
  %v463 = vunpack.c.l.b16 %v127
  %v464 = vunpack.c.l.b16 %v128
  %v465 = vunpack.c.l.b16 %v129
  %v466 = vunpack.c.l.b16 %v130
  %v467 = vunpack.c.l.b16 %v131
  %v468 = vunpack.c.l.b16 %v132
  %v469 = vunpack.c.l.b16 %v133
  %v470 = vunpack.c.l.b16 %v134
  %v471 = vunpack.c.l.b16 %v135
  %v472 = vunpack.c.l.b16 %v136
  %v473 = vunpack.c.l.b16 %v137
  %v474 = vunpack.c.l.b16 %v138
  %v475 = vunpack.c.l.b16 %v139
  %v476 = vunpack.c.l.b16 %v140
  %v477 = vunpack.c.l.b16 %v141
  %v478 = vunpack.c.l.b16 %v142
  %v479 = vunpack.c.l.b16 %v143
  %v480 = vunpack.c.l.b16 %v144
  %v481 = vunpack.c.l.b16 %v145
  %v482 = vunpack.c.l.b16 %v146
  %v483 = vunpack.c.l.b16 %v147
  %v484 = vunpack.c.l.b16 %v148
  %v485 = vunpack.c.l.b16 %v149
  %v486 = vunpack.c.l.b16 %v150
  %v487 = vunpack.c.l.b16 %v151
  %v488 = vunpack.c.l.b16 %v152
  %v489 = vunpack.c.l.b16 %v153
  %v490 = vunpack.c.l.b16 %v154
  %v491 = vunpack.c.l.b16 %v155
  %v492 = vunpack.c.l.b16 %v156
  %v493 = vunpack.c.l.b16 %v157
  %v494 = vunpack.c.l.b16 %v158
  %v495 = vunpack.c.l.b16 %v159
  %v496 = vunpack.c.l.b16 %v160
  %v497 = vunpack.c.l.b16 %v161
  %v498 = vunpack.c.l.b16 %v162
  %v499 = vunpack.c.l.b16 %v163
  %v500 = vpack.c.b16 %v373, %v372
  %v501 = vpack.c.b16 %v375, %v374
  %v502 = vpack.c.b16 %v377, %v376
  %v503 = vpack.c.b16 %v379, %v378
  %v504 = vpack.c.b16 %v381, %v380
  %v505 = vpack.c.b16 %v383, %v382
  %v506 = vpack.c.b16 %v385, %v384
  %v507 = vpack.c.b16 %v387, %v386
  %v508 = vpack.c.b16 %v389, %v388
  %v509 = vpack.c.b16 %v391, %v390
  %v510 = vpack.c.b16 %v393, %v392
  %v511 = vpack.c.b16 %v395, %v394
  %v512 = vpack.c.b16 %v397, %v396
  %v513 = vpack.c.b16 %v399, %v398
  %v514 = vpack.c.b16 %v401, %v400
  %v515 = vpack.c.b16 %v403, %v402
  %v516 = vpack.c.b16 %v405, %v404
  %v517 = vpack.c.b16 %v407, %v406
  %v518 = vpack.c.b16 %v409, %v408
  %v519 = vpack.c.b16 %v411, %v410
  %v520 = vpack.c.b16 %v413, %v412
  %v521 = vpack.c.b16 %v415, %v414
  %v522 = vpack.c.b16 %v417, %v416
  %v523 = vpack.c.b16 %v419, %v418
  %v524 = vpack.c.b16 %v421, %v420
  %v525 = vpack.c.b16 %v423, %v422
  %v526 = vpack.c.b16 %v425, %v424
  %v527 = vpack.c.b16 %v427, %v426
  %v528 = vpack.c.b16 %v429, %v428
  %v529 = vpack.c.b16 %v431, %v430
  %v530 = vpack.c.b16 %v433, %v432
  %v531 = vpack.c.b16 %v435, %v434
  %v532 = vpack.c.b16 %v437, %v436
  %v533 = vpack.c.b16 %v439, %v438
  %v534 = vpack.c.b16 %v441, %v440
  %v535 = vpack.c.b16 %v443, %v442
  %v536 = vpack.c.b16 %v445, %v444
  %v537 = vpack.c.b16 %v447, %v446
  %v538 = vpack.c.b16 %v449, %v448
  %v539 = vpack.c.b16 %v451, %v450
  %v540 = vpack.c.b16 %v453, %v452
  %v541 = vpack.c.b16 %v455, %v454
  %v542 = vpack.c.b16 %v457, %v456
  %v543 = vpack.c.b16 %v459, %v458
  %v544 = vpack.c.b16 %v461, %v460
  %v545 = vpack.c.b16 %v463, %v462
  %v546 = vpack.c.b16 %v465, %v464
  %v547 = vpack.c.b16 %v467, %v466
  %v548 = vpack.c.b16 %v469, %v468
  %v549 = vpack.c.b16 %v471, %v470
  %v550 = vpack.c.b16 %v473, %v472
  %v551 = vpack.c.b16 %v475, %v474
  %v552 = vpack.c.b16 %v477, %v476
  %v553 = vpack.c.b16 %v479, %v478
  %v554 = vpack.c.b16 %v481, %v480
  %v555 = vpack.c.b16 %v483, %v482
  %v556 = vpack.c.b16 %v485, %v484
  %v557 = vpack.c.b16 %v487, %v486
  %v558 = vpack.c.b16 %v489, %v488
  %v559 = vpack.c.b16 %v491, %v490
  %v560 = vpack.c.b16 %v493, %v492
  %v561 = vpack.c.b16 %v495, %v494
  %v562 = vpack.c.b16 %v497, %v496
  %v563 = vpack.c.b16 %v499, %v498
  %628 = vmatpush.bf16.msra.mxu0 %v507
  %629 = vmatpush.bf16.msra.mxu0 %v506
  %630 = vmatpush.bf16.msra.mxu0 %v505
  %631 = vmatpush.bf16.msra.mxu0 %v504
  %632 = vmatpush.bf16.msra.mxu0 %v503
  %633 = vmatpush.bf16.msra.mxu0 %v502
  %634 = vmatpush.bf16.msra.mxu0 %v501
  %635 = vmatpush.bf16.msra.mxu0 %v500
  %636 = vmatmul.bf16.gmra.mxu0 %v212
  %v637 = vpop.f32.mrf.mxu0
  %v638 = vadd.f32 0.0, %v637
  %v639 = vpop.f32.mrf.mxu0
  %v640 = vadd.f32 0.0, %v639
  %641 = vmatmul.bf16.gmra.mxu0 %v220
  %v642 = vpop.f32.mrf.mxu0
  %v643 = vadd.f32 0.0, %v642
  %v644 = vpop.f32.mrf.mxu0
  %v645 = vadd.f32 0.0, %v644
  %646 = vdwg.mxu0
  %647 = vmatpush.bf16.msra.mxu0 %v515
  %648 = vmatpush.bf16.msra.mxu0 %v514
  %649 = vmatpush.bf16.msra.mxu0 %v513
  %650 = vmatpush.bf16.msra.mxu0 %v512
  %651 = vmatpush.bf16.msra.mxu0 %v511
  %652 = vmatpush.bf16.msra.mxu0 %v510
  %653 = vmatpush.bf16.msra.mxu0 %v509
  %654 = vmatpush.bf16.msra.mxu0 %v508
  %655 = vmatmul.bf16.gmra.mxu0 %v213
  %v656 = vpop.f32.mrf.mxu0
  %v657 = vadd.f32 %v638, %v656
  %v658 = vpop.f32.mrf.mxu0
  %v659 = vadd.f32 %v640, %v658
  %660 = vmatmul.bf16.gmra.mxu0 %v221
  %v661 = vpop.f32.mrf.mxu0
  %v662 = vadd.f32 %v643, %v661
  %v663 = vpop.f32.mrf.mxu0
  %v664 = vadd.f32 %v645, %v663
  %665 = vdwg.mxu0
  %666 = vmatpush.bf16.msra.mxu0 %v523
  %667 = vmatpush.bf16.msra.mxu0 %v522
  %668 = vmatpush.bf16.msra.mxu0 %v521
  %669 = vmatpush.bf16.msra.mxu0 %v520
  %670 = vmatpush.bf16.msra.mxu0 %v519
  %671 = vmatpush.bf16.msra.mxu0 %v518
  %672 = vmatpush.bf16.msra.mxu0 %v517
  %673 = vmatpush.bf16.msra.mxu0 %v516
  %674 = vmatmul.bf16.gmra.mxu0 %v214
  %v675 = vpop.f32.mrf.mxu0
  %v676 = vadd.f32 %v657, %v675
  %v677 = vpop.f32.mrf.mxu0
  %v678 = vadd.f32 %v659, %v677
  %679 = vmatmul.bf16.gmra.mxu0 %v222
  %v680 = vpop.f32.mrf.mxu0
  %v681 = vadd.f32 %v662, %v680
  %v682 = vpop.f32.mrf.mxu0
  %v683 = vadd.f32 %v664, %v682
  %684 = vdwg.mxu0
  %685 = vmatpush.bf16.msra.mxu0 %v531
  %686 = vmatpush.bf16.msra.mxu0 %v530
  %687 = vmatpush.bf16.msra.mxu0 %v529
  %688 = vmatpush.bf16.msra.mxu0 %v528
  %689 = vmatpush.bf16.msra.mxu0 %v527
  %690 = vmatpush.bf16.msra.mxu0 %v526
  %691 = vmatpush.bf16.msra.mxu0 %v525
  %692 = vmatpush.bf16.msra.mxu0 %v524
  %693 = vmatmul.bf16.gmra.mxu0 %v215
  %v694 = vpop.f32.mrf.mxu0
  %v695 = vadd.f32 %v676, %v694
  %v696 = vpop.f32.mrf.mxu0
  %v697 = vadd.f32 %v678, %v696
  %698 = vmatmul.bf16.gmra.mxu0 %v223
  %v699 = vpop.f32.mrf.mxu0
  %v700 = vadd.f32 %v681, %v699
  %v701 = vpop.f32.mrf.mxu0
  %v702 = vadd.f32 %v683, %v701
  %703 = vdwg.mxu0
  %704 = vmatpush.bf16.msra.mxu0 %v539
  %705 = vmatpush.bf16.msra.mxu0 %v538
  %706 = vmatpush.bf16.msra.mxu0 %v537
  %707 = vmatpush.bf16.msra.mxu0 %v536
  %708 = vmatpush.bf16.msra.mxu0 %v535
  %709 = vmatpush.bf16.msra.mxu0 %v534
  %710 = vmatpush.bf16.msra.mxu0 %v533
  %711 = vmatpush.bf16.msra.mxu0 %v532
  %712 = vmatmul.bf16.gmra.mxu0 %v216
  %v713 = vpop.f32.mrf.mxu0
  %v714 = vadd.f32 %v695, %v713
  %v715 = vpop.f32.mrf.mxu0
  %v716 = vadd.f32 %v697, %v715
  %717 = vmatmul.bf16.gmra.mxu0 %v224
  %v718 = vpop.f32.mrf.mxu0
  %v719 = vadd.f32 %v700, %v718
  %v720 = vpop.f32.mrf.mxu0
  %v721 = vadd.f32 %v702, %v720
  %722 = vdwg.mxu0
  %723 = vmatpush.bf16.msra.mxu0 %v547
  %724 = vmatpush.bf16.msra.mxu0 %v546
  %725 = vmatpush.bf16.msra.mxu0 %v545
  %726 = vmatpush.bf16.msra.mxu0 %v544
  %727 = vmatpush.bf16.msra.mxu0 %v543
  %728 = vmatpush.bf16.msra.mxu0 %v542
  %729 = vmatpush.bf16.msra.mxu0 %v541
  %730 = vmatpush.bf16.msra.mxu0 %v540
  %731 = vmatmul.bf16.gmra.mxu0 %v217
  %v732 = vpop.f32.mrf.mxu0
  %v733 = vadd.f32 %v714, %v732
  %v734 = vpop.f32.mrf.mxu0
  %v735 = vadd.f32 %v716, %v734
  %736 = vmatmul.bf16.gmra.mxu0 %v225
  %v737 = vpop.f32.mrf.mxu0
  %v738 = vadd.f32 %v719, %v737
  %v739 = vpop.f32.mrf.mxu0
  %v740 = vadd.f32 %v721, %v739
  %741 = vdwg.mxu0
  %742 = vmatpush.bf16.msra.mxu0 %v555
  %743 = vmatpush.bf16.msra.mxu0 %v554
  %744 = vmatpush.bf16.msra.mxu0 %v553
  %745 = vmatpush.bf16.msra.mxu0 %v552
  %746 = vmatpush.bf16.msra.mxu0 %v551
  %747 = vmatpush.bf16.msra.mxu0 %v550
  %748 = vmatpush.bf16.msra.mxu0 %v549
  %749 = vmatpush.bf16.msra.mxu0 %v548
  %750 = vmatmul.bf16.gmra.mxu0 %v218
  %v751 = vpop.f32.mrf.mxu0
  %v752 = vadd.f32 %v733, %v751
  %v753 = vpop.f32.mrf.mxu0
  %v754 = vadd.f32 %v735, %v753
  %755 = vmatmul.bf16.gmra.mxu0 %v226
  %v756 = vpop.f32.mrf.mxu0
  %v757 = vadd.f32 %v738, %v756
  %v758 = vpop.f32.mrf.mxu0
  %v759 = vadd.f32 %v740, %v758
  %760 = vdwg.mxu0
  %761 = vmatpush.bf16.msra.mxu0 %v563
  %762 = vmatpush.bf16.msra.mxu0 %v562
  %763 = vmatpush.bf16.msra.mxu0 %v561
  %764 = vmatpush.bf16.msra.mxu0 %v560
  %765 = vmatpush.bf16.msra.mxu0 %v559
  %766 = vmatpush.bf16.msra.mxu0 %v558
  %767 = vmatpush.bf16.msra.mxu0 %v557
  %768 = vmatpush.bf16.msra.mxu0 %v556
  %769 = vmatmul.bf16.gmra.mxu0 %v219
  %v770 = vpop.f32.mrf.mxu0
  %v771 = vadd.f32 %v752, %v770
  %v772 = vpop.f32.mrf.mxu0
  %v773 = vadd.f32 %v754, %v772
  %774 = vmatmul.bf16.gmra.mxu0 %v227
  %v775 = vpop.f32.mrf.mxu0
  %v776 = vadd.f32 %v757, %v775
  %v777 = vpop.f32.mrf.mxu0
  %v778 = vadd.f32 %v759, %v777
  %779 = vdwg.mxu0
  %v780 = vadd.f32 %v771, %v773
  %v781 = vadd.f32 %v780, %v776
  %v782 = vadd.f32 %v781, %v778
  %v783 = vrot.slane %v782, 4
  %v784 = vadd.f32 %v782, %v783
  %v785 = vrot.slane %v784, 2
  %v786 = vadd.f32 %v784, %v785
  %v787 = vrot.slane %v786, 1
  %v788 = vadd.f32 %v786, %v787
  %v789 = vmul.f32 %v788, 0.03125
  %v790 = vmul.f32 %v771, %v771
  %v791 = vmul.f32 %v773, %v773
  %v792 = vmul.f32 %v776, %v776
  %v793 = vmul.f32 %v778, %v778
  %v794 = vadd.f32 %v790, %v791
  %v795 = vadd.f32 %v794, %v792
  %v796 = vadd.f32 %v795, %v793
  %v797 = vrot.slane %v796, 4
  %v798 = vadd.f32 %v796, %v797
  %v799 = vrot.slane %v798, 2
  %v800 = vadd.f32 %v798, %v799
  %v801 = vrot.slane %v800, 1
  %v802 = vadd.f32 %v800, %v801
  %v803 = vmul.f32 %v802, 0.03125
  %v804 = vmul.f32 %v789, %v789
  %v805 = vsub.f32 %v803, %v804
  %v806 = vmax.f32 %v805, 0.0
  %v807 = vadd.f32 %v806, 1e-05
  %v808 = vrsqrt.pop %v807
  %v809 = vmul.f32 %v808, %v807
  %v810 = vmul.f32 %v809, %v808
  %v811 = vmul.f32 0.5, %v810
  %v812 = vsub.f32 1.5, %v811
  %v813 = vmul.f32 %v808, %v812
  %vm814 = vweird.f32 %v807
  %vm815 = vweird.f32 %v808
  %vm816 = vmor %vm814, %vm815
  %v817 = vsel %vm816, %v808, %v813
  %v818 = vld [vmem:[%s2] sm:$0x1]
  %v819 = vmul.f32 %v818, %v817
  %v820 = vld [vmem:[%s3] sm:$0x1]
  %v821 = vmul.f32 %v789, %v819
  %v822 = vsub.f32 %v820, %v821
  %v824 = vperm.slane %v819, 0
  %v826 = vmul.f32 %v771, %v824
  %v827 = vmul.f32 %v773, %v824
  %v828 = vmul.f32 %v776, %v824
  %v829 = vmul.f32 %v778, %v824
  %v831 = vperm.slane %v822, 0
  %v833 = vadd.f32 %v826, %v831
  %v834 = vadd.f32 %v827, %v831
  %v835 = vadd.f32 %v828, %v831
  %v836 = vadd.f32 %v829, %v831
  %vm837 = vcmp.gt.f32.partialorder %v833, 0.0
  %vm838 = vcmp.gt.f32.partialorder %v834, 0.0
  %vm839 = vcmp.gt.f32.partialorder %v835, 0.0
  %vm840 = vcmp.gt.f32.partialorder %v836, 0.0
  %v841 = vmul.f32 %v833, 0.2
  %v842 = vmul.f32 %v834, 0.2
  %v843 = vmul.f32 %v835, 0.2
  %v844 = vmul.f32 %v836, 0.2
  %v845 = vsel %vm837, %v833, %v841
  %v846 = vsel %vm838, %v834, %v842
  %v847 = vsel %vm839, %v835, %v843
  %v848 = vsel %vm840, %v836, %v844
  %v849 = vld [vmem:[%s4] sm:$0xff]
  %v850 = vld [vmem:[%s4 + $0x8] sm:$0xff]
  %v851 = vmul.f32 %v845, %v849
  %v852 = vmul.f32 %v846, %v850
  %853 = vadd.xlane.f32.xlu0 %v851
  %v854 = vpop.xlane.xlu0 %853
  %855 = vadd.xlane.f32.xlu0 %v852
  %v856 = vpop.xlane.xlu0 %855
  %v857 = vadd.f32 %v854, %v856
  %v858 = vrot.slane %v857, 4
  %v859 = vadd.f32 %v857, %v858
  %v860 = vrot.slane %v859, 2
  %v861 = vadd.f32 %v859, %v860
  %v862 = vrot.slane %v861, 1
  %v863 = vadd.f32 %v861, %v862
  %v864 = vmul.f32 %v847, %v849
  %v865 = vmul.f32 %v848, %v850
  %866 = vadd.xlane.f32.xlu0 %v864
  %v867 = vpop.xlane.xlu0 %866
  %868 = vadd.xlane.f32.xlu0 %v865
  %v869 = vpop.xlane.xlu0 %868
  %v870 = vadd.f32 %v867, %v869
  %v871 = vrot.slane %v870, 4
  %v872 = vadd.f32 %v870, %v871
  %v873 = vrot.slane %v872, 2
  %v874 = vadd.f32 %v872, %v873
  %v875 = vrot.slane %v874, 1
  %v876 = vadd.f32 %v874, %v875
  %vm877 = vcmask 1040384
  %v878 = vsel %vm877, %v863, %v876
  %v879 = vxor.u32 %v878, 2147483648
  %v880 = vmul.f32 %v879, 1.442695
  %v881 = vpow.pop %v880
  %v882 = vadd.f32 %v881, 1.0
  %v883 = vrcp.pop %v882
  %v884 = vmul.f32 %v882, %v883
  %v885 = vsub.f32 1.0, %v884
  %v886 = vmul.f32 %v883, %v885
  %v887 = vadd.f32 %v883, %v886
  %vm888 = vweird.f32 %v882
  %vm889 = vweird.f32 %v883
  %vm890 = vmor %vm888, %vm889
  %v891 = vsel %vm890, %v883, %v887
  %v892 = vand.u32 2147483647, %v882
  %vm893 = vcmp.eq.f32.partialorder %v892, 8.507059e+37
  %v894 = vand.u32 %v882, 2147483648
  %v895 = vor.u32 1.1754944e-38, %v894
  %v896 = vsel %vm893, %v895, %v891
  %v897 = vmul.f32 1.0, %v896
  %vm898 = vcmask 1024
  %899 = vst.msk [vmem:[%s5] sm:$0x3] %vm898, %v897
  // Predicated region
  $region22: #{conv_discriminator_forward.7} parent=0 // pred_check
    _
  $region23: #{conv_discriminator_forward.7} parent=0 // pred_check_branch
    %901 = sbr.rel (0) target = $region25
  $region24: #{conv_discriminator_forward.7} parent=0 // pred_region
    _
  $region25: #{conv_discriminator_forward.7} parent=0 // pred_fallthru
    _
  // Predicated region
  $region26: #{conv_discriminator_forward.7} parent=0 // pred_check
    _
  $region27: #{conv_discriminator_forward.7} parent=0 // pred_check_branch
    %903 = sbr.rel (0) target = $region29
  $region28: #{conv_discriminator_forward.7} parent=0 // pred_region
    _
  $region29: #{conv_discriminator_forward.7} parent=0 // pred_fallthru
    _

</llo_original>
